<compile_context>
chip_gen: v6e
topology: v6e:2x2x1
jax: 0.10.0
libtpu: 0.0.40
codegen_flags: <defaults>
</compile_context>

<pallas_src>
import functools

import jax
import jax.numpy as jnp
from jax.experimental import pallas as pl
from jax.experimental.pallas import tpu as pltpu


def _ceil_div(a, b):
    return -(-a // b)


# ----------------------------------------------------------------------------
# Fused kernel body
# ----------------------------------------------------------------------------
def _relu_pool(y, bias):
    """bias-add -> ReLU -> MaxPool(kernel=2, stride=2, ceil_mode=True) on rows.

    y: (Ly, C) f32, bias: (1, C) f32.  Returns (ceil(Ly/2), C) f32 as one
    dense value (single concatenate, no per-row ref stores).
    """
    y = jnp.maximum(y + bias, 0.0)
    Ly = y.shape[0]
    Lp = _ceil_div(Ly, 2)
    rows = []
    for j in range(Lp):
        lo = 2 * j
        if lo + 1 < Ly:
            rows.append(jnp.maximum(y[lo:lo + 1, :], y[lo + 1:lo + 2, :]))
        else:  # ceil_mode partial last window (only hit for odd Ly)
            rows.append(y[lo:lo + 1, :])
    if len(rows) == 1:
        return rows[0]
    return jnp.concatenate(rows, axis=0)


def _encoder_kernel(x_ref, w1_ref, b1_ref, w2_ref, b2_ref,
                    w3_ref, b3_ref, w4_ref, b4_ref, o_ref):
    # x_ref : (1, L, Cin)           f32   one batch element
    # w1_ref: (KW, Cin, 1024)       bf16  (the (1,5) conv, one tap per index)
    # w2_ref: (1024, 512)           bf16  w3_ref: (512, 256)  w4_ref: (256, Cpad)
    # b*_ref: (1, C_stage)          f32
    # o_ref : (1, Lf, Cpad)         f32
    KW = w1_ref.shape[0]
    L = x_ref.shape[1]
    Lc = L - KW + 1

    # Cast the whole input block to bf16 once; taps are shifted value slices.
    xb = x_ref[0].astype(jnp.bfloat16)                     # (L, Cin) bf16

    # ---- Stage 1: (1,5) conv as KW accumulated matmuls (in-register im2col).
    y = jnp.dot(xb[0:Lc, :], w1_ref[0],
                preferred_element_type=jnp.float32)
    for k in range(1, KW):
        y = y + jnp.dot(xb[k:k + Lc, :], w1_ref[k],
                        preferred_element_type=jnp.float32)
    h = _relu_pool(y, b1_ref[...])                         # (16, 1024) f32

    # ---- Stages 2-4: 1x1 convs as plain matmuls, all resident.
    for w_ref, b_ref in ((w2_ref, b2_ref), (w3_ref, b3_ref), (w4_ref, b4_ref)):
        y = jnp.dot(h.astype(jnp.bfloat16), w_ref[...],
                    preferred_element_type=jnp.float32)
        h = _relu_pool(y, b_ref[...])

    # Single lane-dense output store (Cpad is a multiple of 128).
    o_ref[0] = h.astype(o_ref.dtype)


# ----------------------------------------------------------------------------
# Parameter construction / preparation
# ----------------------------------------------------------------------------
def init_params(key, in_channel, out_channel):
    """Deterministic params matching nn.init.xavier_uniform_(gain=relu) and
    PyTorch's default Conv2d bias init.  PyTorch layout: w (Cout, Cin, 1, KW)."""
    gain = 2.0 ** 0.5
    specs = [
        (1024, in_channel, 5),
        (512, 1024, 1),
        (256, 512, 1),
        (out_channel, 256, 1),
    ]
    params = []
    for (cout, cin, kw) in specs:
        key, kw_key, kb_key = jax.random.split(key, 3)
        fan_in = cin * 1 * kw
        fan_out = cout * 1 * kw
        w_bound = gain * (6.0 / (fan_in + fan_out)) ** 0.5
        w = jax.random.uniform(kw_key, (cout, cin, 1, kw),
                               minval=-w_bound, maxval=w_bound,
                               dtype=jnp.float32)
        b_bound = 1.0 / (fan_in ** 0.5)
        b = jax.random.uniform(kb_key, (cout,),
                               minval=-b_bound, maxval=b_bound,
                               dtype=jnp.float32)
        params.append((w, b))
    return params


def prepare_params(params, lane=128):
    """One-time conversion (outside the forward): PyTorch conv layout ->
    bf16 matmul layout, last stage zero-padded to a lane-dense width."""
    (w1, b1), (w2, b2), (w3, b3), (w4, b4) = params

    def mat(w):  # (Cout, Cin, 1, 1) -> (Cin, Cout)
        return jnp.transpose(w[:, :, 0, 0], (1, 0)).astype(jnp.bfloat16)

    def row(b):
        return b.reshape(1, -1).astype(jnp.float32)

    # (Cout, Cin, 1, KW) -> (KW, Cin, Cout)
    w1m = jnp.transpose(w1[:, :, 0, :], (2, 1, 0)).astype(jnp.bfloat16)
    w2m, w3m, w4m = mat(w2), mat(w3), mat(w4)

    cout = int(w4.shape[0])
    cpad = _ceil_div(cout, lane) * lane
    w4m = jnp.pad(w4m, ((0, 0), (0, cpad - cout)))
    b4p = jnp.pad(b4.astype(jnp.float32), (0, cpad - cout))

    weights = (w1m, row(b1), w2m, row(b2), w3m, row(b3), w4m, row(b4p))
    return weights, cout


# ----------------------------------------------------------------------------
# Forward (Pallas) and pure-JAX reference
# ----------------------------------------------------------------------------
@functools.partial(jax.jit, static_argnames=("cout",))
def my_encoder_forward(features, weights, *, cout):
    """features: (N, Cin, L) f32 -> (N, Cout, 1, Lf) f32 (PyTorch layout)."""
    w1, b1, w2, b2, w3, b3, w4, b4 = weights
    x = jnp.transpose(features, (0, 2, 1)).astype(jnp.float32)   # (N, L, Cin)
    N, L, Cin = x.shape
    KW = w1.shape[0]
    Lf = L - KW + 1
    for _ in range(4):
        Lf = _ceil_div(Lf, 2)
    cpad = w4.shape[1]

    out = pl.pallas_call(
        _encoder_kernel,
        out_shape=jax.ShapeDtypeStruct((N, Lf, cpad), jnp.float32),
        grid=(N,),
        in_specs=[
            pl.BlockSpec((1, L, Cin), lambda n: (n, 0, 0)),
            pl.BlockSpec(w1.shape, lambda n: (0, 0, 0)),
            pl.BlockSpec(b1.shape, lambda n: (0, 0)),
            pl.BlockSpec(w2.shape, lambda n: (0, 0)),
            pl.BlockSpec(b2.shape, lambda n: (0, 0)),
            pl.BlockSpec(w3.shape, lambda n: (0, 0)),
            pl.BlockSpec(b3.shape, lambda n: (0, 0)),
            pl.BlockSpec(w4.shape, lambda n: (0, 0)),
            pl.BlockSpec(b4.shape, lambda n: (0, 0)),
        ],
        out_specs=pl.BlockSpec((1, Lf, cpad), lambda n: (n, 0, 0)),
        compiler_params=pltpu.CompilerParams(
            dimension_semantics=("parallel",)),
    )(x, w1, b1, w2, b2, w3, b3, w4, b4)

    out = out[:, :, :cout]                                  # drop lane padding
    return jnp.transpose(out, (0, 2, 1))[:, :, None, :]     # (N, Cout, 1, Lf)


def _ref_relu_pool(y, b):
    y = jnp.maximum(y + b, 0.0)                             # (N, Ly, C)
    Ly = y.shape[1]
    Lp = _ceil_div(Ly, 2)
    cols = []
    for j in range(Lp):
        lo = 2 * j
        if lo + 1 < Ly:
            cols.append(jnp.maximum(y[:, lo], y[:, lo + 1]))
        else:
            cols.append(y[:, lo])
    return jnp.stack(cols, axis=1)


def my_encoder_reference(features, params):
    """Pure-JAX reference using the same bf16-input / f32-accum matmul math."""
    (w1, b1), *rest = params
    x = jnp.transpose(features, (0, 2, 1)).astype(jnp.bfloat16)  # (N, L, Cin)
    KW = w1.shape[-1]
    Lc = x.shape[1] - KW + 1
    w1m = jnp.transpose(w1[:, :, 0, :], (2, 1, 0)).astype(jnp.bfloat16)
    y = sum(jnp.einsum("nlc,co->nlo", x[:, k:k + Lc, :], w1m[k],
                       preferred_element_type=jnp.float32)
            for k in range(KW))
    h = _ref_relu_pool(y, b1)
    for (w, b) in rest:
        wm = jnp.transpose(w[:, :, 0, 0], (1, 0)).astype(jnp.bfloat16)
        y = jnp.einsum("nlc,co->nlo", h.astype(jnp.bfloat16), wm,
                       preferred_element_type=jnp.float32)
        h = _ref_relu_pool(y, b)
    return jnp.transpose(h, (0, 2, 1))[:, :, None, :]


if __name__ == "__main__":
    key = jax.random.PRNGKey(0)
    in_channel, out_channel = 8, 64
    N, L = 2, 36                       # conv(1,5): 36->32; pools: 16, 8, 4, 2

    k_params, k_x = jax.random.split(key)
    params = init_params(k_params, in_channel, out_channel)
    features = jax.random.normal(k_x, (N, in_channel, L), dtype=jnp.float32)

    weights, cout = prepare_params(params)
    out = my_encoder_forward(features, weights, cout=cout)
    out = jax.block_until_ready(out)

    ref = my_encoder_reference(features, params)
    assert out.shape == (N, out_channel, 1, 2), out.shape
    assert jnp.allclose(out, ref, atol=1e-2, rtol=1e-2), (
        "mismatch vs JAX reference, max abs diff = %f"
        % float(jnp.max(jnp.abs(out - ref))))

    print("KERNEL_OK")
</pallas_src>

<mosaic_0001>
module attributes {stable_mosaic.version = 11 : i64} {
  func.func @_encoder_kernel(%arg0: i32, %arg1: memref<1x36x8xf32, #tpu.memory_space<vmem>>, %arg2: memref<5x8x1024xbf16, #tpu.memory_space<vmem>>, %arg3: memref<1x1024xf32, #tpu.memory_space<vmem>>, %arg4: memref<1024x512xbf16, #tpu.memory_space<vmem>>, %arg5: memref<1x512xf32, #tpu.memory_space<vmem>>, %arg6: memref<512x256xbf16, #tpu.memory_space<vmem>>, %arg7: memref<1x256xf32, #tpu.memory_space<vmem>>, %arg8: memref<256x128xbf16, #tpu.memory_space<vmem>>, %arg9: memref<1x128xf32, #tpu.memory_space<vmem>>, %arg10: memref<1x2x128xf32, #tpu.memory_space<vmem>>) attributes {dimension_semantics = [#tpu.dimension_semantics<parallel>], iteration_bounds = array<i64: 2>, scalar_prefetch = 0 : i64, scratch_operands = 0 : i64, tpu.core_type = #tpu.core_type<tc>, window_params = [{transform_indices = @transform_0, window_bounds = array<i64: 1, 36, 8>}, {pipeline_mode = #tpu.pipeline_mode<synchronous>, transform_indices = @transform_1, window_bounds = array<i64: 5, 8, 1024>}, {pipeline_mode = #tpu.pipeline_mode<synchronous>, transform_indices = @transform_2, window_bounds = array<i64: 1, 1024>}, {pipeline_mode = #tpu.pipeline_mode<synchronous>, transform_indices = @transform_3, window_bounds = array<i64: 1024, 512>}, {pipeline_mode = #tpu.pipeline_mode<synchronous>, transform_indices = @transform_4, window_bounds = array<i64: 1, 512>}, {pipeline_mode = #tpu.pipeline_mode<synchronous>, transform_indices = @transform_5, window_bounds = array<i64: 512, 256>}, {pipeline_mode = #tpu.pipeline_mode<synchronous>, transform_indices = @transform_6, window_bounds = array<i64: 1, 256>}, {pipeline_mode = #tpu.pipeline_mode<synchronous>, transform_indices = @transform_7, window_bounds = array<i64: 256, 128>}, {pipeline_mode = #tpu.pipeline_mode<synchronous>, transform_indices = @transform_8, window_bounds = array<i64: 1, 128>}, {transform_indices = @transform_9, window_bounds = array<i64: 1, 2, 128>}]} {
    %c0 = arith.constant 0 : index
    %c0_0 = arith.constant 0 : index
    %c0_1 = arith.constant 0 : index
    %0 = vector.load %arg1[%c0, %c0_0, %c0_1] : memref<1x36x8xf32, #tpu.memory_space<vmem>>, vector<1x36x8xf32>
    %1 = vector.shape_cast %0 : vector<1x36x8xf32> to vector<36x8xf32>
    %2 = arith.truncf %1 : vector<36x8xf32> to vector<36x8xbf16>
    %3 = vector.extract_strided_slice %2 {offsets = [0, 0], sizes = [32, 8], strides = [1, 1]} : vector<36x8xbf16> to vector<32x8xbf16>
    %c0_2 = arith.constant 0 : index
    %c0_3 = arith.constant 0 : index
    %c0_4 = arith.constant 0 : index
    %4 = vector.load %arg2[%c0_2, %c0_3, %c0_4] : memref<5x8x1024xbf16, #tpu.memory_space<vmem>>, vector<1x8x1024xbf16>
    %5 = vector.shape_cast %4 : vector<1x8x1024xbf16> to vector<8x1024xbf16>
    %cst = arith.constant dense<0.000000e+00> : vector<32x1024xf32>
    %6 = tpu.matmul %3, %5, %cst {dimension_numbers = #tpu.dot_dimension_numbers<[1], [0], [0], [1], [0, 0, 1, 1], [], []>} : vector<32x8xbf16>, vector<8x1024xbf16>, vector<32x1024xf32> -> vector<32x1024xf32>
    %7 = vector.extract_strided_slice %2 {offsets = [1, 0], sizes = [32, 8], strides = [1, 1]} : vector<36x8xbf16> to vector<32x8xbf16>
    %c1 = arith.constant 1 : index
    %c0_5 = arith.constant 0 : index
    %c0_6 = arith.constant 0 : index
    %8 = vector.load %arg2[%c1, %c0_5, %c0_6] : memref<5x8x1024xbf16, #tpu.memory_space<vmem>>, vector<1x8x1024xbf16>
    %9 = vector.shape_cast %8 : vector<1x8x1024xbf16> to vector<8x1024xbf16>
    %cst_7 = arith.constant dense<0.000000e+00> : vector<32x1024xf32>
    %10 = tpu.matmul %7, %9, %cst_7 {dimension_numbers = #tpu.dot_dimension_numbers<[1], [0], [0], [1], [0, 0, 1, 1], [], []>} : vector<32x8xbf16>, vector<8x1024xbf16>, vector<32x1024xf32> -> vector<32x1024xf32>
    %11 = arith.addf %6, %10 : vector<32x1024xf32>
    %12 = vector.extract_strided_slice %2 {offsets = [2, 0], sizes = [32, 8], strides = [1, 1]} : vector<36x8xbf16> to vector<32x8xbf16>
    %c2 = arith.constant 2 : index
    %c0_8 = arith.constant 0 : index
    %c0_9 = arith.constant 0 : index
    %13 = vector.load %arg2[%c2, %c0_8, %c0_9] : memref<5x8x1024xbf16, #tpu.memory_space<vmem>>, vector<1x8x1024xbf16>
    %14 = vector.shape_cast %13 : vector<1x8x1024xbf16> to vector<8x1024xbf16>
    %cst_10 = arith.constant dense<0.000000e+00> : vector<32x1024xf32>
    %15 = tpu.matmul %12, %14, %cst_10 {dimension_numbers = #tpu.dot_dimension_numbers<[1], [0], [0], [1], [0, 0, 1, 1], [], []>} : vector<32x8xbf16>, vector<8x1024xbf16>, vector<32x1024xf32> -> vector<32x1024xf32>
    %16 = arith.addf %11, %15 : vector<32x1024xf32>
    %17 = vector.extract_strided_slice %2 {offsets = [3, 0], sizes = [32, 8], strides = [1, 1]} : vector<36x8xbf16> to vector<32x8xbf16>
    %c3 = arith.constant 3 : index
    %c0_11 = arith.constant 0 : index
    %c0_12 = arith.constant 0 : index
    %18 = vector.load %arg2[%c3, %c0_11, %c0_12] : memref<5x8x1024xbf16, #tpu.memory_space<vmem>>, vector<1x8x1024xbf16>
    %19 = vector.shape_cast %18 : vector<1x8x1024xbf16> to vector<8x1024xbf16>
    %cst_13 = arith.constant dense<0.000000e+00> : vector<32x1024xf32>
    %20 = tpu.matmul %17, %19, %cst_13 {dimension_numbers = #tpu.dot_dimension_numbers<[1], [0], [0], [1], [0, 0, 1, 1], [], []>} : vector<32x8xbf16>, vector<8x1024xbf16>, vector<32x1024xf32> -> vector<32x1024xf32>
    %21 = arith.addf %16, %20 : vector<32x1024xf32>
    %22 = vector.extract_strided_slice %2 {offsets = [4, 0], sizes = [32, 8], strides = [1, 1]} : vector<36x8xbf16> to vector<32x8xbf16>
    %c4 = arith.constant 4 : index
    %c0_14 = arith.constant 0 : index
    %c0_15 = arith.constant 0 : index
    %23 = vector.load %arg2[%c4, %c0_14, %c0_15] : memref<5x8x1024xbf16, #tpu.memory_space<vmem>>, vector<1x8x1024xbf16>
    %24 = vector.shape_cast %23 : vector<1x8x1024xbf16> to vector<8x1024xbf16>
    %cst_16 = arith.constant dense<0.000000e+00> : vector<32x1024xf32>
    %25 = tpu.matmul %22, %24, %cst_16 {dimension_numbers = #tpu.dot_dimension_numbers<[1], [0], [0], [1], [0, 0, 1, 1], [], []>} : vector<32x8xbf16>, vector<8x1024xbf16>, vector<32x1024xf32> -> vector<32x1024xf32>
    %26 = arith.addf %21, %25 : vector<32x1024xf32>
    %c0_17 = arith.constant 0 : index
    %c0_18 = arith.constant 0 : index
    %27 = vector.load %arg3[%c0_17, %c0_18] : memref<1x1024xf32, #tpu.memory_space<vmem>>, vector<1x1024xf32>
    %28 = vector.broadcast %27 : vector<1x1024xf32> to vector<32x1024xf32>
    %29 = arith.addf %26, %28 : vector<32x1024xf32>
    %cst_19 = arith.constant 0.000000e+00 : f32
    %30 = vector.broadcast %cst_19 : f32 to vector<32x1024xf32>
    %31 = arith.maximumf %29, %30 : vector<32x1024xf32>
    %32 = vector.extract_strided_slice %31 {offsets = [0, 0], sizes = [1, 1024], strides = [1, 1]} : vector<32x1024xf32> to vector<1x1024xf32>
    %33 = vector.extract_strided_slice %31 {offsets = [1, 0], sizes = [1, 1024], strides = [1, 1]} : vector<32x1024xf32> to vector<1x1024xf32>
    %34 = arith.maximumf %32, %33 : vector<1x1024xf32>
    %35 = vector.extract_strided_slice %31 {offsets = [2, 0], sizes = [1, 1024], strides = [1, 1]} : vector<32x1024xf32> to vector<1x1024xf32>
    %36 = vector.extract_strided_slice %31 {offsets = [3, 0], sizes = [1, 1024], strides = [1, 1]} : vector<32x1024xf32> to vector<1x1024xf32>
    %37 = arith.maximumf %35, %36 : vector<1x1024xf32>
    %38 = vector.extract_strided_slice %31 {offsets = [4, 0], sizes = [1, 1024], strides = [1, 1]} : vector<32x1024xf32> to vector<1x1024xf32>
    %39 = vector.extract_strided_slice %31 {offsets = [5, 0], sizes = [1, 1024], strides = [1, 1]} : vector<32x1024xf32> to vector<1x1024xf32>
    %40 = arith.maximumf %38, %39 : vector<1x1024xf32>
    %41 = vector.extract_strided_slice %31 {offsets = [6, 0], sizes = [1, 1024], strides = [1, 1]} : vector<32x1024xf32> to vector<1x1024xf32>
    %42 = vector.extract_strided_slice %31 {offsets = [7, 0], sizes = [1, 1024], strides = [1, 1]} : vector<32x1024xf32> to vector<1x1024xf32>
    %43 = arith.maximumf %41, %42 : vector<1x1024xf32>
    %44 = vector.extract_strided_slice %31 {offsets = [8, 0], sizes = [1, 1024], strides = [1, 1]} : vector<32x1024xf32> to vector<1x1024xf32>
    %45 = vector.extract_strided_slice %31 {offsets = [9, 0], sizes = [1, 1024], strides = [1, 1]} : vector<32x1024xf32> to vector<1x1024xf32>
    %46 = arith.maximumf %44, %45 : vector<1x1024xf32>
    %47 = vector.extract_strided_slice %31 {offsets = [10, 0], sizes = [1, 1024], strides = [1, 1]} : vector<32x1024xf32> to vector<1x1024xf32>
    %48 = vector.extract_strided_slice %31 {offsets = [11, 0], sizes = [1, 1024], strides = [1, 1]} : vector<32x1024xf32> to vector<1x1024xf32>
    %49 = arith.maximumf %47, %48 : vector<1x1024xf32>
    %50 = vector.extract_strided_slice %31 {offsets = [12, 0], sizes = [1, 1024], strides = [1, 1]} : vector<32x1024xf32> to vector<1x1024xf32>
    %51 = vector.extract_strided_slice %31 {offsets = [13, 0], sizes = [1, 1024], strides = [1, 1]} : vector<32x1024xf32> to vector<1x1024xf32>
    %52 = arith.maximumf %50, %51 : vector<1x1024xf32>
    %53 = vector.extract_strided_slice %31 {offsets = [14, 0], sizes = [1, 1024], strides = [1, 1]} : vector<32x1024xf32> to vector<1x1024xf32>
    %54 = vector.extract_strided_slice %31 {offsets = [15, 0], sizes = [1, 1024], strides = [1, 1]} : vector<32x1024xf32> to vector<1x1024xf32>
    %55 = arith.maximumf %53, %54 : vector<1x1024xf32>
    %56 = vector.extract_strided_slice %31 {offsets = [16, 0], sizes = [1, 1024], strides = [1, 1]} : vector<32x1024xf32> to vector<1x1024xf32>
    %57 = vector.extract_strided_slice %31 {offsets = [17, 0], sizes = [1, 1024], strides = [1, 1]} : vector<32x1024xf32> to vector<1x1024xf32>
    %58 = arith.maximumf %56, %57 : vector<1x1024xf32>
    %59 = vector.extract_strided_slice %31 {offsets = [18, 0], sizes = [1, 1024], strides = [1, 1]} : vector<32x1024xf32> to vector<1x1024xf32>
    %60 = vector.extract_strided_slice %31 {offsets = [19, 0], sizes = [1, 1024], strides = [1, 1]} : vector<32x1024xf32> to vector<1x1024xf32>
    %61 = arith.maximumf %59, %60 : vector<1x1024xf32>
    %62 = vector.extract_strided_slice %31 {offsets = [20, 0], sizes = [1, 1024], strides = [1, 1]} : vector<32x1024xf32> to vector<1x1024xf32>
    %63 = vector.extract_strided_slice %31 {offsets = [21, 0], sizes = [1, 1024], strides = [1, 1]} : vector<32x1024xf32> to vector<1x1024xf32>
    %64 = arith.maximumf %62, %63 : vector<1x1024xf32>
    %65 = vector.extract_strided_slice %31 {offsets = [22, 0], sizes = [1, 1024], strides = [1, 1]} : vector<32x1024xf32> to vector<1x1024xf32>
    %66 = vector.extract_strided_slice %31 {offsets = [23, 0], sizes = [1, 1024], strides = [1, 1]} : vector<32x1024xf32> to vector<1x1024xf32>
    %67 = arith.maximumf %65, %66 : vector<1x1024xf32>
    %68 = vector.extract_strided_slice %31 {offsets = [24, 0], sizes = [1, 1024], strides = [1, 1]} : vector<32x1024xf32> to vector<1x1024xf32>
    %69 = vector.extract_strided_slice %31 {offsets = [25, 0], sizes = [1, 1024], strides = [1, 1]} : vector<32x1024xf32> to vector<1x1024xf32>
    %70 = arith.maximumf %68, %69 : vector<1x1024xf32>
    %71 = vector.extract_strided_slice %31 {offsets = [26, 0], sizes = [1, 1024], strides = [1, 1]} : vector<32x1024xf32> to vector<1x1024xf32>
    %72 = vector.extract_strided_slice %31 {offsets = [27, 0], sizes = [1, 1024], strides = [1, 1]} : vector<32x1024xf32> to vector<1x1024xf32>
    %73 = arith.maximumf %71, %72 : vector<1x1024xf32>
    %74 = vector.extract_strided_slice %31 {offsets = [28, 0], sizes = [1, 1024], strides = [1, 1]} : vector<32x1024xf32> to vector<1x1024xf32>
    %75 = vector.extract_strided_slice %31 {offsets = [29, 0], sizes = [1, 1024], strides = [1, 1]} : vector<32x1024xf32> to vector<1x1024xf32>
    %76 = arith.maximumf %74, %75 : vector<1x1024xf32>
    %77 = vector.extract_strided_slice %31 {offsets = [30, 0], sizes = [1, 1024], strides = [1, 1]} : vector<32x1024xf32> to vector<1x1024xf32>
    %78 = vector.extract_strided_slice %31 {offsets = [31, 0], sizes = [1, 1024], strides = [1, 1]} : vector<32x1024xf32> to vector<1x1024xf32>
    %79 = arith.maximumf %77, %78 : vector<1x1024xf32>
    %80 = tpu.concatenate %34, %37, %40, %43, %46, %49, %52, %55, %58, %61, %64, %67, %70, %73, %76, %79 in 0 : vector<1x1024xf32>, vector<1x1024xf32>, vector<1x1024xf32>, vector<1x1024xf32>, vector<1x1024xf32>, vector<1x1024xf32>, vector<1x1024xf32>, vector<1x1024xf32>, vector<1x1024xf32>, vector<1x1024xf32>, vector<1x1024xf32>, vector<1x1024xf32>, vector<1x1024xf32>, vector<1x1024xf32>, vector<1x1024xf32>, vector<1x1024xf32> -> vector<16x1024xf32>
    %81 = arith.truncf %80 : vector<16x1024xf32> to vector<16x1024xbf16>
    %c0_20 = arith.constant 0 : index
    %c0_21 = arith.constant 0 : index
    %82 = vector.load %arg4[%c0_20, %c0_21] : memref<1024x512xbf16, #tpu.memory_space<vmem>>, vector<1024x512xbf16>
    %cst_22 = arith.constant dense<0.000000e+00> : vector<16x512xf32>
    %83 = tpu.matmul %81, %82, %cst_22 {dimension_numbers = #tpu.dot_dimension_numbers<[1], [0], [0], [1], [0, 0, 1, 1], [], []>} : vector<16x1024xbf16>, vector<1024x512xbf16>, vector<16x512xf32> -> vector<16x512xf32>
    %c0_23 = arith.constant 0 : index
    %c0_24 = arith.constant 0 : index
    %84 = vector.load %arg5[%c0_23, %c0_24] : memref<1x512xf32, #tpu.memory_space<vmem>>, vector<1x512xf32>
    %85 = vector.broadcast %84 : vector<1x512xf32> to vector<16x512xf32>
    %86 = arith.addf %83, %85 : vector<16x512xf32>
    %cst_25 = arith.constant 0.000000e+00 : f32
    %87 = vector.broadcast %cst_25 : f32 to vector<16x512xf32>
    %88 = arith.maximumf %86, %87 : vector<16x512xf32>
    %89 = vector.extract_strided_slice %88 {offsets = [0, 0], sizes = [1, 512], strides = [1, 1]} : vector<16x512xf32> to vector<1x512xf32>
    %90 = vector.extract_strided_slice %88 {offsets = [1, 0], sizes = [1, 512], strides = [1, 1]} : vector<16x512xf32> to vector<1x512xf32>
    %91 = arith.maximumf %89, %90 : vector<1x512xf32>
    %92 = vector.extract_strided_slice %88 {offsets = [2, 0], sizes = [1, 512], strides = [1, 1]} : vector<16x512xf32> to vector<1x512xf32>
    %93 = vector.extract_strided_slice %88 {offsets = [3, 0], sizes = [1, 512], strides = [1, 1]} : vector<16x512xf32> to vector<1x512xf32>
    %94 = arith.maximumf %92, %93 : vector<1x512xf32>
    %95 = vector.extract_strided_slice %88 {offsets = [4, 0], sizes = [1, 512], strides = [1, 1]} : vector<16x512xf32> to vector<1x512xf32>
    %96 = vector.extract_strided_slice %88 {offsets = [5, 0], sizes = [1, 512], strides = [1, 1]} : vector<16x512xf32> to vector<1x512xf32>
    %97 = arith.maximumf %95, %96 : vector<1x512xf32>
    %98 = vector.extract_strided_slice %88 {offsets = [6, 0], sizes = [1, 512], strides = [1, 1]} : vector<16x512xf32> to vector<1x512xf32>
    %99 = vector.extract_strided_slice %88 {offsets = [7, 0], sizes = [1, 512], strides = [1, 1]} : vector<16x512xf32> to vector<1x512xf32>
    %100 = arith.maximumf %98, %99 : vector<1x512xf32>
    %101 = vector.extract_strided_slice %88 {offsets = [8, 0], sizes = [1, 512], strides = [1, 1]} : vector<16x512xf32> to vector<1x512xf32>
    %102 = vector.extract_strided_slice %88 {offsets = [9, 0], sizes = [1, 512], strides = [1, 1]} : vector<16x512xf32> to vector<1x512xf32>
    %103 = arith.maximumf %101, %102 : vector<1x512xf32>
    %104 = vector.extract_strided_slice %88 {offsets = [10, 0], sizes = [1, 512], strides = [1, 1]} : vector<16x512xf32> to vector<1x512xf32>
    %105 = vector.extract_strided_slice %88 {offsets = [11, 0], sizes = [1, 512], strides = [1, 1]} : vector<16x512xf32> to vector<1x512xf32>
    %106 = arith.maximumf %104, %105 : vector<1x512xf32>
    %107 = vector.extract_strided_slice %88 {offsets = [12, 0], sizes = [1, 512], strides = [1, 1]} : vector<16x512xf32> to vector<1x512xf32>
    %108 = vector.extract_strided_slice %88 {offsets = [13, 0], sizes = [1, 512], strides = [1, 1]} : vector<16x512xf32> to vector<1x512xf32>
    %109 = arith.maximumf %107, %108 : vector<1x512xf32>
    %110 = vector.extract_strided_slice %88 {offsets = [14, 0], sizes = [1, 512], strides = [1, 1]} : vector<16x512xf32> to vector<1x512xf32>
    %111 = vector.extract_strided_slice %88 {offsets = [15, 0], sizes = [1, 512], strides = [1, 1]} : vector<16x512xf32> to vector<1x512xf32>
    %112 = arith.maximumf %110, %111 : vector<1x512xf32>
    %113 = tpu.concatenate %91, %94, %97, %100, %103, %106, %109, %112 in 0 : vector<1x512xf32>, vector<1x512xf32>, vector<1x512xf32>, vector<1x512xf32>, vector<1x512xf32>, vector<1x512xf32>, vector<1x512xf32>, vector<1x512xf32> -> vector<8x512xf32>
    %114 = arith.truncf %113 : vector<8x512xf32> to vector<8x512xbf16>
    %c0_26 = arith.constant 0 : index
    %c0_27 = arith.constant 0 : index
    %115 = vector.load %arg6[%c0_26, %c0_27] : memref<512x256xbf16, #tpu.memory_space<vmem>>, vector<512x256xbf16>
    %cst_28 = arith.constant dense<0.000000e+00> : vector<8x256xf32>
    %116 = tpu.matmul %114, %115, %cst_28 {dimension_numbers = #tpu.dot_dimension_numbers<[1], [0], [0], [1], [0, 0, 1, 1], [], []>} : vector<8x512xbf16>, vector<512x256xbf16>, vector<8x256xf32> -> vector<8x256xf32>
    %c0_29 = arith.constant 0 : index
    %c0_30 = arith.constant 0 : index
    %117 = vector.load %arg7[%c0_29, %c0_30] : memref<1x256xf32, #tpu.memory_space<vmem>>, vector<1x256xf32>
    %118 = vector.broadcast %117 : vector<1x256xf32> to vector<8x256xf32>
    %119 = arith.addf %116, %118 : vector<8x256xf32>
    %cst_31 = arith.constant 0.000000e+00 : f32
    %120 = vector.broadcast %cst_31 : f32 to vector<8x256xf32>
    %121 = arith.maximumf %119, %120 : vector<8x256xf32>
    %122 = vector.extract_strided_slice %121 {offsets = [0, 0], sizes = [1, 256], strides = [1, 1]} : vector<8x256xf32> to vector<1x256xf32>
    %123 = vector.extract_strided_slice %121 {offsets = [1, 0], sizes = [1, 256], strides = [1, 1]} : vector<8x256xf32> to vector<1x256xf32>
    %124 = arith.maximumf %122, %123 : vector<1x256xf32>
    %125 = vector.extract_strided_slice %121 {offsets = [2, 0], sizes = [1, 256], strides = [1, 1]} : vector<8x256xf32> to vector<1x256xf32>
    %126 = vector.extract_strided_slice %121 {offsets = [3, 0], sizes = [1, 256], strides = [1, 1]} : vector<8x256xf32> to vector<1x256xf32>
    %127 = arith.maximumf %125, %126 : vector<1x256xf32>
    %128 = vector.extract_strided_slice %121 {offsets = [4, 0], sizes = [1, 256], strides = [1, 1]} : vector<8x256xf32> to vector<1x256xf32>
    %129 = vector.extract_strided_slice %121 {offsets = [5, 0], sizes = [1, 256], strides = [1, 1]} : vector<8x256xf32> to vector<1x256xf32>
    %130 = arith.maximumf %128, %129 : vector<1x256xf32>
    %131 = vector.extract_strided_slice %121 {offsets = [6, 0], sizes = [1, 256], strides = [1, 1]} : vector<8x256xf32> to vector<1x256xf32>
    %132 = vector.extract_strided_slice %121 {offsets = [7, 0], sizes = [1, 256], strides = [1, 1]} : vector<8x256xf32> to vector<1x256xf32>
    %133 = arith.maximumf %131, %132 : vector<1x256xf32>
    %134 = tpu.concatenate %124, %127, %130, %133 in 0 : vector<1x256xf32>, vector<1x256xf32>, vector<1x256xf32>, vector<1x256xf32> -> vector<4x256xf32>
    %135 = arith.truncf %134 : vector<4x256xf32> to vector<4x256xbf16>
    %c0_32 = arith.constant 0 : index
    %c0_33 = arith.constant 0 : index
    %136 = vector.load %arg8[%c0_32, %c0_33] : memref<256x128xbf16, #tpu.memory_space<vmem>>, vector<256x128xbf16>
    %cst_34 = arith.constant dense<0.000000e+00> : vector<4x128xf32>
    %137 = tpu.matmul %135, %136, %cst_34 {dimension_numbers = #tpu.dot_dimension_numbers<[1], [0], [0], [1], [0, 0, 1, 1], [], []>} : vector<4x256xbf16>, vector<256x128xbf16>, vector<4x128xf32> -> vector<4x128xf32>
    %c0_35 = arith.constant 0 : index
    %c0_36 = arith.constant 0 : index
    %138 = vector.load %arg9[%c0_35, %c0_36] : memref<1x128xf32, #tpu.memory_space<vmem>>, vector<1x128xf32>
    %139 = vector.broadcast %138 : vector<1x128xf32> to vector<4x128xf32>
    %140 = arith.addf %137, %139 : vector<4x128xf32>
    %cst_37 = arith.constant 0.000000e+00 : f32
    %141 = vector.broadcast %cst_37 : f32 to vector<4x128xf32>
    %142 = arith.maximumf %140, %141 : vector<4x128xf32>
    %143 = vector.extract_strided_slice %142 {offsets = [0, 0], sizes = [1, 128], strides = [1, 1]} : vector<4x128xf32> to vector<1x128xf32>
    %144 = vector.extract_strided_slice %142 {offsets = [1, 0], sizes = [1, 128], strides = [1, 1]} : vector<4x128xf32> to vector<1x128xf32>
    %145 = arith.maximumf %143, %144 : vector<1x128xf32>
    %146 = vector.extract_strided_slice %142 {offsets = [2, 0], sizes = [1, 128], strides = [1, 1]} : vector<4x128xf32> to vector<1x128xf32>
    %147 = vector.extract_strided_slice %142 {offsets = [3, 0], sizes = [1, 128], strides = [1, 1]} : vector<4x128xf32> to vector<1x128xf32>
    %148 = arith.maximumf %146, %147 : vector<1x128xf32>
    %149 = tpu.concatenate %145, %148 in 0 : vector<1x128xf32>, vector<1x128xf32> -> vector<2x128xf32>
    %c0_38 = arith.constant 0 : index
    %c0_39 = arith.constant 0 : index
    %c0_40 = arith.constant 0 : index
    %150 = vector.load %arg10[%c0_38, %c0_39, %c0_40] : memref<1x2x128xf32, #tpu.memory_space<vmem>>, vector<1x2x128xf32>
    %151 = vector.shape_cast %150 : vector<1x2x128xf32> to vector<2x128xf32>
    %152 = vector.shape_cast %149 : vector<2x128xf32> to vector<1x2x128xf32>
    tpu.vector_store %arg10[%c0_38, %c0_39, %c0_40], %152 {strides = array<i32>} : memref<1x2x128xf32, #tpu.memory_space<vmem>>, vector<1x2x128xf32>,
    return
  }
  func.func @transform_0(%arg0: i32) -> (i32, i32, i32) {
    %c0_i32 = arith.constant 0 : i32
    %c0_i32_0 = arith.constant 0 : i32
    %c0_i32_1 = arith.constant 0 : i32
    return %arg0, %c0_i32, %c0_i32_0 : i32, i32, i32
  }
  func.func @transform_1(%arg0: i32) -> (i32, i32, i32) {
    %c0_i32 = arith.constant 0 : i32
    %c0_i32_0 = arith.constant 0 : i32
    %c0_i32_1 = arith.constant 0 : i32
    %c0_i32_2 = arith.constant 0 : i32
    return %c0_i32, %c0_i32_0, %c0_i32_1 : i32, i32, i32
  }
  func.func @transform_2(%arg0: i32) -> (i32, i32) {
    %c0_i32 = arith.constant 0 : i32
    %c0_i32_0 = arith.constant 0 : i32
    %c0_i32_1 = arith.constant 0 : i32
    return %c0_i32, %c0_i32_0 : i32, i32
  }
  func.func @transform_3(%arg0: i32) -> (i32, i32) {
    %c0_i32 = arith.constant 0 : i32
    %c0_i32_0 = arith.constant 0 : i32
    %c0_i32_1 = arith.constant 0 : i32
    return %c0_i32, %c0_i32_0 : i32, i32
  }
  func.func @transform_4(%arg0: i32) -> (i32, i32) {
    %c0_i32 = arith.constant 0 : i32
    %c0_i32_0 = arith.constant 0 : i32
    %c0_i32_1 = arith.constant 0 : i32
    return %c0_i32, %c0_i32_0 : i32, i32
  }
  func.func @transform_5(%arg0: i32) -> (i32, i32) {
    %c0_i32 = arith.constant 0 : i32
    %c0_i32_0 = arith.constant 0 : i32
    %c0_i32_1 = arith.constant 0 : i32
    return %c0_i32, %c0_i32_0 : i32, i32
  }
  func.func @transform_6(%arg0: i32) -> (i32, i32) {
    %c0_i32 = arith.constant 0 : i32
    %c0_i32_0 = arith.constant 0 : i32
    %c0_i32_1 = arith.constant 0 : i32
    return %c0_i32, %c0_i32_0 : i32, i32
  }
  func.func @transform_7(%arg0: i32) -> (i32, i32) {
    %c0_i32 = arith.constant 0 : i32
    %c0_i32_0 = arith.constant 0 : i32
    %c0_i32_1 = arith.constant 0 : i32
    return %c0_i32, %c0_i32_0 : i32, i32
  }
  func.func @transform_8(%arg0: i32) -> (i32, i32) {
    %c0_i32 = arith.constant 0 : i32
    %c0_i32_0 = arith.constant 0 : i32
    %c0_i32_1 = arith.constant 0 : i32
    return %c0_i32, %c0_i32_0 : i32, i32
  }
  func.func @transform_9(%arg0: i32) -> (i32, i32, i32) {
    %c0_i32 = arith.constant 0 : i32
    %c0_i32_0 = arith.constant 0 : i32
    %c0_i32_1 = arith.constant 0 : i32
    return %arg0, %c0_i32, %c0_i32_0 : i32, i32, i32
  }
}

</mosaic_0001>

<llo_original>
// kernel: my_encoder_forward.1
$region0: #{my_encoder_forward.1}
  #allocation0 [shape = 'u32[]', space=smem, size = 0x4, offset = 0x4, fixed_abs, tag = 'smem constant byte address 0x4 - core index']
  #allocation1 [shape = 'u32[144,128]{1,0:T(1,128)}', space=vmem, size = 0x12000, scoped, tag = 'internal scratch']
  %s0 = inlined_call_operand.vmem [shape: f32[2,36,8], index: 0, kind: input, shape index: {}]
  %s1 = inlined_call_operand.hbm [shape: bf16[5,8,1024], index: 1, kind: input, shape index: {}]
  %s2 = inlined_call_operand.vmem [shape: f32[1,1024], index: 2, kind: input, shape index: {}]
  %s3 = inlined_call_operand.hbm [shape: bf16[1024,512], index: 3, kind: input, shape index: {}]
  %s4 = inlined_call_operand.vmem [shape: f32[1,512], index: 4, kind: input, shape index: {}]
  %s5 = inlined_call_operand.hbm [shape: bf16[512,256], index: 5, kind: input, shape index: {}]
  %s6 = inlined_call_operand.vmem [shape: f32[1,256], index: 6, kind: input, shape index: {}]
  %s7 = inlined_call_operand.hbm [shape: bf16[256,128], index: 7, kind: input, shape index: {}]
  %s8 = inlined_call_operand.vmem [shape: f32[1,128], index: 8, kind: input, shape index: {}]
  %s9 = inlined_call_operand.vmem [shape: f32[2,2,128], index: 9, kind: output, shape index: {}]
  %s10 = sld [smem:[#allocation0]]
  $region85: #{my_encoder_forward.1} parent=0
    _
  %s12 = ssub.s32 1, %s10
  %s13 = scalar_select 0, %s12, %s10
  $region1: #{my_encoder_forward.1} parent=0
    #allocation2 [shape = 'u8[81920]{0}', space=vmem, size = 0x14000, scoped, tag = 'input window, operand 1, single buffered']
    #allocation3 [shape = 's32[2]{0}', space=sflag, size = 0x8, scoped, tag = 'scoped memory for my_encoder_forward.1']
    #allocation4 [shape = 'u8[1048576]{0}', space=vmem, size = 0x100000, scoped, tag = 'input window, operand 3, single buffered']
    #allocation5 [shape = 's32[1]{0}', space=sflag, size = 0x4, scoped, tag = 'scoped memory for my_encoder_forward.1']
    #allocation6 [shape = 'u8[262144]{0}', space=vmem, size = 0x40000, scoped, tag = 'input window, operand 5, single buffered']
    #allocation7 [shape = 'u8[65536]{0}', space=vmem, size = 0x10000, scoped, tag = 'input window, operand 7, single buffered']
    #allocation8 [shape = 's32[1]{0}', space=sflag, size = 0x4, scoped, tag = 'scoped memory for my_encoder_forward.1']
    %14 = vsyncpa [#allocation3], 0
    %15 = vsyncpa [#allocation5], 0
    %16 = vsyncpa [#allocation8], 0
    loop: start=0, step=1, limit=4
    $region2: #{my_encoder_forward.1} parent=1 // loop_pre_header
      _
    $region3: #{my_encoder_forward.1} parent=1 // loop_header
      %s18 = sphi 0, %s22
      %p19 = scmp.ge.s32.totalorder %s18, 4
      %s28 = sphi 0, %s30
      %s31 = sphi 0, %s28
      %s32 = sphi 0, %s31
      %s48 = sphi 0, %s32
      %s52 = sphi 0, %s52
      %s54 = sphi 0, %s52
      %s55 = sphi 0, %s54
      %s69 = sphi 0, %s55
      %s73 = sphi 0, %s73
      %s75 = sphi 0, %s73
      %s76 = sphi 0, %s75
      %s90 = sphi 0, %s76
      %s94 = sphi 0, %s94
      %s96 = sphi 0, %s94
      %s97 = sphi 0, %s96
      %s111 = sphi 0, %s97
      %s115 = sphi 0, %s115
      %s117 = sphi 0, %s115
      %s118 = sphi 0, %s117
      %s132 = sphi 0, %s118
      %s136 = sphi 0, %s136
      %s138 = sphi 0, %s136
      %s139 = sphi 0, %s138
      %s153 = sphi 0, %s139
      %s157 = sphi 0, %s157
      %s159 = sphi 0, %s157
      %s160 = sphi 0, %s159
      %s174 = sphi 0, %s160
      %s178 = sphi 0, %s178
      %s180 = sphi 0, %s178
      %s181 = sphi 0, %s180
      %s195 = sphi 0, %s181
      %s199 = sphi 0, %s199
      %s201 = sphi 0, %s199
      %s202 = sphi 0, %s201
      %s216 = sphi 0, %s202
      %s222 = sphi 0, %s224
      %s225 = sphi 0, %s222
      %s226 = sphi 0, %s225
      %s242 = sphi 0, %s226
    $region4: #{my_encoder_forward.1} parent=1 // loop_header_branch
      %21 = sbr.rel (%p19) target = $region8
    $region5: #{my_encoder_forward.1} parent=1 // loop_body
      %s23 = ssub.s32 %s18, 1
      %s24 = ssub.s32 %s18, 2
      %s25 = sadd.s32 %s18, 1
      %s26 = ssub.s32 %s18, %s25
      %p27 = scmp.eq.s32.totalorder %s26, 0
      %s29 = sadd.s32 %s28, 1
      %s30 = scalar_select %p27, %s28, %s29
      %p33 = pneg %p27
      %p34 = scmp.eq.s32.totalorder %s18, 1
      %p35 = por %p33, %p34
      %p36 = scmp.ne.s32.totalorder %s28, %s31
      %p37 = scmp.eq.s32.totalorder %s18, 0
      %p38 = por %p36, %p37
      %p39 = scmp.ne.s32.totalorder %s28, %s31
      %p40 = scmp.eq.s32.totalorder %s23, 1
      %p41 = por %p39, %p40
      %p42 = scmp.ne.s32.totalorder %s31, %s32
      %p43 = scmp.eq.s32.totalorder %s23, 0
      %p44 = por %p42, %p43
      %p45 = scmp.ne.s32.totalorder %s31, %s32
      %p46 = scmp.eq.s32.totalorder %s24, 1
      %p47 = por %p45, %p46
      %p49 = scmp.ne.s32.totalorder %s32, %s48
      %p50 = scmp.eq.s32.totalorder %s24, 0
      %p51 = por %p49, %p50
      %s53 = sadd.s32 %s52, 1
      %p56 = scmp.eq.s32.totalorder %s18, 1
      %p57 = scmp.ne.s32.totalorder %s52, %s54
      %p58 = scmp.eq.s32.totalorder %s18, 0
      %p59 = por %p57, %p58
      %p60 = scmp.ne.s32.totalorder %s52, %s54
      %p61 = scmp.eq.s32.totalorder %s23, 1
      %p62 = por %p60, %p61
      %p63 = scmp.ne.s32.totalorder %s54, %s55
      %p64 = scmp.eq.s32.totalorder %s23, 0
      %p65 = por %p63, %p64
      %p66 = scmp.ne.s32.totalorder %s54, %s55
      %p67 = scmp.eq.s32.totalorder %s24, 1
      %p68 = por %p66, %p67
      %p70 = scmp.ne.s32.totalorder %s55, %s69
      %p71 = scmp.eq.s32.totalorder %s24, 0
      %p72 = por %p70, %p71
      %s74 = sadd.s32 %s73, 1
      %p77 = scmp.eq.s32.totalorder %s18, 1
      %p78 = scmp.ne.s32.totalorder %s73, %s75
      %p79 = scmp.eq.s32.totalorder %s18, 0
      %p80 = por %p78, %p79
      %p81 = scmp.ne.s32.totalorder %s73, %s75
      %p82 = scmp.eq.s32.totalorder %s23, 1
      %p83 = por %p81, %p82
      %p84 = scmp.ne.s32.totalorder %s75, %s76
      %p85 = scmp.eq.s32.totalorder %s23, 0
      %p86 = por %p84, %p85
      %p87 = scmp.ne.s32.totalorder %s75, %s76
      %p88 = scmp.eq.s32.totalorder %s24, 1
      %p89 = por %p87, %p88
      %p91 = scmp.ne.s32.totalorder %s76, %s90
      %p92 = scmp.eq.s32.totalorder %s24, 0
      %p93 = por %p91, %p92
      %s95 = sadd.s32 %s94, 1
      %p98 = scmp.eq.s32.totalorder %s18, 1
      %p99 = scmp.ne.s32.totalorder %s94, %s96
      %p100 = scmp.eq.s32.totalorder %s18, 0
      %p101 = por %p99, %p100
      %p102 = scmp.ne.s32.totalorder %s94, %s96
      %p103 = scmp.eq.s32.totalorder %s23, 1
      %p104 = por %p102, %p103
      %p105 = scmp.ne.s32.totalorder %s96, %s97
      %p106 = scmp.eq.s32.totalorder %s23, 0
      %p107 = por %p105, %p106
      %p108 = scmp.ne.s32.totalorder %s96, %s97
      %p109 = scmp.eq.s32.totalorder %s24, 1
      %p110 = por %p108, %p109
      %p112 = scmp.ne.s32.totalorder %s97, %s111
      %p113 = scmp.eq.s32.totalorder %s24, 0
      %p114 = por %p112, %p113
      %s116 = sadd.s32 %s115, 1
      %p119 = scmp.eq.s32.totalorder %s18, 1
      %p120 = scmp.ne.s32.totalorder %s115, %s117
      %p121 = scmp.eq.s32.totalorder %s18, 0
      %p122 = por %p120, %p121
      %p123 = scmp.ne.s32.totalorder %s115, %s117
      %p124 = scmp.eq.s32.totalorder %s23, 1
      %p125 = por %p123, %p124
      %p126 = scmp.ne.s32.totalorder %s117, %s118
      %p127 = scmp.eq.s32.totalorder %s23, 0
      %p128 = por %p126, %p127
      %p129 = scmp.ne.s32.totalorder %s117, %s118
      %p130 = scmp.eq.s32.totalorder %s24, 1
      %p131 = por %p129, %p130
      %p133 = scmp.ne.s32.totalorder %s118, %s132
      %p134 = scmp.eq.s32.totalorder %s24, 0
      %p135 = por %p133, %p134
      %s137 = sadd.s32 %s136, 1
      %p140 = scmp.eq.s32.totalorder %s18, 1
      %p141 = scmp.ne.s32.totalorder %s136, %s138
      %p142 = scmp.eq.s32.totalorder %s18, 0
      %p143 = por %p141, %p142
      %p144 = scmp.ne.s32.totalorder %s136, %s138
      %p145 = scmp.eq.s32.totalorder %s23, 1
      %p146 = por %p144, %p145
      %p147 = scmp.ne.s32.totalorder %s138, %s139
      %p148 = scmp.eq.s32.totalorder %s23, 0
      %p149 = por %p147, %p148
      %p150 = scmp.ne.s32.totalorder %s138, %s139
      %p151 = scmp.eq.s32.totalorder %s24, 1
      %p152 = por %p150, %p151
      %p154 = scmp.ne.s32.totalorder %s139, %s153
      %p155 = scmp.eq.s32.totalorder %s24, 0
      %p156 = por %p154, %p155
      %s158 = sadd.s32 %s157, 1
      %p161 = scmp.eq.s32.totalorder %s18, 1
      %p162 = scmp.ne.s32.totalorder %s157, %s159
      %p163 = scmp.eq.s32.totalorder %s18, 0
      %p164 = por %p162, %p163
      %p165 = scmp.ne.s32.totalorder %s157, %s159
      %p166 = scmp.eq.s32.totalorder %s23, 1
      %p167 = por %p165, %p166
      %p168 = scmp.ne.s32.totalorder %s159, %s160
      %p169 = scmp.eq.s32.totalorder %s23, 0
      %p170 = por %p168, %p169
      %p171 = scmp.ne.s32.totalorder %s159, %s160
      %p172 = scmp.eq.s32.totalorder %s24, 1
      %p173 = por %p171, %p172
      %p175 = scmp.ne.s32.totalorder %s160, %s174
      %p176 = scmp.eq.s32.totalorder %s24, 0
      %p177 = por %p175, %p176
      %s179 = sadd.s32 %s178, 1
      %p182 = scmp.eq.s32.totalorder %s18, 1
      %p183 = scmp.ne.s32.totalorder %s178, %s180
      %p184 = scmp.eq.s32.totalorder %s18, 0
      %p185 = por %p183, %p184
      %p186 = scmp.ne.s32.totalorder %s178, %s180
      %p187 = scmp.eq.s32.totalorder %s23, 1
      %p188 = por %p186, %p187
      %p189 = scmp.ne.s32.totalorder %s180, %s181
      %p190 = scmp.eq.s32.totalorder %s23, 0
      %p191 = por %p189, %p190
      %p192 = scmp.ne.s32.totalorder %s180, %s181
      %p193 = scmp.eq.s32.totalorder %s24, 1
      %p194 = por %p192, %p193
      %p196 = scmp.ne.s32.totalorder %s181, %s195
      %p197 = scmp.eq.s32.totalorder %s24, 0
      %p198 = por %p196, %p197
      %s200 = sadd.s32 %s199, 1
      %p203 = scmp.eq.s32.totalorder %s18, 1
      %p204 = scmp.ne.s32.totalorder %s199, %s201
      %p205 = scmp.eq.s32.totalorder %s18, 0
      %p206 = por %p204, %p205
      %p207 = scmp.ne.s32.totalorder %s199, %s201
      %p208 = scmp.eq.s32.totalorder %s23, 1
      %p209 = por %p207, %p208
      %p210 = scmp.ne.s32.totalorder %s201, %s202
      %p211 = scmp.eq.s32.totalorder %s23, 0
      %p212 = por %p210, %p211
      %p213 = scmp.ne.s32.totalorder %s201, %s202
      %p214 = scmp.eq.s32.totalorder %s24, 1
      %p215 = por %p213, %p214
      %p217 = scmp.ne.s32.totalorder %s202, %s216
      %p218 = scmp.eq.s32.totalorder %s24, 0
      %p219 = por %p217, %p218
      %s220 = ssub.s32 %s18, %s25
      %p221 = scmp.eq.s32.totalorder %s220, 0
      %s223 = sadd.s32 %s222, 1
      %s224 = scalar_select %p221, %s222, %s223
      %p227 = pneg %p221
      %p228 = scmp.eq.s32.totalorder %s18, 1
      %p229 = por %p227, %p228
      %p230 = scmp.ne.s32.totalorder %s222, %s225
      %p231 = scmp.eq.s32.totalorder %s18, 0
      %p232 = por %p230, %p231
      %p233 = scmp.ne.s32.totalorder %s222, %s225
      %p234 = scmp.eq.s32.totalorder %s23, 1
      %p235 = por %p233, %p234
      %p236 = scmp.ne.s32.totalorder %s225, %s226
      %p237 = scmp.eq.s32.totalorder %s23, 0
      %p238 = por %p236, %p237
      %p239 = scmp.ne.s32.totalorder %s225, %s226
      %p240 = scmp.eq.s32.totalorder %s24, 1
      %p241 = por %p239, %p240
      %p243 = scmp.ne.s32.totalorder %s226, %s242
      %p244 = scmp.eq.s32.totalorder %s24, 0
      %p245 = por %p243, %p244
      %p246 = scmp.le.s32.totalorder 1, %s18
      %p247 = scmp.lt.s32.totalorder %s18, 3
      %p248 = pnand %p246, %p247
      %p249 = pneg %p248
      // Predicated region
      $region9: #{my_encoder_forward.1} parent=5 // pred_check
        _
      $region10: #{my_encoder_forward.1} parent=5 // pred_check_branch
        %251 = sbr.rel (%p248) target = $region12
      $region11: #{my_encoder_forward.1} parent=5 // pred_region
        %s252 = ssub.s32 %s18, 1
        // Predicated region
        $region13: #{my_encoder_forward.1} parent=11 // pred_check
          %p253 = pneg %p65
        $region14: #{my_encoder_forward.1} parent=11 // pred_check_branch
          %255 = sbr.rel (%p253) target = $region16
        $region15: #{my_encoder_forward.1} parent=11 // pred_region
          %s257 = ssub.s32 2560, 2560
          %258 = vsyncadd [#allocation3], %s257
          %s259 = sshll.u32 [#allocation2], 4
          %s260 = int_to_ptr.vmem [resolvable:$true] %s259
          %265 = dma.hbm_to_vmem [thread:$0]  %s1, 2560, %s260, [#allocation3], 512, 512, 32
        $region16: #{my_encoder_forward.1} parent=11 // pred_fallthru
          _
        // Predicated region
        $region17: #{my_encoder_forward.1} parent=11 // pred_check
          %p266 = pneg %p86
        $region18: #{my_encoder_forward.1} parent=11 // pred_check_branch
          %268 = sbr.rel (%p266) target = $region20
        $region19: #{my_encoder_forward.1} parent=11 // pred_region
          _
        $region20: #{my_encoder_forward.1} parent=11 // pred_fallthru
          _
        // Predicated region
        $region21: #{my_encoder_forward.1} parent=11 // pred_check
          %p269 = pneg %p107
        $region22: #{my_encoder_forward.1} parent=11 // pred_check_branch
          %271 = sbr.rel (%p269) target = $region24
        $region23: #{my_encoder_forward.1} parent=11 // pred_region
          %s273 = ssub.s32 32768, 32768
          %274 = vsyncadd [#allocation5], %s273
          %s275 = sshll.u32 [#allocation4], 4
          %s276 = int_to_ptr.vmem [resolvable:$true] %s275
          %281 = dma.hbm_to_vmem [thread:$0]  %s3, 32768, %s276, [#allocation5], 256, 256, 16
        $region24: #{my_encoder_forward.1} parent=11 // pred_fallthru
          _
        // Predicated region
        $region25: #{my_encoder_forward.1} parent=11 // pred_check
          %p282 = pneg %p128
        $region26: #{my_encoder_forward.1} parent=11 // pred_check_branch
          %284 = sbr.rel (%p282) target = $region28
        $region27: #{my_encoder_forward.1} parent=11 // pred_region
          _
        $region28: #{my_encoder_forward.1} parent=11 // pred_fallthru
          _
        // Predicated region
        $region29: #{my_encoder_forward.1} parent=11 // pred_check
          %p285 = pneg %p149
        $region30: #{my_encoder_forward.1} parent=11 // pred_check_branch
          %287 = sbr.rel (%p285) target = $region32
        $region31: #{my_encoder_forward.1} parent=11 // pred_region
          %s289 = ssub.s32 8192, 8192
          %290 = vsyncadd [#allocation5], %s289
          %s291 = sshll.u32 [#allocation6], 4
          %s292 = int_to_ptr.vmem [resolvable:$true] %s291
          %297 = dma.hbm_to_vmem [thread:$0]  %s5, 8192, %s292, [#allocation5], 128, 128, 8
        $region32: #{my_encoder_forward.1} parent=11 // pred_fallthru
          _
        // Predicated region
        $region33: #{my_encoder_forward.1} parent=11 // pred_check
          %p298 = pneg %p170
        $region34: #{my_encoder_forward.1} parent=11 // pred_check_branch
          %300 = sbr.rel (%p298) target = $region36
        $region35: #{my_encoder_forward.1} parent=11 // pred_region
          _
        $region36: #{my_encoder_forward.1} parent=11 // pred_fallthru
          _
        // Predicated region
        $region37: #{my_encoder_forward.1} parent=11 // pred_check
          %p301 = pneg %p191
        $region38: #{my_encoder_forward.1} parent=11 // pred_check_branch
          %303 = sbr.rel (%p301) target = $region40
        $region39: #{my_encoder_forward.1} parent=11 // pred_region
          %s305 = ssub.s32 2048, 2048
          %306 = vsyncadd [#allocation8], %s305
          %s307 = sshll.u32 [#allocation7], 4
          %s308 = int_to_ptr.vmem [resolvable:$true] %s307
          %313 = dma.hbm_to_vmem [thread:$0]  %s7, 2048, %s308, [#allocation8], 64, 64, 4
        $region40: #{my_encoder_forward.1} parent=11 // pred_fallthru
          _
        // Predicated region
        $region41: #{my_encoder_forward.1} parent=11 // pred_check
          %p314 = pneg %p212
        $region42: #{my_encoder_forward.1} parent=11 // pred_check_branch
          %316 = sbr.rel (%p314) target = $region44
        $region43: #{my_encoder_forward.1} parent=11 // pred_region
          _
        $region44: #{my_encoder_forward.1} parent=11 // pred_fallthru
          _
      $region12: #{my_encoder_forward.1} parent=5 // pred_fallthru
        _
      %p317 = scmp.lt.s32.totalorder %s18, 2
      // Predicated region
      $region45: #{my_encoder_forward.1} parent=5 // pred_check
        %p318 = pneg %p317
      $region46: #{my_encoder_forward.1} parent=5 // pred_check_branch
        %320 = sbr.rel (%p318) target = $region48
      $region47: #{my_encoder_forward.1} parent=5 // pred_region
        // Predicated region
        $region49: #{my_encoder_forward.1} parent=47 // pred_check
          %p321 = pneg %p38
        $region50: #{my_encoder_forward.1} parent=47 // pred_check_branch
          %323 = sbr.rel (%p321) target = $region52
        $region51: #{my_encoder_forward.1} parent=47 // pred_region
          %p324 = scmp.lt.s32.totalorder %s18, 1
          %s325 = scalar_select %p324, %s18, 1
          %s326 = smul.addr %s325, 5
          %s327 = smul.addr %s326, 8
          %s328 = scalar_lea.vmem %s0, %s327
        $region52: #{my_encoder_forward.1} parent=47 // pred_fallthru
          _
      $region48: #{my_encoder_forward.1} parent=5 // pred_fallthru
        _
      %p329 = scmp.le.s32.totalorder 1, %s18
      %p330 = scmp.lt.s32.totalorder %s18, 3
      %p331 = pnand %p329, %p330
      %p332 = pneg %p331
      // Predicated region
      $region53: #{my_encoder_forward.1} parent=5 // pred_check
        _
      $region54: #{my_encoder_forward.1} parent=5 // pred_check_branch
        %334 = sbr.rel (%p331) target = $region56
      $region55: #{my_encoder_forward.1} parent=5 // pred_region
        %s335 = ssub.s32 %s18, 1
        // Predicated region
        $region57: #{my_encoder_forward.1} parent=55 // pred_check
          %p336 = pneg %p65
        $region58: #{my_encoder_forward.1} parent=55 // pred_check_branch
          %338 = sbr.rel (%p336) target = $region60
        $region59: #{my_encoder_forward.1} parent=55 // pred_region
          %339 = dma.done [#allocation3], 2560
        $region60: #{my_encoder_forward.1} parent=55 // pred_fallthru
          _
        // Predicated region
        $region61: #{my_encoder_forward.1} parent=55 // pred_check
          %p340 = pneg %p107
        $region62: #{my_encoder_forward.1} parent=55 // pred_check_branch
          %342 = sbr.rel (%p340) target = $region64
        $region63: #{my_encoder_forward.1} parent=55 // pred_region
          %343 = dma.done [#allocation5], 32768
        $region64: #{my_encoder_forward.1} parent=55 // pred_fallthru
          _
        // Predicated region
        $region65: #{my_encoder_forward.1} parent=55 // pred_check
          %p344 = pneg %p149
        $region66: #{my_encoder_forward.1} parent=55 // pred_check_branch
          %346 = sbr.rel (%p344) target = $region68
        $region67: #{my_encoder_forward.1} parent=55 // pred_region
          %347 = dma.done [#allocation5], 8192
        $region68: #{my_encoder_forward.1} parent=55 // pred_fallthru
          _
        // Predicated region
        $region69: #{my_encoder_forward.1} parent=55 // pred_check
          %p348 = pneg %p191
        $region70: #{my_encoder_forward.1} parent=55 // pred_check_branch
          %350 = sbr.rel (%p348) target = $region72
        $region71: #{my_encoder_forward.1} parent=55 // pred_region
          %351 = dma.done [#allocation8], 2048
        $region72: #{my_encoder_forward.1} parent=55 // pred_fallthru
          _
        %p352 = scmp.lt.s32.totalorder %s23, 1
        %s353 = scalar_select %p352, %s23, 1
        %s354 = smul.addr %s353, 5
        %s355 = smul.addr %s354, 8
        %s356 = scalar_lea.vmem %s0, %s355
        %p357 = pneg %p44
        %p358 = pneg %p41
        %p359 = pneg %p65
        %p360 = pneg %p62
        %p361 = pneg %p86
        %p362 = pneg %p83
        %p363 = pneg %p107
        %p364 = pneg %p104
        %p365 = pneg %p128
        %p366 = pneg %p125
        %p367 = pneg %p149
        %p368 = pneg %p146
        %p369 = pneg %p170
        %p370 = pneg %p167
        %p371 = pneg %p191
        %p372 = pneg %p188
        %p373 = pneg %p212
        %p374 = pneg %p209
        %p375 = pneg %p238
        %p376 = pneg %p235
        %p377 = scmp.lt.s32.totalorder %s23, 1
        %s378 = scalar_select %p377, %s23, 1
        %s379 = smul.addr %s378, 2
        %s380 = scalar_lea.vmem %s9, %s379
        %p381 = scmp.lt.s32.totalorder %s23, 1
        %s382 = scalar_select %p381, %s23, 1
        %s383 = smul.addr %s382, 5
        %s384 = smul.addr %s383, 8
        %s385 = scalar_lea.vmem %s0, %s384
        %p386 = scmp.lt.s32.totalorder %s23, 1
        %s387 = scalar_select %p386, %s23, 1
        %s388 = smul.addr %s387, 2
        %s389 = scalar_lea.vmem %s9, %s388
        %v391 = vld [vmem:[%s385] sm:$0xff]
        %v392 = vld [vmem:[%s385 + $0x8] sm:$0xff]
        %v393 = vld [vmem:[%s385 + $0x10] sm:$0xff]
        %v394 = vld [vmem:[%s385 + $0x18] sm:$0xff]
        %v395 = vld [vmem:[%s385 + $0x20] sm:$0xf]
        %v396 = vpack.c.bf16 %v392, %v391
        %v397 = vpack.c.bf16 %v394, %v393
        %v398 = vpack.c.bf16 %v395, %v395
        %v399 = vld [vmem:[#allocation2] sm:$0xff]
        %v400 = vld [vmem:[#allocation2 + $0x8] sm:$0xff]
        %v401 = vld [vmem:[#allocation2 + $0x10] sm:$0xff]
        %v402 = vld [vmem:[#allocation2 + $0x18] sm:$0xff]
        %s403 = scalar_lea.vmem [#allocation2], 32
        %v404 = vld [vmem:[%s403] sm:$0xff]
        %v405 = vld [vmem:[%s403 + $0x8] sm:$0xff]
        %v406 = vld [vmem:[%s403 + $0x10] sm:$0xff]
        %v407 = vld [vmem:[%s403 + $0x18] sm:$0xff]
        %vm408 = vsmask.f32 7424
        %v410 = vshrl.u32 %v396, 16
        %v412 = vshll.u32 %v396, 16
        %v414 = vrot.slane %v412, 1
        %v415 = vor.u32 %v410, %v414
        %v417 = vshll.u32 %v397, 16
        %v419 = vrot.slane %v417, 1
        %v420 = vsel %vm408, %v415, %v419
        %v421 = vshrl.u32 %v397, 16
        %v423 = vor.u32 %v421, %v419
        %v425 = vshll.u32 %v398, 16
        %v427 = vrot.slane %v425, 1
        %v428 = vsel %vm408, %v423, %v427
        %v433 = vunpack.c.l.b16 %v404
        %v434 = vunpack.c.h.b16 %v404
        %v435 = vunpack.c.l.b16 %v405
        %v436 = vunpack.c.h.b16 %v405
        %v437 = vunpack.c.l.b16 %v406
        %v438 = vunpack.c.h.b16 %v406
        %v439 = vunpack.c.l.b16 %v407
        %v440 = vunpack.c.h.b16 %v407
        %v441 = vpack.c.b16 %v433, %v433
        %v442 = vpack.c.b16 %v434, %v434
        %v443 = vpack.c.b16 %v435, %v435
        %v444 = vpack.c.b16 %v436, %v436
        %v445 = vpack.c.b16 %v437, %v437
        %v446 = vpack.c.b16 %v438, %v438
        %v447 = vpack.c.b16 %v439, %v439
        %v448 = vpack.c.b16 %v440, %v440
        %vm449 = vcmask 64512
        %v451 = vsel %vm449, %v420, 0
        %v454 = vsel %vm449, %v428, 0
        %vm456 = vcmask 1043456
        %v458 = vsel %vm456, %v441, 0
        %v461 = vsel %vm456, %v442, 0
        %v464 = vsel %vm456, %v443, 0
        %v467 = vsel %vm456, %v444, 0
        %v470 = vsel %vm456, %v445, 0
        %v473 = vsel %vm456, %v446, 0
        %v476 = vsel %vm456, %v447, 0
        %v479 = vsel %vm456, %v448, 0
        %481 = vmatprep.subr.bf16.mxu0 0
        %482 = vmatpush1.bf16.msra.mxu0 0
        %483 = vmatprep.subr.bf16.mxu0 0
        %484 = vmatpush1.bf16.msra.mxu0 0
        %485 = vmatprep.subr.bf16.mxu0 0
        %486 = vmatpush1.bf16.msra.mxu0 0
        %487 = vmatprep.subr.bf16.mxu0 0
        %488 = vmatpush1.bf16.msra.mxu0 0
        %489 = vmatprep.subr.bf16.mxu0 0
        %490 = vmatpush1.bf16.msra.mxu0 0
        %491 = vmatprep.subr.bf16.mxu0 0
        %492 = vmatpush1.bf16.msra.mxu0 0
        %493 = vmatprep.subr.bf16.mxu0 0
        %494 = vmatpush1.bf16.msra.mxu0 0
        %495 = vmatprep.subr.bf16.mxu0 %v461
        %496 = vmatpush1.bf16.msra.mxu0 %v458
        %497 = vmatprep.subr.bf16.mxu0 0
        %498 = vmatpush2.bf16.msra.mxu0 0
        %499 = vmatprep.subr.bf16.mxu0 0
        %500 = vmatpush2.bf16.msra.mxu0 0
        %501 = vmatprep.subr.bf16.mxu0 0
        %502 = vmatpush2.bf16.msra.mxu0 0
        %503 = vmatprep.subr.bf16.mxu0 0
        %504 = vmatpush2.bf16.msra.mxu0 0
        %505 = vmatprep.subr.bf16.mxu0 0
        %506 = vmatpush2.bf16.msra.mxu0 0
        %507 = vmatprep.subr.bf16.mxu0 0
        %508 = vmatpush2.bf16.msra.mxu0 0
        %509 = vmatprep.subr.bf16.mxu0 0
        %510 = vmatpush2.bf16.msra.mxu0 0
        %511 = vmatprep.subr.bf16.mxu0 0
        %512 = vmatpush2.bf16.msra.mxu0 0
        %513 = vmatprep.mubr.bf16.mxu0 0
        %514 = vmatmul.mubr.bf16.gmra.mxu0 %v451
        %v515 = vpop.f32.mrf.mxu0
        %v516 = vadd.f32 0.0, %v515
        %v517 = vpop.f32.mrf.mxu0
        %v518 = vadd.f32 0.0, %v517
        %v519 = vpop.f32.mrf.mxu0
        %v520 = vadd.f32 0.0, %v519
        %v521 = vpop.f32.mrf.mxu0
        %v522 = vadd.f32 0.0, %v521
        %523 = vmatprep.mubr.bf16.mxu0 0
        %524 = vmatmul.mubr.bf16.gmra.mxu0 %v454
        %v525 = vpop.f32.mrf.mxu0
        %v526 = vadd.f32 0.0, %v525
        %v527 = vpop.f32.mrf.mxu0
        %v528 = vadd.f32 0.0, %v527
        %v529 = vpop.f32.mrf.mxu0
        %v530 = vadd.f32 0.0, %v529
        %v531 = vpop.f32.mrf.mxu0
        %v532 = vadd.f32 0.0, %v531
        %533 = vdwg.mxu0
        %534 = vmatprep.subr.bf16.mxu0 0
        %535 = vmatpush1.bf16.msra.mxu0 0
        %536 = vmatprep.subr.bf16.mxu0 0
        %537 = vmatpush1.bf16.msra.mxu0 0
        %538 = vmatprep.subr.bf16.mxu0 0
        %539 = vmatpush1.bf16.msra.mxu0 0
        %540 = vmatprep.subr.bf16.mxu0 0
        %541 = vmatpush1.bf16.msra.mxu0 0
        %542 = vmatprep.subr.bf16.mxu0 0
        %543 = vmatpush1.bf16.msra.mxu0 0
        %544 = vmatprep.subr.bf16.mxu0 0
        %545 = vmatpush1.bf16.msra.mxu0 0
        %546 = vmatprep.subr.bf16.mxu0 0
        %547 = vmatpush1.bf16.msra.mxu0 0
        %548 = vmatprep.subr.bf16.mxu0 %v467
        %549 = vmatpush1.bf16.msra.mxu0 %v464
        %550 = vmatprep.subr.bf16.mxu0 0
        %551 = vmatpush2.bf16.msra.mxu0 0
        %552 = vmatprep.subr.bf16.mxu0 0
        %553 = vmatpush2.bf16.msra.mxu0 0
        %554 = vmatprep.subr.bf16.mxu0 0
        %555 = vmatpush2.bf16.msra.mxu0 0
        %556 = vmatprep.subr.bf16.mxu0 0
        %557 = vmatpush2.bf16.msra.mxu0 0
        %558 = vmatprep.subr.bf16.mxu0 0
        %559 = vmatpush2.bf16.msra.mxu0 0
        %560 = vmatprep.subr.bf16.mxu0 0
        %561 = vmatpush2.bf16.msra.mxu0 0
        %562 = vmatprep.subr.bf16.mxu0 0
        %563 = vmatpush2.bf16.msra.mxu0 0
        %564 = vmatprep.subr.bf16.mxu0 0
        %565 = vmatpush2.bf16.msra.mxu0 0
        %566 = vmatprep.mubr.bf16.mxu0 0
        %567 = vmatmul.mubr.bf16.gmra.mxu0 %v451
        %v568 = vpop.f32.mrf.mxu0
        %v569 = vadd.f32 0.0, %v568
        %v570 = vpop.f32.mrf.mxu0
        %v571 = vadd.f32 0.0, %v570
        %v572 = vpop.f32.mrf.mxu0
        %v573 = vadd.f32 0.0, %v572
        %v574 = vpop.f32.mrf.mxu0
        %v575 = vadd.f32 0.0, %v574
        %576 = vmatprep.mubr.bf16.mxu0 0
        %577 = vmatmul.mubr.bf16.gmra.mxu0 %v454
        %v578 = vpop.f32.mrf.mxu0
        %v579 = vadd.f32 0.0, %v578
        %v580 = vpop.f32.mrf.mxu0
        %v581 = vadd.f32 0.0, %v580
        %v582 = vpop.f32.mrf.mxu0
        %v583 = vadd.f32 0.0, %v582
        %v584 = vpop.f32.mrf.mxu0
        %v585 = vadd.f32 0.0, %v584
        %586 = vdwg.mxu0
        %587 = vmatprep.subr.bf16.mxu0 0
        %588 = vmatpush1.bf16.msra.mxu0 0
        %589 = vmatprep.subr.bf16.mxu0 0
        %590 = vmatpush1.bf16.msra.mxu0 0
        %591 = vmatprep.subr.bf16.mxu0 0
        %592 = vmatpush1.bf16.msra.mxu0 0
        %593 = vmatprep.subr.bf16.mxu0 0
        %594 = vmatpush1.bf16.msra.mxu0 0
        %595 = vmatprep.subr.bf16.mxu0 0
        %596 = vmatpush1.bf16.msra.mxu0 0
        %597 = vmatprep.subr.bf16.mxu0 0
        %598 = vmatpush1.bf16.msra.mxu0 0
        %599 = vmatprep.subr.bf16.mxu0 0
        %600 = vmatpush1.bf16.msra.mxu0 0
        %601 = vmatprep.subr.bf16.mxu0 %v473
        %602 = vmatpush1.bf16.msra.mxu0 %v470
        %603 = vmatprep.subr.bf16.mxu0 0
        %604 = vmatpush2.bf16.msra.mxu0 0
        %605 = vmatprep.subr.bf16.mxu0 0
        %606 = vmatpush2.bf16.msra.mxu0 0
        %607 = vmatprep.subr.bf16.mxu0 0
        %608 = vmatpush2.bf16.msra.mxu0 0
        %609 = vmatprep.subr.bf16.mxu0 0
        %610 = vmatpush2.bf16.msra.mxu0 0
        %611 = vmatprep.subr.bf16.mxu0 0
        %612 = vmatpush2.bf16.msra.mxu0 0
        %613 = vmatprep.subr.bf16.mxu0 0
        %614 = vmatpush2.bf16.msra.mxu0 0
        %615 = vmatprep.subr.bf16.mxu0 0
        %616 = vmatpush2.bf16.msra.mxu0 0
        %617 = vmatprep.subr.bf16.mxu0 0
        %618 = vmatpush2.bf16.msra.mxu0 0
        %619 = vmatprep.mubr.bf16.mxu0 0
        %620 = vmatmul.mubr.bf16.gmra.mxu0 %v451
        %v621 = vpop.f32.mrf.mxu0
        %v622 = vadd.f32 0.0, %v621
        %v623 = vpop.f32.mrf.mxu0
        %v624 = vadd.f32 0.0, %v623
        %v625 = vpop.f32.mrf.mxu0
        %v626 = vadd.f32 0.0, %v625
        %v627 = vpop.f32.mrf.mxu0
        %v628 = vadd.f32 0.0, %v627
        %629 = vmatprep.mubr.bf16.mxu0 0
        %630 = vmatmul.mubr.bf16.gmra.mxu0 %v454
        %v631 = vpop.f32.mrf.mxu0
        %v632 = vadd.f32 0.0, %v631
        %v633 = vpop.f32.mrf.mxu0
        %v634 = vadd.f32 0.0, %v633
        %v635 = vpop.f32.mrf.mxu0
        %v636 = vadd.f32 0.0, %v635
        %v637 = vpop.f32.mrf.mxu0
        %v638 = vadd.f32 0.0, %v637
        %639 = vdwg.mxu0
        %640 = vmatprep.subr.bf16.mxu0 0
        %641 = vmatpush1.bf16.msra.mxu0 0
        %642 = vmatprep.subr.bf16.mxu0 0
        %643 = vmatpush1.bf16.msra.mxu0 0
        %644 = vmatprep.subr.bf16.mxu0 0
        %645 = vmatpush1.bf16.msra.mxu0 0
        %646 = vmatprep.subr.bf16.mxu0 0
        %647 = vmatpush1.bf16.msra.mxu0 0
        %648 = vmatprep.subr.bf16.mxu0 0
        %649 = vmatpush1.bf16.msra.mxu0 0
        %650 = vmatprep.subr.bf16.mxu0 0
        %651 = vmatpush1.bf16.msra.mxu0 0
        %652 = vmatprep.subr.bf16.mxu0 0
        %653 = vmatpush1.bf16.msra.mxu0 0
        %654 = vmatprep.subr.bf16.mxu0 %v479
        %655 = vmatpush1.bf16.msra.mxu0 %v476
        %656 = vmatprep.subr.bf16.mxu0 0
        %657 = vmatpush2.bf16.msra.mxu0 0
        %658 = vmatprep.subr.bf16.mxu0 0
        %659 = vmatpush2.bf16.msra.mxu0 0
        %660 = vmatprep.subr.bf16.mxu0 0
        %661 = vmatpush2.bf16.msra.mxu0 0
        %662 = vmatprep.subr.bf16.mxu0 0
        %663 = vmatpush2.bf16.msra.mxu0 0
        %664 = vmatprep.subr.bf16.mxu0 0
        %665 = vmatpush2.bf16.msra.mxu0 0
        %666 = vmatprep.subr.bf16.mxu0 0
        %667 = vmatpush2.bf16.msra.mxu0 0
        %668 = vmatprep.subr.bf16.mxu0 0
        %669 = vmatpush2.bf16.msra.mxu0 0
        %670 = vmatprep.subr.bf16.mxu0 0
        %671 = vmatpush2.bf16.msra.mxu0 0
        %672 = vmatprep.mubr.bf16.mxu0 0
        %673 = vmatmul.mubr.bf16.gmra.mxu0 %v451
        %v674 = vpop.f32.mrf.mxu0
        %v675 = vadd.f32 0.0, %v674
        %v676 = vpop.f32.mrf.mxu0
        %v677 = vadd.f32 0.0, %v676
        %v678 = vpop.f32.mrf.mxu0
        %v679 = vadd.f32 0.0, %v678
        %v680 = vpop.f32.mrf.mxu0
        %v681 = vadd.f32 0.0, %v680
        %682 = vmatprep.mubr.bf16.mxu0 0
        %683 = vmatmul.mubr.bf16.gmra.mxu0 %v454
        %v684 = vpop.f32.mrf.mxu0
        %v685 = vadd.f32 0.0, %v684
        %v686 = vpop.f32.mrf.mxu0
        %v687 = vadd.f32 0.0, %v686
        %v688 = vpop.f32.mrf.mxu0
        %v689 = vadd.f32 0.0, %v688
        %v690 = vpop.f32.mrf.mxu0
        %v691 = vadd.f32 0.0, %v690
        %692 = vdwg.mxu0
        %v697 = vunpack.c.l.b16 %v399
        %v698 = vunpack.c.h.b16 %v399
        %v699 = vunpack.c.l.b16 %v400
        %v700 = vunpack.c.h.b16 %v400
        %v701 = vunpack.c.l.b16 %v401
        %v702 = vunpack.c.h.b16 %v401
        %v703 = vunpack.c.l.b16 %v402
        %v704 = vunpack.c.h.b16 %v402
        %v705 = vpack.c.b16 %v697, %v697
        %v706 = vpack.c.b16 %v698, %v698
        %v707 = vpack.c.b16 %v699, %v699
        %v708 = vpack.c.b16 %v700, %v700
        %v709 = vpack.c.b16 %v701, %v701
        %v710 = vpack.c.b16 %v702, %v702
        %v711 = vpack.c.b16 %v703, %v703
        %v712 = vpack.c.b16 %v704, %v704
        %v713 = vsel %vm449, %v396, 0
        %v715 = vsel %vm449, %v397, 0
        %v718 = vsel %vm456, %v705, 0
        %v721 = vsel %vm456, %v706, 0
        %v724 = vsel %vm456, %v707, 0
        %v727 = vsel %vm456, %v708, 0
        %v730 = vsel %vm456, %v709, 0
        %v733 = vsel %vm456, %v710, 0
        %v736 = vsel %vm456, %v711, 0
        %v739 = vsel %vm456, %v712, 0
        %741 = vmatprep.subr.bf16.mxu0 0
        %742 = vmatpush1.bf16.msra.mxu0 0
        %743 = vmatprep.subr.bf16.mxu0 0
        %744 = vmatpush1.bf16.msra.mxu0 0
        %745 = vmatprep.subr.bf16.mxu0 0
        %746 = vmatpush1.bf16.msra.mxu0 0
        %747 = vmatprep.subr.bf16.mxu0 0
        %748 = vmatpush1.bf16.msra.mxu0 0
        %749 = vmatprep.subr.bf16.mxu0 0
        %750 = vmatpush1.bf16.msra.mxu0 0
        %751 = vmatprep.subr.bf16.mxu0 0
        %752 = vmatpush1.bf16.msra.mxu0 0
        %753 = vmatprep.subr.bf16.mxu0 0
        %754 = vmatpush1.bf16.msra.mxu0 0
        %755 = vmatprep.subr.bf16.mxu0 %v721
        %756 = vmatpush1.bf16.msra.mxu0 %v718
        %757 = vmatprep.subr.bf16.mxu0 0
        %758 = vmatpush2.bf16.msra.mxu0 0
        %759 = vmatprep.subr.bf16.mxu0 0
        %760 = vmatpush2.bf16.msra.mxu0 0
        %761 = vmatprep.subr.bf16.mxu0 0
        %762 = vmatpush2.bf16.msra.mxu0 0
        %763 = vmatprep.subr.bf16.mxu0 0
        %764 = vmatpush2.bf16.msra.mxu0 0
        %765 = vmatprep.subr.bf16.mxu0 0
        %766 = vmatpush2.bf16.msra.mxu0 0
        %767 = vmatprep.subr.bf16.mxu0 0
        %768 = vmatpush2.bf16.msra.mxu0 0
        %769 = vmatprep.subr.bf16.mxu0 0
        %770 = vmatpush2.bf16.msra.mxu0 0
        %771 = vmatprep.subr.bf16.mxu0 0
        %772 = vmatpush2.bf16.msra.mxu0 0
        %773 = vmatprep.mubr.bf16.mxu0 0
        %774 = vmatmul.mubr.bf16.gmra.mxu0 %v713
        %v775 = vpop.f32.mrf.mxu0
        %v776 = vadd.f32 %v516, %v775
        %v777 = vpop.f32.mrf.mxu0
        %v778 = vadd.f32 %v518, %v777
        %v779 = vpop.f32.mrf.mxu0
        %v780 = vadd.f32 %v520, %v779
        %v781 = vpop.f32.mrf.mxu0
        %v782 = vadd.f32 %v522, %v781
        %783 = vmatprep.mubr.bf16.mxu0 0
        %784 = vmatmul.mubr.bf16.gmra.mxu0 %v715
        %v785 = vpop.f32.mrf.mxu0
        %v786 = vadd.f32 %v526, %v785
        %v787 = vpop.f32.mrf.mxu0
        %v788 = vadd.f32 %v528, %v787
        %v789 = vpop.f32.mrf.mxu0
        %v790 = vadd.f32 %v530, %v789
        %v791 = vpop.f32.mrf.mxu0
        %v792 = vadd.f32 %v532, %v791
        %793 = vdwg.mxu0
        %794 = vmatprep.subr.bf16.mxu0 0
        %795 = vmatpush1.bf16.msra.mxu0 0
        %796 = vmatprep.subr.bf16.mxu0 0
        %797 = vmatpush1.bf16.msra.mxu0 0
        %798 = vmatprep.subr.bf16.mxu0 0
        %799 = vmatpush1.bf16.msra.mxu0 0
        %800 = vmatprep.subr.bf16.mxu0 0
        %801 = vmatpush1.bf16.msra.mxu0 0
        %802 = vmatprep.subr.bf16.mxu0 0
        %803 = vmatpush1.bf16.msra.mxu0 0
        %804 = vmatprep.subr.bf16.mxu0 0
        %805 = vmatpush1.bf16.msra.mxu0 0
        %806 = vmatprep.subr.bf16.mxu0 0
        %807 = vmatpush1.bf16.msra.mxu0 0
        %808 = vmatprep.subr.bf16.mxu0 %v727
        %809 = vmatpush1.bf16.msra.mxu0 %v724
        %810 = vmatprep.subr.bf16.mxu0 0
        %811 = vmatpush2.bf16.msra.mxu0 0
        %812 = vmatprep.subr.bf16.mxu0 0
        %813 = vmatpush2.bf16.msra.mxu0 0
        %814 = vmatprep.subr.bf16.mxu0 0
        %815 = vmatpush2.bf16.msra.mxu0 0
        %816 = vmatprep.subr.bf16.mxu0 0
        %817 = vmatpush2.bf16.msra.mxu0 0
        %818 = vmatprep.subr.bf16.mxu0 0
        %819 = vmatpush2.bf16.msra.mxu0 0
        %820 = vmatprep.subr.bf16.mxu0 0
        %821 = vmatpush2.bf16.msra.mxu0 0
        %822 = vmatprep.subr.bf16.mxu0 0
        %823 = vmatpush2.bf16.msra.mxu0 0
        %824 = vmatprep.subr.bf16.mxu0 0
        %825 = vmatpush2.bf16.msra.mxu0 0
        %826 = vmatprep.mubr.bf16.mxu0 0
        %827 = vmatmul.mubr.bf16.gmra.mxu0 %v713
        %v828 = vpop.f32.mrf.mxu0
        %v829 = vadd.f32 %v569, %v828
        %v830 = vpop.f32.mrf.mxu0
        %v831 = vadd.f32 %v571, %v830
        %v832 = vpop.f32.mrf.mxu0
        %v833 = vadd.f32 %v573, %v832
        %v834 = vpop.f32.mrf.mxu0
        %v835 = vadd.f32 %v575, %v834
        %836 = vmatprep.mubr.bf16.mxu0 0
        %837 = vmatmul.mubr.bf16.gmra.mxu0 %v715
        %v838 = vpop.f32.mrf.mxu0
        %v839 = vadd.f32 %v579, %v838
        %v840 = vpop.f32.mrf.mxu0
        %v841 = vadd.f32 %v581, %v840
        %v842 = vpop.f32.mrf.mxu0
        %v843 = vadd.f32 %v583, %v842
        %v844 = vpop.f32.mrf.mxu0
        %v845 = vadd.f32 %v585, %v844
        %846 = vdwg.mxu0
        %847 = vmatprep.subr.bf16.mxu0 0
        %848 = vmatpush1.bf16.msra.mxu0 0
        %849 = vmatprep.subr.bf16.mxu0 0
        %850 = vmatpush1.bf16.msra.mxu0 0
        %851 = vmatprep.subr.bf16.mxu0 0
        %852 = vmatpush1.bf16.msra.mxu0 0
        %853 = vmatprep.subr.bf16.mxu0 0
        %854 = vmatpush1.bf16.msra.mxu0 0
        %855 = vmatprep.subr.bf16.mxu0 0
        %856 = vmatpush1.bf16.msra.mxu0 0
        %857 = vmatprep.subr.bf16.mxu0 0
        %858 = vmatpush1.bf16.msra.mxu0 0
        %859 = vmatprep.subr.bf16.mxu0 0
        %860 = vmatpush1.bf16.msra.mxu0 0
        %861 = vmatprep.subr.bf16.mxu0 %v733
        %862 = vmatpush1.bf16.msra.mxu0 %v730
        %863 = vmatprep.subr.bf16.mxu0 0
        %864 = vmatpush2.bf16.msra.mxu0 0
        %865 = vmatprep.subr.bf16.mxu0 0
        %866 = vmatpush2.bf16.msra.mxu0 0
        %867 = vmatprep.subr.bf16.mxu0 0
        %868 = vmatpush2.bf16.msra.mxu0 0
        %869 = vmatprep.subr.bf16.mxu0 0
        %870 = vmatpush2.bf16.msra.mxu0 0
        %871 = vmatprep.subr.bf16.mxu0 0
        %872 = vmatpush2.bf16.msra.mxu0 0
        %873 = vmatprep.subr.bf16.mxu0 0
        %874 = vmatpush2.bf16.msra.mxu0 0
        %875 = vmatprep.subr.bf16.mxu0 0
        %876 = vmatpush2.bf16.msra.mxu0 0
        %877 = vmatprep.subr.bf16.mxu0 0
        %878 = vmatpush2.bf16.msra.mxu0 0
        %879 = vmatprep.mubr.bf16.mxu0 0
        %880 = vmatmul.mubr.bf16.gmra.mxu0 %v713
        %v881 = vpop.f32.mrf.mxu0
        %v882 = vadd.f32 %v622, %v881
        %v883 = vpop.f32.mrf.mxu0
        %v884 = vadd.f32 %v624, %v883
        %v885 = vpop.f32.mrf.mxu0
        %v886 = vadd.f32 %v626, %v885
        %v887 = vpop.f32.mrf.mxu0
        %v888 = vadd.f32 %v628, %v887
        %889 = vmatprep.mubr.bf16.mxu0 0
        %890 = vmatmul.mubr.bf16.gmra.mxu0 %v715
        %v891 = vpop.f32.mrf.mxu0
        %v892 = vadd.f32 %v632, %v891
        %v893 = vpop.f32.mrf.mxu0
        %v894 = vadd.f32 %v634, %v893
        %v895 = vpop.f32.mrf.mxu0
        %v896 = vadd.f32 %v636, %v895
        %v897 = vpop.f32.mrf.mxu0
        %v898 = vadd.f32 %v638, %v897
        %899 = vdwg.mxu0
        %900 = vmatprep.subr.bf16.mxu0 0
        %901 = vmatpush1.bf16.msra.mxu0 0
        %902 = vmatprep.subr.bf16.mxu0 0
        %903 = vmatpush1.bf16.msra.mxu0 0
        %904 = vmatprep.subr.bf16.mxu0 0
        %905 = vmatpush1.bf16.msra.mxu0 0
        %906 = vmatprep.subr.bf16.mxu0 0
        %907 = vmatpush1.bf16.msra.mxu0 0
        %908 = vmatprep.subr.bf16.mxu0 0
        %909 = vmatpush1.bf16.msra.mxu0 0
        %910 = vmatprep.subr.bf16.mxu0 0
        %911 = vmatpush1.bf16.msra.mxu0 0
        %912 = vmatprep.subr.bf16.mxu0 0
        %913 = vmatpush1.bf16.msra.mxu0 0
        %914 = vmatprep.subr.bf16.mxu0 %v739
        %915 = vmatpush1.bf16.msra.mxu0 %v736
        %916 = vmatprep.subr.bf16.mxu0 0
        %917 = vmatpush2.bf16.msra.mxu0 0
        %918 = vmatprep.subr.bf16.mxu0 0
        %919 = vmatpush2.bf16.msra.mxu0 0
        %920 = vmatprep.subr.bf16.mxu0 0
        %921 = vmatpush2.bf16.msra.mxu0 0
        %922 = vmatprep.subr.bf16.mxu0 0
        %923 = vmatpush2.bf16.msra.mxu0 0
        %924 = vmatprep.subr.bf16.mxu0 0
        %925 = vmatpush2.bf16.msra.mxu0 0
        %926 = vmatprep.subr.bf16.mxu0 0
        %927 = vmatpush2.bf16.msra.mxu0 0
        %928 = vmatprep.subr.bf16.mxu0 0
        %929 = vmatpush2.bf16.msra.mxu0 0
        %930 = vmatprep.subr.bf16.mxu0 0
        %931 = vmatpush2.bf16.msra.mxu0 0
        %932 = vmatprep.mubr.bf16.mxu0 0
        %933 = vmatmul.mubr.bf16.gmra.mxu0 %v713
        %v934 = vpop.f32.mrf.mxu0
        %v935 = vadd.f32 %v675, %v934
        %v936 = vpop.f32.mrf.mxu0
        %v937 = vadd.f32 %v677, %v936
        %v938 = vpop.f32.mrf.mxu0
        %v939 = vadd.f32 %v679, %v938
        %v940 = vpop.f32.mrf.mxu0
        %v941 = vadd.f32 %v681, %v940
        %942 = vmatprep.mubr.bf16.mxu0 0
        %943 = vmatmul.mubr.bf16.gmra.mxu0 %v715
        %v944 = vpop.f32.mrf.mxu0
        %v945 = vadd.f32 %v685, %v944
        %v946 = vpop.f32.mrf.mxu0
        %v947 = vadd.f32 %v687, %v946
        %v948 = vpop.f32.mrf.mxu0
        %v949 = vadd.f32 %v689, %v948
        %v950 = vpop.f32.mrf.mxu0
        %v951 = vadd.f32 %v691, %v950
        %952 = vdwg.mxu0
        %s953 = scalar_lea.vmem [#allocation2], 64
        %v954 = vld [vmem:[%s953] sm:$0xff]
        %v955 = vld [vmem:[%s953 + $0x8] sm:$0xff]
        %v956 = vld [vmem:[%s953 + $0x10] sm:$0xff]
        %v957 = vld [vmem:[%s953 + $0x18] sm:$0xff]
        %vm961 = vcmask 1046528
        %v962 = vrot.slane %v396, 1
        %v963 = vrot.slane %v397, 1
        %v964 = vsel %vm961, %v962, %v963
        %v965 = vrot.slane %v398, 1
        %v966 = vsel %vm961, %v963, %v965
        %v971 = vunpack.c.l.b16 %v954
        %v972 = vunpack.c.h.b16 %v954
        %v973 = vunpack.c.l.b16 %v955
        %v974 = vunpack.c.h.b16 %v955
        %v975 = vunpack.c.l.b16 %v956
        %v976 = vunpack.c.h.b16 %v956
        %v977 = vunpack.c.l.b16 %v957
        %v978 = vunpack.c.h.b16 %v957
        %v979 = vpack.c.b16 %v971, %v971
        %v980 = vpack.c.b16 %v972, %v972
        %v981 = vpack.c.b16 %v973, %v973
        %v982 = vpack.c.b16 %v974, %v974
        %v983 = vpack.c.b16 %v975, %v975
        %v984 = vpack.c.b16 %v976, %v976
        %v985 = vpack.c.b16 %v977, %v977
        %v986 = vpack.c.b16 %v978, %v978
        %v988 = vsel %vm449, %v964, 0
        %v991 = vsel %vm449, %v966, 0
        %v994 = vsel %vm456, %v979, 0
        %v997 = vsel %vm456, %v980, 0
        %v1000 = vsel %vm456, %v981, 0
        %v1003 = vsel %vm456, %v982, 0
        %v1006 = vsel %vm456, %v983, 0
        %v1009 = vsel %vm456, %v984, 0
        %v1012 = vsel %vm456, %v985, 0
        %v1015 = vsel %vm456, %v986, 0
        %1017 = vmatprep.subr.bf16.mxu0 0
        %1018 = vmatpush1.bf16.msra.mxu0 0
        %1019 = vmatprep.subr.bf16.mxu0 0
        %1020 = vmatpush1.bf16.msra.mxu0 0
        %1021 = vmatprep.subr.bf16.mxu0 0
        %1022 = vmatpush1.bf16.msra.mxu0 0
        %1023 = vmatprep.subr.bf16.mxu0 0
        %1024 = vmatpush1.bf16.msra.mxu0 0
        %1025 = vmatprep.subr.bf16.mxu0 0
        %1026 = vmatpush1.bf16.msra.mxu0 0
        %1027 = vmatprep.subr.bf16.mxu0 0
        %1028 = vmatpush1.bf16.msra.mxu0 0
        %1029 = vmatprep.subr.bf16.mxu0 0
        %1030 = vmatpush1.bf16.msra.mxu0 0
        %1031 = vmatprep.subr.bf16.mxu0 %v997
        %1032 = vmatpush1.bf16.msra.mxu0 %v994
        %1033 = vmatprep.subr.bf16.mxu0 0
        %1034 = vmatpush2.bf16.msra.mxu0 0
        %1035 = vmatprep.subr.bf16.mxu0 0
        %1036 = vmatpush2.bf16.msra.mxu0 0
        %1037 = vmatprep.subr.bf16.mxu0 0
        %1038 = vmatpush2.bf16.msra.mxu0 0
        %1039 = vmatprep.subr.bf16.mxu0 0
        %1040 = vmatpush2.bf16.msra.mxu0 0
        %1041 = vmatprep.subr.bf16.mxu0 0
        %1042 = vmatpush2.bf16.msra.mxu0 0
        %1043 = vmatprep.subr.bf16.mxu0 0
        %1044 = vmatpush2.bf16.msra.mxu0 0
        %1045 = vmatprep.subr.bf16.mxu0 0
        %1046 = vmatpush2.bf16.msra.mxu0 0
        %1047 = vmatprep.subr.bf16.mxu0 0
        %1048 = vmatpush2.bf16.msra.mxu0 0
        %1049 = vmatprep.mubr.bf16.mxu0 0
        %1050 = vmatmul.mubr.bf16.gmra.mxu0 %v988
        %v1051 = vpop.f32.mrf.mxu0
        %v1052 = vadd.f32 0.0, %v1051
        %v1053 = vpop.f32.mrf.mxu0
        %v1054 = vadd.f32 0.0, %v1053
        %v1055 = vpop.f32.mrf.mxu0
        %v1056 = vadd.f32 0.0, %v1055
        %v1057 = vpop.f32.mrf.mxu0
        %v1058 = vadd.f32 0.0, %v1057
        %1059 = vmatprep.mubr.bf16.mxu0 0
        %1060 = vmatmul.mubr.bf16.gmra.mxu0 %v991
        %v1061 = vpop.f32.mrf.mxu0
        %v1062 = vadd.f32 0.0, %v1061
        %v1063 = vpop.f32.mrf.mxu0
        %v1064 = vadd.f32 0.0, %v1063
        %v1065 = vpop.f32.mrf.mxu0
        %v1066 = vadd.f32 0.0, %v1065
        %v1067 = vpop.f32.mrf.mxu0
        %v1068 = vadd.f32 0.0, %v1067
        %1069 = vdwg.mxu0
        %1070 = vmatprep.subr.bf16.mxu0 0
        %1071 = vmatpush1.bf16.msra.mxu0 0
        %1072 = vmatprep.subr.bf16.mxu0 0
        %1073 = vmatpush1.bf16.msra.mxu0 0
        %1074 = vmatprep.subr.bf16.mxu0 0
        %1075 = vmatpush1.bf16.msra.mxu0 0
        %1076 = vmatprep.subr.bf16.mxu0 0
        %1077 = vmatpush1.bf16.msra.mxu0 0
        %1078 = vmatprep.subr.bf16.mxu0 0
        %1079 = vmatpush1.bf16.msra.mxu0 0
        %1080 = vmatprep.subr.bf16.mxu0 0
        %1081 = vmatpush1.bf16.msra.mxu0 0
        %1082 = vmatprep.subr.bf16.mxu0 0
        %1083 = vmatpush1.bf16.msra.mxu0 0
        %1084 = vmatprep.subr.bf16.mxu0 %v1003
        %1085 = vmatpush1.bf16.msra.mxu0 %v1000
        %1086 = vmatprep.subr.bf16.mxu0 0
        %1087 = vmatpush2.bf16.msra.mxu0 0
        %1088 = vmatprep.subr.bf16.mxu0 0
        %1089 = vmatpush2.bf16.msra.mxu0 0
        %1090 = vmatprep.subr.bf16.mxu0 0
        %1091 = vmatpush2.bf16.msra.mxu0 0
        %1092 = vmatprep.subr.bf16.mxu0 0
        %1093 = vmatpush2.bf16.msra.mxu0 0
        %1094 = vmatprep.subr.bf16.mxu0 0
        %1095 = vmatpush2.bf16.msra.mxu0 0
        %1096 = vmatprep.subr.bf16.mxu0 0
        %1097 = vmatpush2.bf16.msra.mxu0 0
        %1098 = vmatprep.subr.bf16.mxu0 0
        %1099 = vmatpush2.bf16.msra.mxu0 0
        %1100 = vmatprep.subr.bf16.mxu0 0
        %1101 = vmatpush2.bf16.msra.mxu0 0
        %1102 = vmatprep.mubr.bf16.mxu0 0
        %1103 = vmatmul.mubr.bf16.gmra.mxu0 %v988
        %v1104 = vpop.f32.mrf.mxu0
        %v1105 = vadd.f32 0.0, %v1104
        %v1106 = vpop.f32.mrf.mxu0
        %v1107 = vadd.f32 0.0, %v1106
        %v1108 = vpop.f32.mrf.mxu0
        %v1109 = vadd.f32 0.0, %v1108
        %v1110 = vpop.f32.mrf.mxu0
        %v1111 = vadd.f32 0.0, %v1110
        %1112 = vmatprep.mubr.bf16.mxu0 0
        %1113 = vmatmul.mubr.bf16.gmra.mxu0 %v991
        %v1114 = vpop.f32.mrf.mxu0
        %v1115 = vadd.f32 0.0, %v1114
        %v1116 = vpop.f32.mrf.mxu0
        %v1117 = vadd.f32 0.0, %v1116
        %v1118 = vpop.f32.mrf.mxu0
        %v1119 = vadd.f32 0.0, %v1118
        %v1120 = vpop.f32.mrf.mxu0
        %v1121 = vadd.f32 0.0, %v1120
        %1122 = vdwg.mxu0
        %1123 = vmatprep.subr.bf16.mxu0 0
        %1124 = vmatpush1.bf16.msra.mxu0 0
        %1125 = vmatprep.subr.bf16.mxu0 0
        %1126 = vmatpush1.bf16.msra.mxu0 0
        %1127 = vmatprep.subr.bf16.mxu0 0
        %1128 = vmatpush1.bf16.msra.mxu0 0
        %1129 = vmatprep.subr.bf16.mxu0 0
        %1130 = vmatpush1.bf16.msra.mxu0 0
        %1131 = vmatprep.subr.bf16.mxu0 0
        %1132 = vmatpush1.bf16.msra.mxu0 0
        %1133 = vmatprep.subr.bf16.mxu0 0
        %1134 = vmatpush1.bf16.msra.mxu0 0
        %1135 = vmatprep.subr.bf16.mxu0 0
        %1136 = vmatpush1.bf16.msra.mxu0 0
        %1137 = vmatprep.subr.bf16.mxu0 %v1009
        %1138 = vmatpush1.bf16.msra.mxu0 %v1006
        %1139 = vmatprep.subr.bf16.mxu0 0
        %1140 = vmatpush2.bf16.msra.mxu0 0
        %1141 = vmatprep.subr.bf16.mxu0 0
        %1142 = vmatpush2.bf16.msra.mxu0 0
        %1143 = vmatprep.subr.bf16.mxu0 0
        %1144 = vmatpush2.bf16.msra.mxu0 0
        %1145 = vmatprep.subr.bf16.mxu0 0
        %1146 = vmatpush2.bf16.msra.mxu0 0
        %1147 = vmatprep.subr.bf16.mxu0 0
        %1148 = vmatpush2.bf16.msra.mxu0 0
        %1149 = vmatprep.subr.bf16.mxu0 0
        %1150 = vmatpush2.bf16.msra.mxu0 0
        %1151 = vmatprep.subr.bf16.mxu0 0
        %1152 = vmatpush2.bf16.msra.mxu0 0
        %1153 = vmatprep.subr.bf16.mxu0 0
        %1154 = vmatpush2.bf16.msra.mxu0 0
        %1155 = vmatprep.mubr.bf16.mxu0 0
        %1156 = vmatmul.mubr.bf16.gmra.mxu0 %v988
        %v1157 = vpop.f32.mrf.mxu0
        %v1158 = vadd.f32 0.0, %v1157
        %v1159 = vpop.f32.mrf.mxu0
        %v1160 = vadd.f32 0.0, %v1159
        %v1161 = vpop.f32.mrf.mxu0
        %v1162 = vadd.f32 0.0, %v1161
        %v1163 = vpop.f32.mrf.mxu0
        %v1164 = vadd.f32 0.0, %v1163
        %1165 = vmatprep.mubr.bf16.mxu0 0
        %1166 = vmatmul.mubr.bf16.gmra.mxu0 %v991
        %v1167 = vpop.f32.mrf.mxu0
        %v1168 = vadd.f32 0.0, %v1167
        %v1169 = vpop.f32.mrf.mxu0
        %v1170 = vadd.f32 0.0, %v1169
        %v1171 = vpop.f32.mrf.mxu0
        %v1172 = vadd.f32 0.0, %v1171
        %v1173 = vpop.f32.mrf.mxu0
        %v1174 = vadd.f32 0.0, %v1173
        %1175 = vdwg.mxu0
        %1176 = vmatprep.subr.bf16.mxu0 0
        %1177 = vmatpush1.bf16.msra.mxu0 0
        %1178 = vmatprep.subr.bf16.mxu0 0
        %1179 = vmatpush1.bf16.msra.mxu0 0
        %1180 = vmatprep.subr.bf16.mxu0 0
        %1181 = vmatpush1.bf16.msra.mxu0 0
        %1182 = vmatprep.subr.bf16.mxu0 0
        %1183 = vmatpush1.bf16.msra.mxu0 0
        %1184 = vmatprep.subr.bf16.mxu0 0
        %1185 = vmatpush1.bf16.msra.mxu0 0
        %1186 = vmatprep.subr.bf16.mxu0 0
        %1187 = vmatpush1.bf16.msra.mxu0 0
        %1188 = vmatprep.subr.bf16.mxu0 0
        %1189 = vmatpush1.bf16.msra.mxu0 0
        %1190 = vmatprep.subr.bf16.mxu0 %v1015
        %1191 = vmatpush1.bf16.msra.mxu0 %v1012
        %1192 = vmatprep.subr.bf16.mxu0 0
        %1193 = vmatpush2.bf16.msra.mxu0 0
        %1194 = vmatprep.subr.bf16.mxu0 0
        %1195 = vmatpush2.bf16.msra.mxu0 0
        %1196 = vmatprep.subr.bf16.mxu0 0
        %1197 = vmatpush2.bf16.msra.mxu0 0
        %1198 = vmatprep.subr.bf16.mxu0 0
        %1199 = vmatpush2.bf16.msra.mxu0 0
        %1200 = vmatprep.subr.bf16.mxu0 0
        %1201 = vmatpush2.bf16.msra.mxu0 0
        %1202 = vmatprep.subr.bf16.mxu0 0
        %1203 = vmatpush2.bf16.msra.mxu0 0
        %1204 = vmatprep.subr.bf16.mxu0 0
        %1205 = vmatpush2.bf16.msra.mxu0 0
        %1206 = vmatprep.subr.bf16.mxu0 0
        %1207 = vmatpush2.bf16.msra.mxu0 0
        %1208 = vmatprep.mubr.bf16.mxu0 0
        %1209 = vmatmul.mubr.bf16.gmra.mxu0 %v988
        %v1210 = vpop.f32.mrf.mxu0
        %v1211 = vadd.f32 0.0, %v1210
        %v1212 = vpop.f32.mrf.mxu0
        %v1213 = vadd.f32 0.0, %v1212
        %v1214 = vpop.f32.mrf.mxu0
        %v1215 = vadd.f32 0.0, %v1214
        %v1216 = vpop.f32.mrf.mxu0
        %v1217 = vadd.f32 0.0, %v1216
        %1218 = vmatprep.mubr.bf16.mxu0 0
        %1219 = vmatmul.mubr.bf16.gmra.mxu0 %v991
        %v1220 = vpop.f32.mrf.mxu0
        %v1221 = vadd.f32 0.0, %v1220
        %v1222 = vpop.f32.mrf.mxu0
        %v1223 = vadd.f32 0.0, %v1222
        %v1224 = vpop.f32.mrf.mxu0
        %v1225 = vadd.f32 0.0, %v1224
        %v1226 = vpop.f32.mrf.mxu0
        %v1227 = vadd.f32 0.0, %v1226
        %1228 = vdwg.mxu0
        %v1229 = vadd.f32 %v776, %v1052
        %v1230 = vadd.f32 %v778, %v1054
        %v1231 = vadd.f32 %v829, %v1105
        %v1232 = vadd.f32 %v831, %v1107
        %v1233 = vadd.f32 %v882, %v1158
        %v1234 = vadd.f32 %v884, %v1160
        %v1235 = vadd.f32 %v935, %v1211
        %v1236 = vadd.f32 %v937, %v1213
        %v1237 = vadd.f32 %v780, %v1056
        %v1238 = vadd.f32 %v782, %v1058
        %v1239 = vadd.f32 %v833, %v1109
        %v1240 = vadd.f32 %v835, %v1111
        %v1241 = vadd.f32 %v886, %v1162
        %v1242 = vadd.f32 %v888, %v1164
        %v1243 = vadd.f32 %v939, %v1215
        %v1244 = vadd.f32 %v941, %v1217
        %v1245 = vadd.f32 %v786, %v1062
        %v1246 = vadd.f32 %v788, %v1064
        %v1247 = vadd.f32 %v839, %v1115
        %v1248 = vadd.f32 %v841, %v1117
        %v1249 = vadd.f32 %v892, %v1168
        %v1250 = vadd.f32 %v894, %v1170
        %v1251 = vadd.f32 %v945, %v1221
        %v1252 = vadd.f32 %v947, %v1223
        %v1253 = vadd.f32 %v790, %v1066
        %v1254 = vadd.f32 %v792, %v1068
        %v1255 = vadd.f32 %v843, %v1119
        %v1256 = vadd.f32 %v845, %v1121
        %v1257 = vadd.f32 %v896, %v1172
        %v1258 = vadd.f32 %v898, %v1174
        %v1259 = vadd.f32 %v949, %v1225
        %v1260 = vadd.f32 %v951, %v1227
        %s1261 = scalar_lea.vmem [#allocation2], 96
        %v1262 = vld [vmem:[%s1261] sm:$0xff]
        %v1263 = vld [vmem:[%s1261 + $0x8] sm:$0xff]
        %v1264 = vld [vmem:[%s1261 + $0x10] sm:$0xff]
        %v1265 = vld [vmem:[%s1261 + $0x18] sm:$0xff]
        %vm1266 = vsmask.f32 6400
        %v1267 = vrot.slane %v410, 1
        %v1268 = vrot.slane %v412, 2
        %v1269 = vor.u32 %v1267, %v1268
        %v1270 = vrot.slane %v421, 1
        %v1271 = vrot.slane %v417, 2
        %v1272 = vor.u32 %v1270, %v1271
        %v1273 = vsel %vm1266, %v1269, %v1272
        %v1274 = vshrl.u32 %v398, 16
        %v1276 = vrot.slane %v1274, 1
        %v1277 = vrot.slane %v425, 2
        %v1278 = vor.u32 %v1276, %v1277
        %v1279 = vsel %vm1266, %v1272, %v1278
        %v1284 = vunpack.c.l.b16 %v1262
        %v1285 = vunpack.c.h.b16 %v1262
        %v1286 = vunpack.c.l.b16 %v1263
        %v1287 = vunpack.c.h.b16 %v1263
        %v1288 = vunpack.c.l.b16 %v1264
        %v1289 = vunpack.c.h.b16 %v1264
        %v1290 = vunpack.c.l.b16 %v1265
        %v1291 = vunpack.c.h.b16 %v1265
        %v1292 = vpack.c.b16 %v1284, %v1284
        %v1293 = vpack.c.b16 %v1285, %v1285
        %v1294 = vpack.c.b16 %v1286, %v1286
        %v1295 = vpack.c.b16 %v1287, %v1287
        %v1296 = vpack.c.b16 %v1288, %v1288
        %v1297 = vpack.c.b16 %v1289, %v1289
        %v1298 = vpack.c.b16 %v1290, %v1290
        %v1299 = vpack.c.b16 %v1291, %v1291
        %v1301 = vsel %vm449, %v1273, 0
        %v1304 = vsel %vm449, %v1279, 0
        %v1307 = vsel %vm456, %v1292, 0
        %v1310 = vsel %vm456, %v1293, 0
        %v1313 = vsel %vm456, %v1294, 0
        %v1316 = vsel %vm456, %v1295, 0
        %v1319 = vsel %vm456, %v1296, 0
        %v1322 = vsel %vm456, %v1297, 0
        %v1325 = vsel %vm456, %v1298, 0
        %v1328 = vsel %vm456, %v1299, 0
        %1330 = vmatprep.subr.bf16.mxu0 0
        %1331 = vmatpush1.bf16.msra.mxu0 0
        %1332 = vmatprep.subr.bf16.mxu0 0
        %1333 = vmatpush1.bf16.msra.mxu0 0
        %1334 = vmatprep.subr.bf16.mxu0 0
        %1335 = vmatpush1.bf16.msra.mxu0 0
        %1336 = vmatprep.subr.bf16.mxu0 0
        %1337 = vmatpush1.bf16.msra.mxu0 0
        %1338 = vmatprep.subr.bf16.mxu0 0
        %1339 = vmatpush1.bf16.msra.mxu0 0
        %1340 = vmatprep.subr.bf16.mxu0 0
        %1341 = vmatpush1.bf16.msra.mxu0 0
        %1342 = vmatprep.subr.bf16.mxu0 0
        %1343 = vmatpush1.bf16.msra.mxu0 0
        %1344 = vmatprep.subr.bf16.mxu0 %v1310
        %1345 = vmatpush1.bf16.msra.mxu0 %v1307
        %1346 = vmatprep.subr.bf16.mxu0 0
        %1347 = vmatpush2.bf16.msra.mxu0 0
        %1348 = vmatprep.subr.bf16.mxu0 0
        %1349 = vmatpush2.bf16.msra.mxu0 0
        %1350 = vmatprep.subr.bf16.mxu0 0
        %1351 = vmatpush2.bf16.msra.mxu0 0
        %1352 = vmatprep.subr.bf16.mxu0 0
        %1353 = vmatpush2.bf16.msra.mxu0 0
        %1354 = vmatprep.subr.bf16.mxu0 0
        %1355 = vmatpush2.bf16.msra.mxu0 0
        %1356 = vmatprep.subr.bf16.mxu0 0
        %1357 = vmatpush2.bf16.msra.mxu0 0
        %1358 = vmatprep.subr.bf16.mxu0 0
        %1359 = vmatpush2.bf16.msra.mxu0 0
        %1360 = vmatprep.subr.bf16.mxu0 0
        %1361 = vmatpush2.bf16.msra.mxu0 0
        %1362 = vmatprep.mubr.bf16.mxu0 0
        %1363 = vmatmul.mubr.bf16.gmra.mxu0 %v1301
        %v1364 = vpop.f32.mrf.mxu0
        %v1365 = vadd.f32 0.0, %v1364
        %v1366 = vpop.f32.mrf.mxu0
        %v1367 = vadd.f32 0.0, %v1366
        %v1368 = vpop.f32.mrf.mxu0
        %v1369 = vadd.f32 0.0, %v1368
        %v1370 = vpop.f32.mrf.mxu0
        %v1371 = vadd.f32 0.0, %v1370
        %1372 = vmatprep.mubr.bf16.mxu0 0
        %1373 = vmatmul.mubr.bf16.gmra.mxu0 %v1304
        %v1374 = vpop.f32.mrf.mxu0
        %v1375 = vadd.f32 0.0, %v1374
        %v1376 = vpop.f32.mrf.mxu0
        %v1377 = vadd.f32 0.0, %v1376
        %v1378 = vpop.f32.mrf.mxu0
        %v1379 = vadd.f32 0.0, %v1378
        %v1380 = vpop.f32.mrf.mxu0
        %v1381 = vadd.f32 0.0, %v1380
        %1382 = vdwg.mxu0
        %1383 = vmatprep.subr.bf16.mxu0 0
        %1384 = vmatpush1.bf16.msra.mxu0 0
        %1385 = vmatprep.subr.bf16.mxu0 0
        %1386 = vmatpush1.bf16.msra.mxu0 0
        %1387 = vmatprep.subr.bf16.mxu0 0
        %1388 = vmatpush1.bf16.msra.mxu0 0
        %1389 = vmatprep.subr.bf16.mxu0 0
        %1390 = vmatpush1.bf16.msra.mxu0 0
        %1391 = vmatprep.subr.bf16.mxu0 0
        %1392 = vmatpush1.bf16.msra.mxu0 0
        %1393 = vmatprep.subr.bf16.mxu0 0
        %1394 = vmatpush1.bf16.msra.mxu0 0
        %1395 = vmatprep.subr.bf16.mxu0 0
        %1396 = vmatpush1.bf16.msra.mxu0 0
        %1397 = vmatprep.subr.bf16.mxu0 %v1316
        %1398 = vmatpush1.bf16.msra.mxu0 %v1313
        %1399 = vmatprep.subr.bf16.mxu0 0
        %1400 = vmatpush2.bf16.msra.mxu0 0
        %1401 = vmatprep.subr.bf16.mxu0 0
        %1402 = vmatpush2.bf16.msra.mxu0 0
        %1403 = vmatprep.subr.bf16.mxu0 0
        %1404 = vmatpush2.bf16.msra.mxu0 0
        %1405 = vmatprep.subr.bf16.mxu0 0
        %1406 = vmatpush2.bf16.msra.mxu0 0
        %1407 = vmatprep.subr.bf16.mxu0 0
        %1408 = vmatpush2.bf16.msra.mxu0 0
        %1409 = vmatprep.subr.bf16.mxu0 0
        %1410 = vmatpush2.bf16.msra.mxu0 0
        %1411 = vmatprep.subr.bf16.mxu0 0
        %1412 = vmatpush2.bf16.msra.mxu0 0
        %1413 = vmatprep.subr.bf16.mxu0 0
        %1414 = vmatpush2.bf16.msra.mxu0 0
        %1415 = vmatprep.mubr.bf16.mxu0 0
        %1416 = vmatmul.mubr.bf16.gmra.mxu0 %v1301
        %v1417 = vpop.f32.mrf.mxu0
        %v1418 = vadd.f32 0.0, %v1417
        %v1419 = vpop.f32.mrf.mxu0
        %v1420 = vadd.f32 0.0, %v1419
        %v1421 = vpop.f32.mrf.mxu0
        %v1422 = vadd.f32 0.0, %v1421
        %v1423 = vpop.f32.mrf.mxu0
        %v1424 = vadd.f32 0.0, %v1423
        %1425 = vmatprep.mubr.bf16.mxu0 0
        %1426 = vmatmul.mubr.bf16.gmra.mxu0 %v1304
        %v1427 = vpop.f32.mrf.mxu0
        %v1428 = vadd.f32 0.0, %v1427
        %v1429 = vpop.f32.mrf.mxu0
        %v1430 = vadd.f32 0.0, %v1429
        %v1431 = vpop.f32.mrf.mxu0
        %v1432 = vadd.f32 0.0, %v1431
        %v1433 = vpop.f32.mrf.mxu0
        %v1434 = vadd.f32 0.0, %v1433
        %1435 = vdwg.mxu0
        %1436 = vmatprep.subr.bf16.mxu0 0
        %1437 = vmatpush1.bf16.msra.mxu0 0
        %1438 = vmatprep.subr.bf16.mxu0 0
        %1439 = vmatpush1.bf16.msra.mxu0 0
        %1440 = vmatprep.subr.bf16.mxu0 0
        %1441 = vmatpush1.bf16.msra.mxu0 0
        %1442 = vmatprep.subr.bf16.mxu0 0
        %1443 = vmatpush1.bf16.msra.mxu0 0
        %1444 = vmatprep.subr.bf16.mxu0 0
        %1445 = vmatpush1.bf16.msra.mxu0 0
        %1446 = vmatprep.subr.bf16.mxu0 0
        %1447 = vmatpush1.bf16.msra.mxu0 0
        %1448 = vmatprep.subr.bf16.mxu0 0
        %1449 = vmatpush1.bf16.msra.mxu0 0
        %1450 = vmatprep.subr.bf16.mxu0 %v1322
        %1451 = vmatpush1.bf16.msra.mxu0 %v1319
        %1452 = vmatprep.subr.bf16.mxu0 0
        %1453 = vmatpush2.bf16.msra.mxu0 0
        %1454 = vmatprep.subr.bf16.mxu0 0
        %1455 = vmatpush2.bf16.msra.mxu0 0
        %1456 = vmatprep.subr.bf16.mxu0 0
        %1457 = vmatpush2.bf16.msra.mxu0 0
        %1458 = vmatprep.subr.bf16.mxu0 0
        %1459 = vmatpush2.bf16.msra.mxu0 0
        %1460 = vmatprep.subr.bf16.mxu0 0
        %1461 = vmatpush2.bf16.msra.mxu0 0
        %1462 = vmatprep.subr.bf16.mxu0 0
        %1463 = vmatpush2.bf16.msra.mxu0 0
        %1464 = vmatprep.subr.bf16.mxu0 0
        %1465 = vmatpush2.bf16.msra.mxu0 0
        %1466 = vmatprep.subr.bf16.mxu0 0
        %1467 = vmatpush2.bf16.msra.mxu0 0
        %1468 = vmatprep.mubr.bf16.mxu0 0
        %1469 = vmatmul.mubr.bf16.gmra.mxu0 %v1301
        %v1470 = vpop.f32.mrf.mxu0
        %v1471 = vadd.f32 0.0, %v1470
        %v1472 = vpop.f32.mrf.mxu0
        %v1473 = vadd.f32 0.0, %v1472
        %v1474 = vpop.f32.mrf.mxu0
        %v1475 = vadd.f32 0.0, %v1474
        %v1476 = vpop.f32.mrf.mxu0
        %v1477 = vadd.f32 0.0, %v1476
        %1478 = vmatprep.mubr.bf16.mxu0 0
        %1479 = vmatmul.mubr.bf16.gmra.mxu0 %v1304
        %v1480 = vpop.f32.mrf.mxu0
        %v1481 = vadd.f32 0.0, %v1480
        %v1482 = vpop.f32.mrf.mxu0
        %v1483 = vadd.f32 0.0, %v1482
        %v1484 = vpop.f32.mrf.mxu0
        %v1485 = vadd.f32 0.0, %v1484
        %v1486 = vpop.f32.mrf.mxu0
        %v1487 = vadd.f32 0.0, %v1486
        %1488 = vdwg.mxu0
        %1489 = vmatprep.subr.bf16.mxu0 0
        %1490 = vmatpush1.bf16.msra.mxu0 0
        %1491 = vmatprep.subr.bf16.mxu0 0
        %1492 = vmatpush1.bf16.msra.mxu0 0
        %1493 = vmatprep.subr.bf16.mxu0 0
        %1494 = vmatpush1.bf16.msra.mxu0 0
        %1495 = vmatprep.subr.bf16.mxu0 0
        %1496 = vmatpush1.bf16.msra.mxu0 0
        %1497 = vmatprep.subr.bf16.mxu0 0
        %1498 = vmatpush1.bf16.msra.mxu0 0
        %1499 = vmatprep.subr.bf16.mxu0 0
        %1500 = vmatpush1.bf16.msra.mxu0 0
        %1501 = vmatprep.subr.bf16.mxu0 0
        %1502 = vmatpush1.bf16.msra.mxu0 0
        %1503 = vmatprep.subr.bf16.mxu0 %v1328
        %1504 = vmatpush1.bf16.msra.mxu0 %v1325
        %1505 = vmatprep.subr.bf16.mxu0 0
        %1506 = vmatpush2.bf16.msra.mxu0 0
        %1507 = vmatprep.subr.bf16.mxu0 0
        %1508 = vmatpush2.bf16.msra.mxu0 0
        %1509 = vmatprep.subr.bf16.mxu0 0
        %1510 = vmatpush2.bf16.msra.mxu0 0
        %1511 = vmatprep.subr.bf16.mxu0 0
        %1512 = vmatpush2.bf16.msra.mxu0 0
        %1513 = vmatprep.subr.bf16.mxu0 0
        %1514 = vmatpush2.bf16.msra.mxu0 0
        %1515 = vmatprep.subr.bf16.mxu0 0
        %1516 = vmatpush2.bf16.msra.mxu0 0
        %1517 = vmatprep.subr.bf16.mxu0 0
        %1518 = vmatpush2.bf16.msra.mxu0 0
        %1519 = vmatprep.subr.bf16.mxu0 0
        %1520 = vmatpush2.bf16.msra.mxu0 0
        %1521 = vmatprep.mubr.bf16.mxu0 0
        %1522 = vmatmul.mubr.bf16.gmra.mxu0 %v1301
        %v1523 = vpop.f32.mrf.mxu0
        %v1524 = vadd.f32 0.0, %v1523
        %v1525 = vpop.f32.mrf.mxu0
        %v1526 = vadd.f32 0.0, %v1525
        %v1527 = vpop.f32.mrf.mxu0
        %v1528 = vadd.f32 0.0, %v1527
        %v1529 = vpop.f32.mrf.mxu0
        %v1530 = vadd.f32 0.0, %v1529
        %1531 = vmatprep.mubr.bf16.mxu0 0
        %1532 = vmatmul.mubr.bf16.gmra.mxu0 %v1304
        %v1533 = vpop.f32.mrf.mxu0
        %v1534 = vadd.f32 0.0, %v1533
        %v1535 = vpop.f32.mrf.mxu0
        %v1536 = vadd.f32 0.0, %v1535
        %v1537 = vpop.f32.mrf.mxu0
        %v1538 = vadd.f32 0.0, %v1537
        %v1539 = vpop.f32.mrf.mxu0
        %v1540 = vadd.f32 0.0, %v1539
        %1541 = vdwg.mxu0
        %v1542 = vadd.f32 %v1229, %v1365
        %v1543 = vadd.f32 %v1230, %v1367
        %v1544 = vadd.f32 %v1231, %v1418
        %v1545 = vadd.f32 %v1232, %v1420
        %v1546 = vadd.f32 %v1233, %v1471
        %v1547 = vadd.f32 %v1234, %v1473
        %v1548 = vadd.f32 %v1235, %v1524
        %v1549 = vadd.f32 %v1236, %v1526
        %v1550 = vadd.f32 %v1237, %v1369
        %v1551 = vadd.f32 %v1238, %v1371
        %v1552 = vadd.f32 %v1239, %v1422
        %v1553 = vadd.f32 %v1240, %v1424
        %v1554 = vadd.f32 %v1241, %v1475
        %v1555 = vadd.f32 %v1242, %v1477
        %v1556 = vadd.f32 %v1243, %v1528
        %v1557 = vadd.f32 %v1244, %v1530
        %v1558 = vadd.f32 %v1245, %v1375
        %v1559 = vadd.f32 %v1246, %v1377
        %v1560 = vadd.f32 %v1247, %v1428
        %v1561 = vadd.f32 %v1248, %v1430
        %v1562 = vadd.f32 %v1249, %v1481
        %v1563 = vadd.f32 %v1250, %v1483
        %v1564 = vadd.f32 %v1251, %v1534
        %v1565 = vadd.f32 %v1252, %v1536
        %v1566 = vadd.f32 %v1253, %v1379
        %v1567 = vadd.f32 %v1254, %v1381
        %v1568 = vadd.f32 %v1255, %v1432
        %v1569 = vadd.f32 %v1256, %v1434
        %v1570 = vadd.f32 %v1257, %v1485
        %v1571 = vadd.f32 %v1258, %v1487
        %v1572 = vadd.f32 %v1259, %v1538
        %v1573 = vadd.f32 %v1260, %v1540
        %s1574 = scalar_lea.vmem [#allocation2], 128
        %v1575 = vld [vmem:[%s1574] sm:$0xff]
        %v1576 = vld [vmem:[%s1574 + $0x8] sm:$0xff]
        %v1577 = vld [vmem:[%s1574 + $0x10] sm:$0xff]
        %v1578 = vld [vmem:[%s1574 + $0x18] sm:$0xff]
        %vm1579 = vcmask 1045504
        %v1580 = vrot.slane %v396, 2
        %v1581 = vrot.slane %v397, 2
        %v1582 = vsel %vm1579, %v1580, %v1581
        %v1583 = vrot.slane %v398, 2
        %v1584 = vsel %vm1579, %v1581, %v1583
        %v1589 = vunpack.c.l.b16 %v1575
        %v1590 = vunpack.c.h.b16 %v1575
        %v1591 = vunpack.c.l.b16 %v1576
        %v1592 = vunpack.c.h.b16 %v1576
        %v1593 = vunpack.c.l.b16 %v1577
        %v1594 = vunpack.c.h.b16 %v1577
        %v1595 = vunpack.c.l.b16 %v1578
        %v1596 = vunpack.c.h.b16 %v1578
        %v1597 = vpack.c.b16 %v1589, %v1589
        %v1598 = vpack.c.b16 %v1590, %v1590
        %v1599 = vpack.c.b16 %v1591, %v1591
        %v1600 = vpack.c.b16 %v1592, %v1592
        %v1601 = vpack.c.b16 %v1593, %v1593
        %v1602 = vpack.c.b16 %v1594, %v1594
        %v1603 = vpack.c.b16 %v1595, %v1595
        %v1604 = vpack.c.b16 %v1596, %v1596
        %v1606 = vsel %vm449, %v1582, 0
        %v1609 = vsel %vm449, %v1584, 0
        %v1612 = vsel %vm456, %v1597, 0
        %v1615 = vsel %vm456, %v1598, 0
        %v1618 = vsel %vm456, %v1599, 0
        %v1621 = vsel %vm456, %v1600, 0
        %v1624 = vsel %vm456, %v1601, 0
        %v1627 = vsel %vm456, %v1602, 0
        %v1630 = vsel %vm456, %v1603, 0
        %v1633 = vsel %vm456, %v1604, 0
        %1635 = vmatprep.subr.bf16.mxu0 0
        %1636 = vmatpush1.bf16.msra.mxu0 0
        %1637 = vmatprep.subr.bf16.mxu0 0
        %1638 = vmatpush1.bf16.msra.mxu0 0
        %1639 = vmatprep.subr.bf16.mxu0 0
        %1640 = vmatpush1.bf16.msra.mxu0 0
        %1641 = vmatprep.subr.bf16.mxu0 0
        %1642 = vmatpush1.bf16.msra.mxu0 0
        %1643 = vmatprep.subr.bf16.mxu0 0
        %1644 = vmatpush1.bf16.msra.mxu0 0
        %1645 = vmatprep.subr.bf16.mxu0 0
        %1646 = vmatpush1.bf16.msra.mxu0 0
        %1647 = vmatprep.subr.bf16.mxu0 0
        %1648 = vmatpush1.bf16.msra.mxu0 0
        %1649 = vmatprep.subr.bf16.mxu0 %v1615
        %1650 = vmatpush1.bf16.msra.mxu0 %v1612
        %1651 = vmatprep.subr.bf16.mxu0 0
        %1652 = vmatpush2.bf16.msra.mxu0 0
        %1653 = vmatprep.subr.bf16.mxu0 0
        %1654 = vmatpush2.bf16.msra.mxu0 0
        %1655 = vmatprep.subr.bf16.mxu0 0
        %1656 = vmatpush2.bf16.msra.mxu0 0
        %1657 = vmatprep.subr.bf16.mxu0 0
        %1658 = vmatpush2.bf16.msra.mxu0 0
        %1659 = vmatprep.subr.bf16.mxu0 0
        %1660 = vmatpush2.bf16.msra.mxu0 0
        %1661 = vmatprep.subr.bf16.mxu0 0
        %1662 = vmatpush2.bf16.msra.mxu0 0
        %1663 = vmatprep.subr.bf16.mxu0 0
        %1664 = vmatpush2.bf16.msra.mxu0 0
        %1665 = vmatprep.subr.bf16.mxu0 0
        %1666 = vmatpush2.bf16.msra.mxu0 0
        %1667 = vmatprep.mubr.bf16.mxu0 0
        %1668 = vmatmul.mubr.bf16.gmra.mxu0 %v1606
        %v1669 = vpop.f32.mrf.mxu0
        %v1670 = vadd.f32 0.0, %v1669
        %v1671 = vpop.f32.mrf.mxu0
        %v1672 = vadd.f32 0.0, %v1671
        %v1673 = vpop.f32.mrf.mxu0
        %v1674 = vadd.f32 0.0, %v1673
        %v1675 = vpop.f32.mrf.mxu0
        %v1676 = vadd.f32 0.0, %v1675
        %1677 = vmatprep.mubr.bf16.mxu0 0
        %1678 = vmatmul.mubr.bf16.gmra.mxu0 %v1609
        %v1679 = vpop.f32.mrf.mxu0
        %v1680 = vadd.f32 0.0, %v1679
        %v1681 = vpop.f32.mrf.mxu0
        %v1682 = vadd.f32 0.0, %v1681
        %v1683 = vpop.f32.mrf.mxu0
        %v1684 = vadd.f32 0.0, %v1683
        %v1685 = vpop.f32.mrf.mxu0
        %v1686 = vadd.f32 0.0, %v1685
        %1687 = vdwg.mxu0
        %1688 = vmatprep.subr.bf16.mxu0 0
        %1689 = vmatpush1.bf16.msra.mxu0 0
        %1690 = vmatprep.subr.bf16.mxu0 0
        %1691 = vmatpush1.bf16.msra.mxu0 0
        %1692 = vmatprep.subr.bf16.mxu0 0
        %1693 = vmatpush1.bf16.msra.mxu0 0
        %1694 = vmatprep.subr.bf16.mxu0 0
        %1695 = vmatpush1.bf16.msra.mxu0 0
        %1696 = vmatprep.subr.bf16.mxu0 0
        %1697 = vmatpush1.bf16.msra.mxu0 0
        %1698 = vmatprep.subr.bf16.mxu0 0
        %1699 = vmatpush1.bf16.msra.mxu0 0
        %1700 = vmatprep.subr.bf16.mxu0 0
        %1701 = vmatpush1.bf16.msra.mxu0 0
        %1702 = vmatprep.subr.bf16.mxu0 %v1621
        %1703 = vmatpush1.bf16.msra.mxu0 %v1618
        %1704 = vmatprep.subr.bf16.mxu0 0
        %1705 = vmatpush2.bf16.msra.mxu0 0
        %1706 = vmatprep.subr.bf16.mxu0 0
        %1707 = vmatpush2.bf16.msra.mxu0 0
        %1708 = vmatprep.subr.bf16.mxu0 0
        %1709 = vmatpush2.bf16.msra.mxu0 0
        %1710 = vmatprep.subr.bf16.mxu0 0
        %1711 = vmatpush2.bf16.msra.mxu0 0
        %1712 = vmatprep.subr.bf16.mxu0 0
        %1713 = vmatpush2.bf16.msra.mxu0 0
        %1714 = vmatprep.subr.bf16.mxu0 0
        %1715 = vmatpush2.bf16.msra.mxu0 0
        %1716 = vmatprep.subr.bf16.mxu0 0
        %1717 = vmatpush2.bf16.msra.mxu0 0
        %1718 = vmatprep.subr.bf16.mxu0 0
        %1719 = vmatpush2.bf16.msra.mxu0 0
        %1720 = vmatprep.mubr.bf16.mxu0 0
        %1721 = vmatmul.mubr.bf16.gmra.mxu0 %v1606
        %v1722 = vpop.f32.mrf.mxu0
        %v1723 = vadd.f32 0.0, %v1722
        %v1724 = vpop.f32.mrf.mxu0
        %v1725 = vadd.f32 0.0, %v1724
        %v1726 = vpop.f32.mrf.mxu0
        %v1727 = vadd.f32 0.0, %v1726
        %v1728 = vpop.f32.mrf.mxu0
        %v1729 = vadd.f32 0.0, %v1728
        %1730 = vmatprep.mubr.bf16.mxu0 0
        %1731 = vmatmul.mubr.bf16.gmra.mxu0 %v1609
        %v1732 = vpop.f32.mrf.mxu0
        %v1733 = vadd.f32 0.0, %v1732
        %v1734 = vpop.f32.mrf.mxu0
        %v1735 = vadd.f32 0.0, %v1734
        %v1736 = vpop.f32.mrf.mxu0
        %v1737 = vadd.f32 0.0, %v1736
        %v1738 = vpop.f32.mrf.mxu0
        %v1739 = vadd.f32 0.0, %v1738
        %1740 = vdwg.mxu0
        %1741 = vmatprep.subr.bf16.mxu0 0
        %1742 = vmatpush1.bf16.msra.mxu0 0
        %1743 = vmatprep.subr.bf16.mxu0 0
        %1744 = vmatpush1.bf16.msra.mxu0 0
        %1745 = vmatprep.subr.bf16.mxu0 0
        %1746 = vmatpush1.bf16.msra.mxu0 0
        %1747 = vmatprep.subr.bf16.mxu0 0
        %1748 = vmatpush1.bf16.msra.mxu0 0
        %1749 = vmatprep.subr.bf16.mxu0 0
        %1750 = vmatpush1.bf16.msra.mxu0 0
        %1751 = vmatprep.subr.bf16.mxu0 0
        %1752 = vmatpush1.bf16.msra.mxu0 0
        %1753 = vmatprep.subr.bf16.mxu0 0
        %1754 = vmatpush1.bf16.msra.mxu0 0
        %1755 = vmatprep.subr.bf16.mxu0 %v1627
        %1756 = vmatpush1.bf16.msra.mxu0 %v1624
        %1757 = vmatprep.subr.bf16.mxu0 0
        %1758 = vmatpush2.bf16.msra.mxu0 0
        %1759 = vmatprep.subr.bf16.mxu0 0
        %1760 = vmatpush2.bf16.msra.mxu0 0
        %1761 = vmatprep.subr.bf16.mxu0 0
        %1762 = vmatpush2.bf16.msra.mxu0 0
        %1763 = vmatprep.subr.bf16.mxu0 0
        %1764 = vmatpush2.bf16.msra.mxu0 0
        %1765 = vmatprep.subr.bf16.mxu0 0
        %1766 = vmatpush2.bf16.msra.mxu0 0
        %1767 = vmatprep.subr.bf16.mxu0 0
        %1768 = vmatpush2.bf16.msra.mxu0 0
        %1769 = vmatprep.subr.bf16.mxu0 0
        %1770 = vmatpush2.bf16.msra.mxu0 0
        %1771 = vmatprep.subr.bf16.mxu0 0
        %1772 = vmatpush2.bf16.msra.mxu0 0
        %1773 = vmatprep.mubr.bf16.mxu0 0
        %1774 = vmatmul.mubr.bf16.gmra.mxu0 %v1606
        %v1775 = vpop.f32.mrf.mxu0
        %v1776 = vadd.f32 0.0, %v1775
        %v1777 = vpop.f32.mrf.mxu0
        %v1778 = vadd.f32 0.0, %v1777
        %v1779 = vpop.f32.mrf.mxu0
        %v1780 = vadd.f32 0.0, %v1779
        %v1781 = vpop.f32.mrf.mxu0
        %v1782 = vadd.f32 0.0, %v1781
        %1783 = vmatprep.mubr.bf16.mxu0 0
        %1784 = vmatmul.mubr.bf16.gmra.mxu0 %v1609
        %v1785 = vpop.f32.mrf.mxu0
        %v1786 = vadd.f32 0.0, %v1785
        %v1787 = vpop.f32.mrf.mxu0
        %v1788 = vadd.f32 0.0, %v1787
        %v1789 = vpop.f32.mrf.mxu0
        %v1790 = vadd.f32 0.0, %v1789
        %v1791 = vpop.f32.mrf.mxu0
        %v1792 = vadd.f32 0.0, %v1791
        %1793 = vdwg.mxu0
        %1794 = vmatprep.subr.bf16.mxu0 0
        %1795 = vmatpush1.bf16.msra.mxu0 0
        %1796 = vmatprep.subr.bf16.mxu0 0
        %1797 = vmatpush1.bf16.msra.mxu0 0
        %1798 = vmatprep.subr.bf16.mxu0 0
        %1799 = vmatpush1.bf16.msra.mxu0 0
        %1800 = vmatprep.subr.bf16.mxu0 0
        %1801 = vmatpush1.bf16.msra.mxu0 0
        %1802 = vmatprep.subr.bf16.mxu0 0
        %1803 = vmatpush1.bf16.msra.mxu0 0
        %1804 = vmatprep.subr.bf16.mxu0 0
        %1805 = vmatpush1.bf16.msra.mxu0 0
        %1806 = vmatprep.subr.bf16.mxu0 0
        %1807 = vmatpush1.bf16.msra.mxu0 0
        %1808 = vmatprep.subr.bf16.mxu0 %v1633
        %1809 = vmatpush1.bf16.msra.mxu0 %v1630
        %1810 = vmatprep.subr.bf16.mxu0 0
        %1811 = vmatpush2.bf16.msra.mxu0 0
        %1812 = vmatprep.subr.bf16.mxu0 0
        %1813 = vmatpush2.bf16.msra.mxu0 0
        %1814 = vmatprep.subr.bf16.mxu0 0
        %1815 = vmatpush2.bf16.msra.mxu0 0
        %1816 = vmatprep.subr.bf16.mxu0 0
        %1817 = vmatpush2.bf16.msra.mxu0 0
        %1818 = vmatprep.subr.bf16.mxu0 0
        %1819 = vmatpush2.bf16.msra.mxu0 0
        %1820 = vmatprep.subr.bf16.mxu0 0
        %1821 = vmatpush2.bf16.msra.mxu0 0
        %1822 = vmatprep.subr.bf16.mxu0 0
        %1823 = vmatpush2.bf16.msra.mxu0 0
        %1824 = vmatprep.subr.bf16.mxu0 0
        %1825 = vmatpush2.bf16.msra.mxu0 0
        %1826 = vmatprep.mubr.bf16.mxu0 0
        %1827 = vmatmul.mubr.bf16.gmra.mxu0 %v1606
        %v1828 = vpop.f32.mrf.mxu0
        %v1829 = vadd.f32 0.0, %v1828
        %v1830 = vpop.f32.mrf.mxu0
        %v1831 = vadd.f32 0.0, %v1830
        %v1832 = vpop.f32.mrf.mxu0
        %v1833 = vadd.f32 0.0, %v1832
        %v1834 = vpop.f32.mrf.mxu0
        %v1835 = vadd.f32 0.0, %v1834
        %1836 = vmatprep.mubr.bf16.mxu0 0
        %1837 = vmatmul.mubr.bf16.gmra.mxu0 %v1609
        %v1838 = vpop.f32.mrf.mxu0
        %v1839 = vadd.f32 0.0, %v1838
        %v1840 = vpop.f32.mrf.mxu0
        %v1841 = vadd.f32 0.0, %v1840
        %v1842 = vpop.f32.mrf.mxu0
        %v1843 = vadd.f32 0.0, %v1842
        %v1844 = vpop.f32.mrf.mxu0
        %v1845 = vadd.f32 0.0, %v1844
        %1846 = vdwg.mxu0
        %v1847 = vadd.f32 %v1542, %v1670
        %v1848 = vadd.f32 %v1543, %v1672
        %v1849 = vadd.f32 %v1544, %v1723
        %v1850 = vadd.f32 %v1545, %v1725
        %v1851 = vadd.f32 %v1546, %v1776
        %v1852 = vadd.f32 %v1547, %v1778
        %v1853 = vadd.f32 %v1548, %v1829
        %v1854 = vadd.f32 %v1549, %v1831
        %v1855 = vadd.f32 %v1550, %v1674
        %v1856 = vadd.f32 %v1551, %v1676
        %v1857 = vadd.f32 %v1552, %v1727
        %v1858 = vadd.f32 %v1553, %v1729
        %v1859 = vadd.f32 %v1554, %v1780
        %v1860 = vadd.f32 %v1555, %v1782
        %v1861 = vadd.f32 %v1556, %v1833
        %v1862 = vadd.f32 %v1557, %v1835
        %v1863 = vadd.f32 %v1558, %v1680
        %v1864 = vadd.f32 %v1559, %v1682
        %v1865 = vadd.f32 %v1560, %v1733
        %v1866 = vadd.f32 %v1561, %v1735
        %v1867 = vadd.f32 %v1562, %v1786
        %v1868 = vadd.f32 %v1563, %v1788
        %v1869 = vadd.f32 %v1564, %v1839
        %v1870 = vadd.f32 %v1565, %v1841
        %v1871 = vadd.f32 %v1566, %v1684
        %v1872 = vadd.f32 %v1567, %v1686
        %v1873 = vadd.f32 %v1568, %v1737
        %v1874 = vadd.f32 %v1569, %v1739
        %v1875 = vadd.f32 %v1570, %v1790
        %v1876 = vadd.f32 %v1571, %v1792
        %v1877 = vadd.f32 %v1572, %v1843
        %v1878 = vadd.f32 %v1573, %v1845
        %v1879 = vld [vmem:[%s2] sm:$0xff]
        %v1881 = vlaneseq
        %v1882 = vshrl.u32 %v1881, 7
        %v1883 = vsub.s32 0, %v1882
        %v1884 = vrot.slane %v1879, %v1883
        %v1885 = vlaneseq
        %v1886 = vshrl.u32 %v1885, 7
        %v1887 = vsub.s32 1, %v1886
        %v1888 = vrot.slane %v1879, %v1887
        %v1889 = vlaneseq
        %v1890 = vshrl.u32 %v1889, 7
        %v1891 = vsub.s32 2, %v1890
        %v1892 = vrot.slane %v1879, %v1891
        %v1893 = vlaneseq
        %v1894 = vshrl.u32 %v1893, 7
        %v1895 = vsub.s32 3, %v1894
        %v1896 = vrot.slane %v1879, %v1895
        %v1897 = vlaneseq
        %v1898 = vshrl.u32 %v1897, 7
        %v1899 = vsub.s32 4, %v1898
        %v1900 = vrot.slane %v1879, %v1899
        %v1901 = vlaneseq
        %v1902 = vshrl.u32 %v1901, 7
        %v1903 = vsub.s32 5, %v1902
        %v1904 = vrot.slane %v1879, %v1903
        %v1905 = vlaneseq
        %v1906 = vshrl.u32 %v1905, 7
        %v1907 = vsub.s32 6, %v1906
        %v1908 = vrot.slane %v1879, %v1907
        %v1909 = vlaneseq
        %v1910 = vshrl.u32 %v1909, 7
        %v1911 = vsub.s32 7, %v1910
        %v1912 = vrot.slane %v1879, %v1911
        %v1921 = vadd.f32 %v1847, %v1884
        %v1922 = vadd.f32 %v1848, %v1888
        %v1923 = vadd.f32 %v1849, %v1892
        %v1924 = vadd.f32 %v1850, %v1896
        %v1925 = vadd.f32 %v1851, %v1900
        %v1926 = vadd.f32 %v1852, %v1904
        %v1927 = vadd.f32 %v1853, %v1908
        %v1928 = vadd.f32 %v1854, %v1912
        %v1929 = vadd.f32 %v1855, %v1884
        %v1930 = vadd.f32 %v1856, %v1888
        %v1931 = vadd.f32 %v1857, %v1892
        %v1932 = vadd.f32 %v1858, %v1896
        %v1933 = vadd.f32 %v1859, %v1900
        %v1934 = vadd.f32 %v1860, %v1904
        %v1935 = vadd.f32 %v1861, %v1908
        %v1936 = vadd.f32 %v1862, %v1912
        %v1937 = vadd.f32 %v1863, %v1884
        %v1938 = vadd.f32 %v1864, %v1888
        %v1939 = vadd.f32 %v1865, %v1892
        %v1940 = vadd.f32 %v1866, %v1896
        %v1941 = vadd.f32 %v1867, %v1900
        %v1942 = vadd.f32 %v1868, %v1904
        %v1943 = vadd.f32 %v1869, %v1908
        %v1944 = vadd.f32 %v1870, %v1912
        %v1945 = vadd.f32 %v1871, %v1884
        %v1946 = vadd.f32 %v1872, %v1888
        %v1947 = vadd.f32 %v1873, %v1892
        %v1948 = vadd.f32 %v1874, %v1896
        %v1949 = vadd.f32 %v1875, %v1900
        %v1950 = vadd.f32 %v1876, %v1904
        %v1951 = vadd.f32 %v1877, %v1908
        %v1952 = vadd.f32 %v1878, %v1912
        %v1953 = vmax.f32 %v1921, 0.0
        %v1954 = vmax.f32 %v1922, 0.0
        %v1955 = vmax.f32 %v1923, 0.0
        %v1956 = vmax.f32 %v1924, 0.0
        %v1957 = vmax.f32 %v1925, 0.0
        %v1958 = vmax.f32 %v1926, 0.0
        %v1959 = vmax.f32 %v1927, 0.0
        %v1960 = vmax.f32 %v1928, 0.0
        %v1961 = vmax.f32 %v1929, 0.0
        %v1962 = vmax.f32 %v1930, 0.0
        %v1963 = vmax.f32 %v1931, 0.0
        %v1964 = vmax.f32 %v1932, 0.0
        %v1965 = vmax.f32 %v1933, 0.0
        %v1966 = vmax.f32 %v1934, 0.0
        %v1967 = vmax.f32 %v1935, 0.0
        %v1968 = vmax.f32 %v1936, 0.0
        %v1969 = vmax.f32 %v1937, 0.0
        %v1970 = vmax.f32 %v1938, 0.0
        %v1971 = vmax.f32 %v1939, 0.0
        %v1972 = vmax.f32 %v1940, 0.0
        %v1973 = vmax.f32 %v1941, 0.0
        %v1974 = vmax.f32 %v1942, 0.0
        %v1975 = vmax.f32 %v1943, 0.0
        %v1976 = vmax.f32 %v1944, 0.0
        %v1977 = vmax.f32 %v1945, 0.0
        %v1978 = vmax.f32 %v1946, 0.0
        %v1979 = vmax.f32 %v1947, 0.0
        %v1980 = vmax.f32 %v1948, 0.0
        %v1981 = vmax.f32 %v1949, 0.0
        %v1982 = vmax.f32 %v1950, 0.0
        %v1983 = vmax.f32 %v1951, 0.0
        %v1984 = vmax.f32 %v1952, 0.0
        %v1993 = vrot.slane %v1953, 1
        %v1994 = vrot.slane %v1954, 1
        %v1995 = vrot.slane %v1955, 1
        %v1996 = vrot.slane %v1956, 1
        %v1997 = vrot.slane %v1957, 1
        %v1998 = vrot.slane %v1958, 1
        %v1999 = vrot.slane %v1959, 1
        %v2000 = vrot.slane %v1960, 1
        %v2009 = vmax.f32 %v1953, %v1993
        %v2010 = vmax.f32 %v1954, %v1994
        %v2011 = vmax.f32 %v1955, %v1995
        %v2012 = vmax.f32 %v1956, %v1996
        %v2013 = vmax.f32 %v1957, %v1997
        %v2014 = vmax.f32 %v1958, %v1998
        %v2015 = vmax.f32 %v1959, %v1999
        %v2016 = vmax.f32 %v1960, %v2000
        %v2025 = vrot.slane %v1961, 1
        %v2026 = vrot.slane %v1962, 1
        %v2027 = vrot.slane %v1963, 1
        %v2028 = vrot.slane %v1964, 1
        %v2029 = vrot.slane %v1965, 1
        %v2030 = vrot.slane %v1966, 1
        %v2031 = vrot.slane %v1967, 1
        %v2032 = vrot.slane %v1968, 1
        %v2041 = vmax.f32 %v1961, %v2025
        %v2042 = vmax.f32 %v1962, %v2026
        %v2043 = vmax.f32 %v1963, %v2027
        %v2044 = vmax.f32 %v1964, %v2028
        %v2045 = vmax.f32 %v1965, %v2029
        %v2046 = vmax.f32 %v1966, %v2030
        %v2047 = vmax.f32 %v1967, %v2031
        %v2048 = vmax.f32 %v1968, %v2032
        %v2057 = vrot.slane %v1969, 1
        %v2058 = vrot.slane %v1970, 1
        %v2059 = vrot.slane %v1971, 1
        %v2060 = vrot.slane %v1972, 1
        %v2061 = vrot.slane %v1973, 1
        %v2062 = vrot.slane %v1974, 1
        %v2063 = vrot.slane %v1975, 1
        %v2064 = vrot.slane %v1976, 1
        %v2073 = vmax.f32 %v1969, %v2057
        %v2074 = vmax.f32 %v1970, %v2058
        %v2075 = vmax.f32 %v1971, %v2059
        %v2076 = vmax.f32 %v1972, %v2060
        %v2077 = vmax.f32 %v1973, %v2061
        %v2078 = vmax.f32 %v1974, %v2062
        %v2079 = vmax.f32 %v1975, %v2063
        %v2080 = vmax.f32 %v1976, %v2064
        %v2089 = vrot.slane %v1977, 1
        %v2090 = vrot.slane %v1978, 1
        %v2091 = vrot.slane %v1979, 1
        %v2092 = vrot.slane %v1980, 1
        %v2093 = vrot.slane %v1981, 1
        %v2094 = vrot.slane %v1982, 1
        %v2095 = vrot.slane %v1983, 1
        %v2096 = vrot.slane %v1984, 1
        %v2105 = vmax.f32 %v1977, %v2089
        %v2106 = vmax.f32 %v1978, %v2090
        %v2107 = vmax.f32 %v1979, %v2091
        %v2108 = vmax.f32 %v1980, %v2092
        %v2109 = vmax.f32 %v1981, %v2093
        %v2110 = vmax.f32 %v1982, %v2094
        %v2111 = vmax.f32 %v1983, %v2095
        %v2112 = vmax.f32 %v1984, %v2096
        %v2121 = vrot.slane %v2009, 1
        %v2122 = vrot.slane %v2010, 1
        %v2123 = vrot.slane %v2011, 1
        %v2124 = vrot.slane %v2012, 1
        %v2125 = vrot.slane %v2013, 1
        %v2126 = vrot.slane %v2014, 1
        %v2127 = vrot.slane %v2015, 1
        %v2128 = vrot.slane %v2016, 1
        %v2137 = vrot.slane %v2009, 2
        %v2138 = vrot.slane %v2010, 2
        %v2139 = vrot.slane %v2011, 2
        %v2140 = vrot.slane %v2012, 2
        %v2141 = vrot.slane %v2013, 2
        %v2142 = vrot.slane %v2014, 2
        %v2143 = vrot.slane %v2015, 2
        %v2144 = vrot.slane %v2016, 2
        %v2153 = vrot.slane %v2009, 3
        %v2154 = vrot.slane %v2010, 3
        %v2155 = vrot.slane %v2011, 3
        %v2156 = vrot.slane %v2012, 3
        %v2157 = vrot.slane %v2013, 3
        %v2158 = vrot.slane %v2014, 3
        %v2159 = vrot.slane %v2015, 3
        %v2160 = vrot.slane %v2016, 3
        %v2177 = vrot.slane %v2041, 4
        %v2178 = vrot.slane %v2042, 4
        %v2179 = vrot.slane %v2043, 4
        %v2180 = vrot.slane %v2044, 4
        %v2181 = vrot.slane %v2045, 4
        %v2182 = vrot.slane %v2046, 4
        %v2183 = vrot.slane %v2047, 4
        %v2184 = vrot.slane %v2048, 4
        %v2193 = vrot.slane %v2041, 5
        %v2194 = vrot.slane %v2042, 5
        %v2195 = vrot.slane %v2043, 5
        %v2196 = vrot.slane %v2044, 5
        %v2197 = vrot.slane %v2045, 5
        %v2198 = vrot.slane %v2046, 5
        %v2199 = vrot.slane %v2047, 5
        %v2200 = vrot.slane %v2048, 5
        %v2209 = vrot.slane %v2041, 6
        %v2210 = vrot.slane %v2042, 6
        %v2211 = vrot.slane %v2043, 6
        %v2212 = vrot.slane %v2044, 6
        %v2213 = vrot.slane %v2045, 6
        %v2214 = vrot.slane %v2046, 6
        %v2215 = vrot.slane %v2047, 6
        %v2216 = vrot.slane %v2048, 6
        %v2225 = vrot.slane %v2041, 7
        %v2226 = vrot.slane %v2042, 7
        %v2227 = vrot.slane %v2043, 7
        %v2228 = vrot.slane %v2044, 7
        %v2229 = vrot.slane %v2045, 7
        %v2230 = vrot.slane %v2046, 7
        %v2231 = vrot.slane %v2047, 7
        %v2232 = vrot.slane %v2048, 7
        %v2249 = vrot.slane %v2073, 1
        %v2250 = vrot.slane %v2074, 1
        %v2251 = vrot.slane %v2075, 1
        %v2252 = vrot.slane %v2076, 1
        %v2253 = vrot.slane %v2077, 1
        %v2254 = vrot.slane %v2078, 1
        %v2255 = vrot.slane %v2079, 1
        %v2256 = vrot.slane %v2080, 1
        %v2265 = vrot.slane %v2073, 2
        %v2266 = vrot.slane %v2074, 2
        %v2267 = vrot.slane %v2075, 2
        %v2268 = vrot.slane %v2076, 2
        %v2269 = vrot.slane %v2077, 2
        %v2270 = vrot.slane %v2078, 2
        %v2271 = vrot.slane %v2079, 2
        %v2272 = vrot.slane %v2080, 2
        %v2281 = vrot.slane %v2073, 3
        %v2282 = vrot.slane %v2074, 3
        %v2283 = vrot.slane %v2075, 3
        %v2284 = vrot.slane %v2076, 3
        %v2285 = vrot.slane %v2077, 3
        %v2286 = vrot.slane %v2078, 3
        %v2287 = vrot.slane %v2079, 3
        %v2288 = vrot.slane %v2080, 3
        %v2305 = vrot.slane %v2105, 4
        %v2306 = vrot.slane %v2106, 4
        %v2307 = vrot.slane %v2107, 4
        %v2308 = vrot.slane %v2108, 4
        %v2309 = vrot.slane %v2109, 4
        %v2310 = vrot.slane %v2110, 4
        %v2311 = vrot.slane %v2111, 4
        %v2312 = vrot.slane %v2112, 4
        %v2321 = vrot.slane %v2105, 5
        %v2322 = vrot.slane %v2106, 5
        %v2323 = vrot.slane %v2107, 5
        %v2324 = vrot.slane %v2108, 5
        %v2325 = vrot.slane %v2109, 5
        %v2326 = vrot.slane %v2110, 5
        %v2327 = vrot.slane %v2111, 5
        %v2328 = vrot.slane %v2112, 5
        %v2337 = vrot.slane %v2105, 6
        %v2338 = vrot.slane %v2106, 6
        %v2339 = vrot.slane %v2107, 6
        %v2340 = vrot.slane %v2108, 6
        %v2341 = vrot.slane %v2109, 6
        %v2342 = vrot.slane %v2110, 6
        %v2343 = vrot.slane %v2111, 6
        %v2344 = vrot.slane %v2112, 6
        %v2353 = vrot.slane %v2105, 7
        %v2354 = vrot.slane %v2106, 7
        %v2355 = vrot.slane %v2107, 7
        %v2356 = vrot.slane %v2108, 7
        %v2357 = vrot.slane %v2109, 7
        %v2358 = vrot.slane %v2110, 7
        %v2359 = vrot.slane %v2111, 7
        %v2360 = vrot.slane %v2112, 7
        %vm2369 = vcmask 1040384
        %v2370 = vsel %vm2369, %v2009, %v2121
        %v2371 = vsel %vm2369, %v2010, %v2122
        %v2372 = vsel %vm2369, %v2011, %v2123
        %v2373 = vsel %vm2369, %v2012, %v2124
        %v2374 = vsel %vm2369, %v2013, %v2125
        %v2375 = vsel %vm2369, %v2014, %v2126
        %v2376 = vsel %vm2369, %v2015, %v2127
        %v2377 = vsel %vm2369, %v2016, %v2128
        %vm2378 = vcmask 1041408
        %v2379 = vsel %vm2378, %v2370, %v2137
        %v2380 = vsel %vm2378, %v2371, %v2138
        %v2381 = vsel %vm2378, %v2372, %v2139
        %v2382 = vsel %vm2378, %v2373, %v2140
        %v2383 = vsel %vm2378, %v2374, %v2141
        %v2384 = vsel %vm2378, %v2375, %v2142
        %v2385 = vsel %vm2378, %v2376, %v2143
        %v2386 = vsel %vm2378, %v2377, %v2144
        %vm2387 = vcmask 1042432
        %v2388 = vsel %vm2387, %v2379, %v2153
        %v2389 = vsel %vm2387, %v2380, %v2154
        %v2390 = vsel %vm2387, %v2381, %v2155
        %v2391 = vsel %vm2387, %v2382, %v2156
        %v2392 = vsel %vm2387, %v2383, %v2157
        %v2393 = vsel %vm2387, %v2384, %v2158
        %v2394 = vsel %vm2387, %v2385, %v2159
        %v2395 = vsel %vm2387, %v2386, %v2160
        %v2396 = vsel %vm456, %v2388, %v2177
        %v2397 = vsel %vm456, %v2389, %v2178
        %v2398 = vsel %vm456, %v2390, %v2179
        %v2399 = vsel %vm456, %v2391, %v2180
        %v2400 = vsel %vm456, %v2392, %v2181
        %v2401 = vsel %vm456, %v2393, %v2182
        %v2402 = vsel %vm456, %v2394, %v2183
        %v2403 = vsel %vm456, %v2395, %v2184
        %vm2404 = vcmask 1044480
        %v2405 = vsel %vm2404, %v2396, %v2193
        %v2406 = vsel %vm2404, %v2397, %v2194
        %v2407 = vsel %vm2404, %v2398, %v2195
        %v2408 = vsel %vm2404, %v2399, %v2196
        %v2409 = vsel %vm2404, %v2400, %v2197
        %v2410 = vsel %vm2404, %v2401, %v2198
        %v2411 = vsel %vm2404, %v2402, %v2199
        %v2412 = vsel %vm2404, %v2403, %v2200
        %vm2413 = vcmask 1045504
        %v2414 = vsel %vm2413, %v2405, %v2209
        %v2415 = vsel %vm2413, %v2406, %v2210
        %v2416 = vsel %vm2413, %v2407, %v2211
        %v2417 = vsel %vm2413, %v2408, %v2212
        %v2418 = vsel %vm2413, %v2409, %v2213
        %v2419 = vsel %vm2413, %v2410, %v2214
        %v2420 = vsel %vm2413, %v2411, %v2215
        %v2421 = vsel %vm2413, %v2412, %v2216
        %vm2422 = vcmask 1046528
        %v2423 = vsel %vm2422, %v2414, %v2225
        %v2424 = vsel %vm2422, %v2415, %v2226
        %v2425 = vsel %vm2422, %v2416, %v2227
        %v2426 = vsel %vm2422, %v2417, %v2228
        %v2427 = vsel %vm2422, %v2418, %v2229
        %v2428 = vsel %vm2422, %v2419, %v2230
        %v2429 = vsel %vm2422, %v2420, %v2231
        %v2430 = vsel %vm2422, %v2421, %v2232
        %v2431 = vsel %vm2369, %v2073, %v2249
        %v2432 = vsel %vm2369, %v2074, %v2250
        %v2433 = vsel %vm2369, %v2075, %v2251
        %v2434 = vsel %vm2369, %v2076, %v2252
        %v2435 = vsel %vm2369, %v2077, %v2253
        %v2436 = vsel %vm2369, %v2078, %v2254
        %v2437 = vsel %vm2369, %v2079, %v2255
        %v2438 = vsel %vm2369, %v2080, %v2256
        %v2439 = vsel %vm2378, %v2431, %v2265
        %v2440 = vsel %vm2378, %v2432, %v2266
        %v2441 = vsel %vm2378, %v2433, %v2267
        %v2442 = vsel %vm2378, %v2434, %v2268
        %v2443 = vsel %vm2378, %v2435, %v2269
        %v2444 = vsel %vm2378, %v2436, %v2270
        %v2445 = vsel %vm2378, %v2437, %v2271
        %v2446 = vsel %vm2378, %v2438, %v2272
        %v2447 = vsel %vm2387, %v2439, %v2281
        %v2448 = vsel %vm2387, %v2440, %v2282
        %v2449 = vsel %vm2387, %v2441, %v2283
        %v2450 = vsel %vm2387, %v2442, %v2284
        %v2451 = vsel %vm2387, %v2443, %v2285
        %v2452 = vsel %vm2387, %v2444, %v2286
        %v2453 = vsel %vm2387, %v2445, %v2287
        %v2454 = vsel %vm2387, %v2446, %v2288
        %v2455 = vsel %vm456, %v2447, %v2305
        %v2456 = vsel %vm456, %v2448, %v2306
        %v2457 = vsel %vm456, %v2449, %v2307
        %v2458 = vsel %vm456, %v2450, %v2308
        %v2459 = vsel %vm456, %v2451, %v2309
        %v2460 = vsel %vm456, %v2452, %v2310
        %v2461 = vsel %vm456, %v2453, %v2311
        %v2462 = vsel %vm456, %v2454, %v2312
        %v2463 = vsel %vm2404, %v2455, %v2321
        %v2464 = vsel %vm2404, %v2456, %v2322
        %v2465 = vsel %vm2404, %v2457, %v2323
        %v2466 = vsel %vm2404, %v2458, %v2324
        %v2467 = vsel %vm2404, %v2459, %v2325
        %v2468 = vsel %vm2404, %v2460, %v2326
        %v2469 = vsel %vm2404, %v2461, %v2327
        %v2470 = vsel %vm2404, %v2462, %v2328
        %v2471 = vsel %vm2413, %v2463, %v2337
        %v2472 = vsel %vm2413, %v2464, %v2338
        %v2473 = vsel %vm2413, %v2465, %v2339
        %v2474 = vsel %vm2413, %v2466, %v2340
        %v2475 = vsel %vm2413, %v2467, %v2341
        %v2476 = vsel %vm2413, %v2468, %v2342
        %v2477 = vsel %vm2413, %v2469, %v2343
        %v2478 = vsel %vm2413, %v2470, %v2344
        %v2479 = vsel %vm2422, %v2471, %v2353
        %v2480 = vsel %vm2422, %v2472, %v2354
        %v2481 = vsel %vm2422, %v2473, %v2355
        %v2482 = vsel %vm2422, %v2474, %v2356
        %v2483 = vsel %vm2422, %v2475, %v2357
        %v2484 = vsel %vm2422, %v2476, %v2358
        %v2485 = vsel %vm2422, %v2477, %v2359
        %v2486 = vsel %vm2422, %v2478, %v2360
        %v2487 = vpack.c.bf16 %v2479, %v2423
        %v2488 = vpack.c.bf16 %v2480, %v2424
        %v2489 = vpack.c.bf16 %v2481, %v2425
        %v2490 = vpack.c.bf16 %v2482, %v2426
        %v2491 = vpack.c.bf16 %v2483, %v2427
        %v2492 = vpack.c.bf16 %v2484, %v2428
        %v2493 = vpack.c.bf16 %v2485, %v2429
        %v2494 = vpack.c.bf16 %v2486, %v2430
        %v2495 = vld [vmem:[#allocation4] sm:$0xff]
        %v2496 = vld [vmem:[#allocation4 + $0x8] sm:$0xff]
        %v2497 = vld [vmem:[#allocation4 + $0x10] sm:$0xff]
        %v2498 = vld [vmem:[#allocation4 + $0x18] sm:$0xff]
        %v2499 = vld [vmem:[#allocation4 + $0x20] sm:$0xff]
        %v2500 = vld [vmem:[#allocation4 + $0x28] sm:$0xff]
        %v2501 = vld [vmem:[#allocation4 + $0x30] sm:$0xff]
        %v2502 = vld [vmem:[#allocation4 + $0x38] sm:$0xff]
        %v2503 = vld [vmem:[#allocation4 + $0x40] sm:$0xff]
        %v2504 = vld [vmem:[#allocation4 + $0x48] sm:$0xff]
        %v2505 = vld [vmem:[#allocation4 + $0x50] sm:$0xff]
        %v2506 = vld [vmem:[#allocation4 + $0x58] sm:$0xff]
        %v2507 = vld [vmem:[#allocation4 + $0x60] sm:$0xff]
        %v2508 = vld [vmem:[#allocation4 + $0x68] sm:$0xff]
        %v2509 = vld [vmem:[#allocation4 + $0x70] sm:$0xff]
        %v2510 = vld [vmem:[#allocation4 + $0x78] sm:$0xff]
        %v2511 = vld [vmem:[#allocation4 + $0x80] sm:$0xff]
        %v2512 = vld [vmem:[#allocation4 + $0x88] sm:$0xff]
        %v2513 = vld [vmem:[#allocation4 + $0x90] sm:$0xff]
        %v2514 = vld [vmem:[#allocation4 + $0x98] sm:$0xff]
        %v2515 = vld [vmem:[#allocation4 + $0xa0] sm:$0xff]
        %v2516 = vld [vmem:[#allocation4 + $0xa8] sm:$0xff]
        %v2517 = vld [vmem:[#allocation4 + $0xb0] sm:$0xff]
        %v2518 = vld [vmem:[#allocation4 + $0xb8] sm:$0xff]
        %v2519 = vld [vmem:[#allocation4 + $0xc0] sm:$0xff]
        %v2520 = vld [vmem:[#allocation4 + $0xc8] sm:$0xff]
        %v2521 = vld [vmem:[#allocation4 + $0xd0] sm:$0xff]
        %v2522 = vld [vmem:[#allocation4 + $0xd8] sm:$0xff]
        %v2523 = vld [vmem:[#allocation4 + $0xe0] sm:$0xff]
        %v2524 = vld [vmem:[#allocation4 + $0xe8] sm:$0xff]
        %v2525 = vld [vmem:[#allocation4 + $0xf0] sm:$0xff]
        %v2526 = vld [vmem:[#allocation4 + $0xf8] sm:$0xff]
        %v2527 = vld [vmem:[#allocation4 + $0x100] sm:$0xff]
        %v2528 = vld [vmem:[#allocation4 + $0x108] sm:$0xff]
        %v2529 = vld [vmem:[#allocation4 + $0x110] sm:$0xff]
        %v2530 = vld [vmem:[#allocation4 + $0x118] sm:$0xff]
        %v2531 = vld [vmem:[#allocation4 + $0x120] sm:$0xff]
        %v2532 = vld [vmem:[#allocation4 + $0x128] sm:$0xff]
        %v2533 = vld [vmem:[#allocation4 + $0x130] sm:$0xff]
        %v2534 = vld [vmem:[#allocation4 + $0x138] sm:$0xff]
        %v2535 = vld [vmem:[#allocation4 + $0x140] sm:$0xff]
        %v2536 = vld [vmem:[#allocation4 + $0x148] sm:$0xff]
        %v2537 = vld [vmem:[#allocation4 + $0x150] sm:$0xff]
        %v2538 = vld [vmem:[#allocation4 + $0x158] sm:$0xff]
        %v2539 = vld [vmem:[#allocation4 + $0x160] sm:$0xff]
        %v2540 = vld [vmem:[#allocation4 + $0x168] sm:$0xff]
        %v2541 = vld [vmem:[#allocation4 + $0x170] sm:$0xff]
        %v2542 = vld [vmem:[#allocation4 + $0x178] sm:$0xff]
        %v2543 = vld [vmem:[#allocation4 + $0x180] sm:$0xff]
        %v2544 = vld [vmem:[#allocation4 + $0x188] sm:$0xff]
        %v2545 = vld [vmem:[#allocation4 + $0x190] sm:$0xff]
        %v2546 = vld [vmem:[#allocation4 + $0x198] sm:$0xff]
        %v2547 = vld [vmem:[#allocation4 + $0x1a0] sm:$0xff]
        %v2548 = vld [vmem:[#allocation4 + $0x1a8] sm:$0xff]
        %v2549 = vld [vmem:[#allocation4 + $0x1b0] sm:$0xff]
        %v2550 = vld [vmem:[#allocation4 + $0x1b8] sm:$0xff]
        %v2551 = vld [vmem:[#allocation4 + $0x1c0] sm:$0xff]
        %v2552 = vld [vmem:[#allocation4 + $0x1c8] sm:$0xff]
        %v2553 = vld [vmem:[#allocation4 + $0x1d0] sm:$0xff]
        %v2554 = vld [vmem:[#allocation4 + $0x1d8] sm:$0xff]
        %v2555 = vld [vmem:[#allocation4 + $0x1e0] sm:$0xff]
        %v2556 = vld [vmem:[#allocation4 + $0x1e8] sm:$0xff]
        %v2557 = vld [vmem:[#allocation4 + $0x1f0] sm:$0xff]
        %v2558 = vld [vmem:[#allocation4 + $0x1f8] sm:$0xff]
        %v2559 = vld [vmem:[#allocation4 + $0x200] sm:$0xff]
        %v2560 = vld [vmem:[#allocation4 + $0x208] sm:$0xff]
        %v2561 = vld [vmem:[#allocation4 + $0x210] sm:$0xff]
        %v2562 = vld [vmem:[#allocation4 + $0x218] sm:$0xff]
        %v2563 = vld [vmem:[#allocation4 + $0x220] sm:$0xff]
        %v2564 = vld [vmem:[#allocation4 + $0x228] sm:$0xff]
        %v2565 = vld [vmem:[#allocation4 + $0x230] sm:$0xff]
        %v2566 = vld [vmem:[#allocation4 + $0x238] sm:$0xff]
        %v2567 = vld [vmem:[#allocation4 + $0x240] sm:$0xff]
        %v2568 = vld [vmem:[#allocation4 + $0x248] sm:$0xff]
        %v2569 = vld [vmem:[#allocation4 + $0x250] sm:$0xff]
        %v2570 = vld [vmem:[#allocation4 + $0x258] sm:$0xff]
        %v2571 = vld [vmem:[#allocation4 + $0x260] sm:$0xff]
        %v2572 = vld [vmem:[#allocation4 + $0x268] sm:$0xff]
        %v2573 = vld [vmem:[#allocation4 + $0x270] sm:$0xff]
        %v2574 = vld [vmem:[#allocation4 + $0x278] sm:$0xff]
        %v2575 = vld [vmem:[#allocation4 + $0x280] sm:$0xff]
        %v2576 = vld [vmem:[#allocation4 + $0x288] sm:$0xff]
        %v2577 = vld [vmem:[#allocation4 + $0x290] sm:$0xff]
        %v2578 = vld [vmem:[#allocation4 + $0x298] sm:$0xff]
        %v2579 = vld [vmem:[#allocation4 + $0x2a0] sm:$0xff]
        %v2580 = vld [vmem:[#allocation4 + $0x2a8] sm:$0xff]
        %v2581 = vld [vmem:[#allocation4 + $0x2b0] sm:$0xff]
        %v2582 = vld [vmem:[#allocation4 + $0x2b8] sm:$0xff]
        %v2583 = vld [vmem:[#allocation4 + $0x2c0] sm:$0xff]
        %v2584 = vld [vmem:[#allocation4 + $0x2c8] sm:$0xff]
        %v2585 = vld [vmem:[#allocation4 + $0x2d0] sm:$0xff]
        %v2586 = vld [vmem:[#allocation4 + $0x2d8] sm:$0xff]
        %v2587 = vld [vmem:[#allocation4 + $0x2e0] sm:$0xff]
        %v2588 = vld [vmem:[#allocation4 + $0x2e8] sm:$0xff]
        %v2589 = vld [vmem:[#allocation4 + $0x2f0] sm:$0xff]
        %v2590 = vld [vmem:[#allocation4 + $0x2f8] sm:$0xff]
        %v2591 = vld [vmem:[#allocation4 + $0x300] sm:$0xff]
        %v2592 = vld [vmem:[#allocation4 + $0x308] sm:$0xff]
        %v2593 = vld [vmem:[#allocation4 + $0x310] sm:$0xff]
        %v2594 = vld [vmem:[#allocation4 + $0x318] sm:$0xff]
        %v2595 = vld [vmem:[#allocation4 + $0x320] sm:$0xff]
        %v2596 = vld [vmem:[#allocation4 + $0x328] sm:$0xff]
        %v2597 = vld [vmem:[#allocation4 + $0x330] sm:$0xff]
        %v2598 = vld [vmem:[#allocation4 + $0x338] sm:$0xff]
        %v2599 = vld [vmem:[#allocation4 + $0x340] sm:$0xff]
        %v2600 = vld [vmem:[#allocation4 + $0x348] sm:$0xff]
        %v2601 = vld [vmem:[#allocation4 + $0x350] sm:$0xff]
        %v2602 = vld [vmem:[#allocation4 + $0x358] sm:$0xff]
        %v2603 = vld [vmem:[#allocation4 + $0x360] sm:$0xff]
        %v2604 = vld [vmem:[#allocation4 + $0x368] sm:$0xff]
        %v2605 = vld [vmem:[#allocation4 + $0x370] sm:$0xff]
        %v2606 = vld [vmem:[#allocation4 + $0x378] sm:$0xff]
        %v2607 = vld [vmem:[#allocation4 + $0x380] sm:$0xff]
        %v2608 = vld [vmem:[#allocation4 + $0x388] sm:$0xff]
        %v2609 = vld [vmem:[#allocation4 + $0x390] sm:$0xff]
        %v2610 = vld [vmem:[#allocation4 + $0x398] sm:$0xff]
        %v2611 = vld [vmem:[#allocation4 + $0x3a0] sm:$0xff]
        %v2612 = vld [vmem:[#allocation4 + $0x3a8] sm:$0xff]
        %v2613 = vld [vmem:[#allocation4 + $0x3b0] sm:$0xff]
        %v2614 = vld [vmem:[#allocation4 + $0x3b8] sm:$0xff]
        %v2615 = vld [vmem:[#allocation4 + $0x3c0] sm:$0xff]
        %v2616 = vld [vmem:[#allocation4 + $0x3c8] sm:$0xff]
        %v2617 = vld [vmem:[#allocation4 + $0x3d0] sm:$0xff]
        %v2618 = vld [vmem:[#allocation4 + $0x3d8] sm:$0xff]
        %v2619 = vld [vmem:[#allocation4 + $0x3e0] sm:$0xff]
        %v2620 = vld [vmem:[#allocation4 + $0x3e8] sm:$0xff]
        %v2621 = vld [vmem:[#allocation4 + $0x3f0] sm:$0xff]
        %v2622 = vld [vmem:[#allocation4 + $0x3f8] sm:$0xff]
        %v2623 = vld [vmem:[#allocation4 + $0x400] sm:$0xff]
        %v2624 = vld [vmem:[#allocation4 + $0x408] sm:$0xff]
        %v2625 = vld [vmem:[#allocation4 + $0x410] sm:$0xff]
        %v2626 = vld [vmem:[#allocation4 + $0x418] sm:$0xff]
        %v2627 = vld [vmem:[#allocation4 + $0x420] sm:$0xff]
        %v2628 = vld [vmem:[#allocation4 + $0x428] sm:$0xff]
        %v2629 = vld [vmem:[#allocation4 + $0x430] sm:$0xff]
        %v2630 = vld [vmem:[#allocation4 + $0x438] sm:$0xff]
        %v2631 = vld [vmem:[#allocation4 + $0x440] sm:$0xff]
        %v2632 = vld [vmem:[#allocation4 + $0x448] sm:$0xff]
        %v2633 = vld [vmem:[#allocation4 + $0x450] sm:$0xff]
        %v2634 = vld [vmem:[#allocation4 + $0x458] sm:$0xff]
        %v2635 = vld [vmem:[#allocation4 + $0x460] sm:$0xff]
        %v2636 = vld [vmem:[#allocation4 + $0x468] sm:$0xff]
        %v2637 = vld [vmem:[#allocation4 + $0x470] sm:$0xff]
        %v2638 = vld [vmem:[#allocation4 + $0x478] sm:$0xff]
        %v2639 = vld [vmem:[#allocation4 + $0x480] sm:$0xff]
        %v2640 = vld [vmem:[#allocation4 + $0x488] sm:$0xff]
        %v2641 = vld [vmem:[#allocation4 + $0x490] sm:$0xff]
        %v2642 = vld [vmem:[#allocation4 + $0x498] sm:$0xff]
        %v2643 = vld [vmem:[#allocation4 + $0x4a0] sm:$0xff]
        %v2644 = vld [vmem:[#allocation4 + $0x4a8] sm:$0xff]
        %v2645 = vld [vmem:[#allocation4 + $0x4b0] sm:$0xff]
        %v2646 = vld [vmem:[#allocation4 + $0x4b8] sm:$0xff]
        %v2647 = vld [vmem:[#allocation4 + $0x4c0] sm:$0xff]
        %v2648 = vld [vmem:[#allocation4 + $0x4c8] sm:$0xff]
        %v2649 = vld [vmem:[#allocation4 + $0x4d0] sm:$0xff]
        %v2650 = vld [vmem:[#allocation4 + $0x4d8] sm:$0xff]
        %v2651 = vld [vmem:[#allocation4 + $0x4e0] sm:$0xff]
        %v2652 = vld [vmem:[#allocation4 + $0x4e8] sm:$0xff]
        %v2653 = vld [vmem:[#allocation4 + $0x4f0] sm:$0xff]
        %v2654 = vld [vmem:[#allocation4 + $0x4f8] sm:$0xff]
        %v2655 = vld [vmem:[#allocation4 + $0x500] sm:$0xff]
        %v2656 = vld [vmem:[#allocation4 + $0x508] sm:$0xff]
        %v2657 = vld [vmem:[#allocation4 + $0x510] sm:$0xff]
        %v2658 = vld [vmem:[#allocation4 + $0x518] sm:$0xff]
        %v2659 = vld [vmem:[#allocation4 + $0x520] sm:$0xff]
        %v2660 = vld [vmem:[#allocation4 + $0x528] sm:$0xff]
        %v2661 = vld [vmem:[#allocation4 + $0x530] sm:$0xff]
        %v2662 = vld [vmem:[#allocation4 + $0x538] sm:$0xff]
        %v2663 = vld [vmem:[#allocation4 + $0x540] sm:$0xff]
        %v2664 = vld [vmem:[#allocation4 + $0x548] sm:$0xff]
        %v2665 = vld [vmem:[#allocation4 + $0x550] sm:$0xff]
        %v2666 = vld [vmem:[#allocation4 + $0x558] sm:$0xff]
        %v2667 = vld [vmem:[#allocation4 + $0x560] sm:$0xff]
        %v2668 = vld [vmem:[#allocation4 + $0x568] sm:$0xff]
        %v2669 = vld [vmem:[#allocation4 + $0x570] sm:$0xff]
        %v2670 = vld [vmem:[#allocation4 + $0x578] sm:$0xff]
        %v2671 = vld [vmem:[#allocation4 + $0x580] sm:$0xff]
        %v2672 = vld [vmem:[#allocation4 + $0x588] sm:$0xff]
        %v2673 = vld [vmem:[#allocation4 + $0x590] sm:$0xff]
        %v2674 = vld [vmem:[#allocation4 + $0x598] sm:$0xff]
        %v2675 = vld [vmem:[#allocation4 + $0x5a0] sm:$0xff]
        %v2676 = vld [vmem:[#allocation4 + $0x5a8] sm:$0xff]
        %v2677 = vld [vmem:[#allocation4 + $0x5b0] sm:$0xff]
        %v2678 = vld [vmem:[#allocation4 + $0x5b8] sm:$0xff]
        %v2679 = vld [vmem:[#allocation4 + $0x5c0] sm:$0xff]
        %v2680 = vld [vmem:[#allocation4 + $0x5c8] sm:$0xff]
        %v2681 = vld [vmem:[#allocation4 + $0x5d0] sm:$0xff]
        %v2682 = vld [vmem:[#allocation4 + $0x5d8] sm:$0xff]
        %v2683 = vld [vmem:[#allocation4 + $0x5e0] sm:$0xff]
        %v2684 = vld [vmem:[#allocation4 + $0x5e8] sm:$0xff]
        %v2685 = vld [vmem:[#allocation4 + $0x5f0] sm:$0xff]
        %v2686 = vld [vmem:[#allocation4 + $0x5f8] sm:$0xff]
        %v2687 = vld [vmem:[#allocation4 + $0x600] sm:$0xff]
        %v2688 = vld [vmem:[#allocation4 + $0x608] sm:$0xff]
        %v2689 = vld [vmem:[#allocation4 + $0x610] sm:$0xff]
        %v2690 = vld [vmem:[#allocation4 + $0x618] sm:$0xff]
        %v2691 = vld [vmem:[#allocation4 + $0x620] sm:$0xff]
        %v2692 = vld [vmem:[#allocation4 + $0x628] sm:$0xff]
        %v2693 = vld [vmem:[#allocation4 + $0x630] sm:$0xff]
        %v2694 = vld [vmem:[#allocation4 + $0x638] sm:$0xff]
        %v2695 = vld [vmem:[#allocation4 + $0x640] sm:$0xff]
        %v2696 = vld [vmem:[#allocation4 + $0x648] sm:$0xff]
        %v2697 = vld [vmem:[#allocation4 + $0x650] sm:$0xff]
        %v2698 = vld [vmem:[#allocation4 + $0x658] sm:$0xff]
        %v2699 = vld [vmem:[#allocation4 + $0x660] sm:$0xff]
        %v2700 = vld [vmem:[#allocation4 + $0x668] sm:$0xff]
        %v2701 = vld [vmem:[#allocation4 + $0x670] sm:$0xff]
        %v2702 = vld [vmem:[#allocation4 + $0x678] sm:$0xff]
        %v2703 = vld [vmem:[#allocation4 + $0x680] sm:$0xff]
        %v2704 = vld [vmem:[#allocation4 + $0x688] sm:$0xff]
        %v2705 = vld [vmem:[#allocation4 + $0x690] sm:$0xff]
        %v2706 = vld [vmem:[#allocation4 + $0x698] sm:$0xff]
        %v2707 = vld [vmem:[#allocation4 + $0x6a0] sm:$0xff]
        %v2708 = vld [vmem:[#allocation4 + $0x6a8] sm:$0xff]
        %v2709 = vld [vmem:[#allocation4 + $0x6b0] sm:$0xff]
        %v2710 = vld [vmem:[#allocation4 + $0x6b8] sm:$0xff]
        %v2711 = vld [vmem:[#allocation4 + $0x6c0] sm:$0xff]
        %v2712 = vld [vmem:[#allocation4 + $0x6c8] sm:$0xff]
        %v2713 = vld [vmem:[#allocation4 + $0x6d0] sm:$0xff]
        %v2714 = vld [vmem:[#allocation4 + $0x6d8] sm:$0xff]
        %v2715 = vld [vmem:[#allocation4 + $0x6e0] sm:$0xff]
        %v2716 = vld [vmem:[#allocation4 + $0x6e8] sm:$0xff]
        %v2717 = vld [vmem:[#allocation4 + $0x6f0] sm:$0xff]
        %v2718 = vld [vmem:[#allocation4 + $0x6f8] sm:$0xff]
        %v2719 = vld [vmem:[#allocation4 + $0x700] sm:$0xff]
        %v2720 = vld [vmem:[#allocation4 + $0x708] sm:$0xff]
        %v2721 = vld [vmem:[#allocation4 + $0x710] sm:$0xff]
        %v2722 = vld [vmem:[#allocation4 + $0x718] sm:$0xff]
        %v2723 = vld [vmem:[#allocation4 + $0x720] sm:$0xff]
        %v2724 = vld [vmem:[#allocation4 + $0x728] sm:$0xff]
        %v2725 = vld [vmem:[#allocation4 + $0x730] sm:$0xff]
        %v2726 = vld [vmem:[#allocation4 + $0x738] sm:$0xff]
        %v2727 = vld [vmem:[#allocation4 + $0x740] sm:$0xff]
        %v2728 = vld [vmem:[#allocation4 + $0x748] sm:$0xff]
        %v2729 = vld [vmem:[#allocation4 + $0x750] sm:$0xff]
        %v2730 = vld [vmem:[#allocation4 + $0x758] sm:$0xff]
        %v2731 = vld [vmem:[#allocation4 + $0x760] sm:$0xff]
        %v2732 = vld [vmem:[#allocation4 + $0x768] sm:$0xff]
        %v2733 = vld [vmem:[#allocation4 + $0x770] sm:$0xff]
        %v2734 = vld [vmem:[#allocation4 + $0x778] sm:$0xff]
        %v2735 = vld [vmem:[#allocation4 + $0x780] sm:$0xff]
        %v2736 = vld [vmem:[#allocation4 + $0x788] sm:$0xff]
        %v2737 = vld [vmem:[#allocation4 + $0x790] sm:$0xff]
        %v2738 = vld [vmem:[#allocation4 + $0x798] sm:$0xff]
        %v2739 = vld [vmem:[#allocation4 + $0x7a0] sm:$0xff]
        %v2740 = vld [vmem:[#allocation4 + $0x7a8] sm:$0xff]
        %v2741 = vld [vmem:[#allocation4 + $0x7b0] sm:$0xff]
        %v2742 = vld [vmem:[#allocation4 + $0x7b8] sm:$0xff]
        %v2743 = vld [vmem:[#allocation4 + $0x7c0] sm:$0xff]
        %v2744 = vld [vmem:[#allocation4 + $0x7c8] sm:$0xff]
        %v2745 = vld [vmem:[#allocation4 + $0x7d0] sm:$0xff]
        %v2746 = vld [vmem:[#allocation4 + $0x7d8] sm:$0xff]
        %v2747 = vld [vmem:[#allocation4 + $0x7e0] sm:$0xff]
        %v2748 = vld [vmem:[#allocation4 + $0x7e8] sm:$0xff]
        %v2749 = vld [vmem:[#allocation4 + $0x7f0] sm:$0xff]
        %v2750 = vld [vmem:[#allocation4 + $0x7f8] sm:$0xff]
        %v2751 = vld [vmem:[%s4] sm:$0xf]
        %v2753 = vlaneseq
        %v2754 = vshrl.u32 %v2753, 7
        %v2755 = vsub.s32 0, %v2754
        %v2756 = vrot.slane %v2751, %v2755
        %v2757 = vlaneseq
        %v2758 = vshrl.u32 %v2757, 7
        %v2759 = vsub.s32 1, %v2758
        %v2760 = vrot.slane %v2751, %v2759
        %v2761 = vlaneseq
        %v2762 = vshrl.u32 %v2761, 7
        %v2763 = vsub.s32 2, %v2762
        %v2764 = vrot.slane %v2751, %v2763
        %v2765 = vlaneseq
        %v2766 = vshrl.u32 %v2765, 7
        %v2767 = vsub.s32 3, %v2766
        %v2768 = vrot.slane %v2751, %v2767
        %v3029 = vunpack.c.l.b16 %v2495
        %v3030 = vunpack.c.h.b16 %v2495
        %v3031 = vunpack.c.l.b16 %v2496
        %v3032 = vunpack.c.h.b16 %v2496
        %v3033 = vunpack.c.l.b16 %v2497
        %v3034 = vunpack.c.h.b16 %v2497
        %v3035 = vunpack.c.l.b16 %v2498
        %v3036 = vunpack.c.h.b16 %v2498
        %v3037 = vunpack.c.l.b16 %v2499
        %v3038 = vunpack.c.h.b16 %v2499
        %v3039 = vunpack.c.l.b16 %v2500
        %v3040 = vunpack.c.h.b16 %v2500
        %v3041 = vunpack.c.l.b16 %v2501
        %v3042 = vunpack.c.h.b16 %v2501
        %v3043 = vunpack.c.l.b16 %v2502
        %v3044 = vunpack.c.h.b16 %v2502
        %v3045 = vunpack.c.l.b16 %v2503
        %v3046 = vunpack.c.h.b16 %v2503
        %v3047 = vunpack.c.l.b16 %v2504
        %v3048 = vunpack.c.h.b16 %v2504
        %v3049 = vunpack.c.l.b16 %v2505
        %v3050 = vunpack.c.h.b16 %v2505
        %v3051 = vunpack.c.l.b16 %v2506
        %v3052 = vunpack.c.h.b16 %v2506
        %v3053 = vunpack.c.l.b16 %v2507
        %v3054 = vunpack.c.h.b16 %v2507
        %v3055 = vunpack.c.l.b16 %v2508
        %v3056 = vunpack.c.h.b16 %v2508
        %v3057 = vunpack.c.l.b16 %v2509
        %v3058 = vunpack.c.h.b16 %v2509
        %v3059 = vunpack.c.l.b16 %v2510
        %v3060 = vunpack.c.h.b16 %v2510
        %v3061 = vunpack.c.l.b16 %v2511
        %v3062 = vunpack.c.h.b16 %v2511
        %v3063 = vunpack.c.l.b16 %v2512
        %v3064 = vunpack.c.h.b16 %v2512
        %v3065 = vunpack.c.l.b16 %v2513
        %v3066 = vunpack.c.h.b16 %v2513
        %v3067 = vunpack.c.l.b16 %v2514
        %v3068 = vunpack.c.h.b16 %v2514
        %v3069 = vunpack.c.l.b16 %v2515
        %v3070 = vunpack.c.h.b16 %v2515
        %v3071 = vunpack.c.l.b16 %v2516
        %v3072 = vunpack.c.h.b16 %v2516
        %v3073 = vunpack.c.l.b16 %v2517
        %v3074 = vunpack.c.h.b16 %v2517
        %v3075 = vunpack.c.l.b16 %v2518
        %v3076 = vunpack.c.h.b16 %v2518
        %v3077 = vunpack.c.l.b16 %v2519
        %v3078 = vunpack.c.h.b16 %v2519
        %v3079 = vunpack.c.l.b16 %v2520
        %v3080 = vunpack.c.h.b16 %v2520
        %v3081 = vunpack.c.l.b16 %v2521
        %v3082 = vunpack.c.h.b16 %v2521
        %v3083 = vunpack.c.l.b16 %v2522
        %v3084 = vunpack.c.h.b16 %v2522
        %v3085 = vunpack.c.l.b16 %v2523
        %v3086 = vunpack.c.h.b16 %v2523
        %v3087 = vunpack.c.l.b16 %v2524
        %v3088 = vunpack.c.h.b16 %v2524
        %v3089 = vunpack.c.l.b16 %v2525
        %v3090 = vunpack.c.h.b16 %v2525
        %v3091 = vunpack.c.l.b16 %v2526
        %v3092 = vunpack.c.h.b16 %v2526
        %v3093 = vunpack.c.l.b16 %v2527
        %v3094 = vunpack.c.h.b16 %v2527
        %v3095 = vunpack.c.l.b16 %v2528
        %v3096 = vunpack.c.h.b16 %v2528
        %v3097 = vunpack.c.l.b16 %v2529
        %v3098 = vunpack.c.h.b16 %v2529
        %v3099 = vunpack.c.l.b16 %v2530
        %v3100 = vunpack.c.h.b16 %v2530
        %v3101 = vunpack.c.l.b16 %v2531
        %v3102 = vunpack.c.h.b16 %v2531
        %v3103 = vunpack.c.l.b16 %v2532
        %v3104 = vunpack.c.h.b16 %v2532
        %v3105 = vunpack.c.l.b16 %v2533
        %v3106 = vunpack.c.h.b16 %v2533
        %v3107 = vunpack.c.l.b16 %v2534
        %v3108 = vunpack.c.h.b16 %v2534
        %v3109 = vunpack.c.l.b16 %v2535
        %v3110 = vunpack.c.h.b16 %v2535
        %v3111 = vunpack.c.l.b16 %v2536
        %v3112 = vunpack.c.h.b16 %v2536
        %v3113 = vunpack.c.l.b16 %v2537
        %v3114 = vunpack.c.h.b16 %v2537
        %v3115 = vunpack.c.l.b16 %v2538
        %v3116 = vunpack.c.h.b16 %v2538
        %v3117 = vunpack.c.l.b16 %v2539
        %v3118 = vunpack.c.h.b16 %v2539
        %v3119 = vunpack.c.l.b16 %v2540
        %v3120 = vunpack.c.h.b16 %v2540
        %v3121 = vunpack.c.l.b16 %v2541
        %v3122 = vunpack.c.h.b16 %v2541
        %v3123 = vunpack.c.l.b16 %v2542
        %v3124 = vunpack.c.h.b16 %v2542
        %v3125 = vunpack.c.l.b16 %v2543
        %v3126 = vunpack.c.h.b16 %v2543
        %v3127 = vunpack.c.l.b16 %v2544
        %v3128 = vunpack.c.h.b16 %v2544
        %v3129 = vunpack.c.l.b16 %v2545
        %v3130 = vunpack.c.h.b16 %v2545
        %v3131 = vunpack.c.l.b16 %v2546
        %v3132 = vunpack.c.h.b16 %v2546
        %v3133 = vunpack.c.l.b16 %v2547
        %v3134 = vunpack.c.h.b16 %v2547
        %v3135 = vunpack.c.l.b16 %v2548
        %v3136 = vunpack.c.h.b16 %v2548
        %v3137 = vunpack.c.l.b16 %v2549
        %v3138 = vunpack.c.h.b16 %v2549
        %v3139 = vunpack.c.l.b16 %v2550
        %v3140 = vunpack.c.h.b16 %v2550
        %v3141 = vunpack.c.l.b16 %v2551
        %v3142 = vunpack.c.h.b16 %v2551
        %v3143 = vunpack.c.l.b16 %v2552
        %v3144 = vunpack.c.h.b16 %v2552
        %v3145 = vunpack.c.l.b16 %v2553
        %v3146 = vunpack.c.h.b16 %v2553
        %v3147 = vunpack.c.l.b16 %v2554
        %v3148 = vunpack.c.h.b16 %v2554
        %v3149 = vunpack.c.l.b16 %v2555
        %v3150 = vunpack.c.h.b16 %v2555
        %v3151 = vunpack.c.l.b16 %v2556
        %v3152 = vunpack.c.h.b16 %v2556
        %v3153 = vunpack.c.l.b16 %v2557
        %v3154 = vunpack.c.h.b16 %v2557
        %v3155 = vunpack.c.l.b16 %v2558
        %v3156 = vunpack.c.h.b16 %v2558
        %v3157 = vunpack.c.l.b16 %v2559
        %v3158 = vunpack.c.h.b16 %v2559
        %v3159 = vunpack.c.l.b16 %v2560
        %v3160 = vunpack.c.h.b16 %v2560
        %v3161 = vunpack.c.l.b16 %v2561
        %v3162 = vunpack.c.h.b16 %v2561
        %v3163 = vunpack.c.l.b16 %v2562
        %v3164 = vunpack.c.h.b16 %v2562
        %v3165 = vunpack.c.l.b16 %v2563
        %v3166 = vunpack.c.h.b16 %v2563
        %v3167 = vunpack.c.l.b16 %v2564
        %v3168 = vunpack.c.h.b16 %v2564
        %v3169 = vunpack.c.l.b16 %v2565
        %v3170 = vunpack.c.h.b16 %v2565
        %v3171 = vunpack.c.l.b16 %v2566
        %v3172 = vunpack.c.h.b16 %v2566
        %v3173 = vunpack.c.l.b16 %v2567
        %v3174 = vunpack.c.h.b16 %v2567
        %v3175 = vunpack.c.l.b16 %v2568
        %v3176 = vunpack.c.h.b16 %v2568
        %v3177 = vunpack.c.l.b16 %v2569
        %v3178 = vunpack.c.h.b16 %v2569
        %v3179 = vunpack.c.l.b16 %v2570
        %v3180 = vunpack.c.h.b16 %v2570
        %v3181 = vunpack.c.l.b16 %v2571
        %v3182 = vunpack.c.h.b16 %v2571
        %v3183 = vunpack.c.l.b16 %v2572
        %v3184 = vunpack.c.h.b16 %v2572
        %v3185 = vunpack.c.l.b16 %v2573
        %v3186 = vunpack.c.h.b16 %v2573
        %v3187 = vunpack.c.l.b16 %v2574
        %v3188 = vunpack.c.h.b16 %v2574
        %v3189 = vunpack.c.l.b16 %v2575
        %v3190 = vunpack.c.h.b16 %v2575
        %v3191 = vunpack.c.l.b16 %v2576
        %v3192 = vunpack.c.h.b16 %v2576
        %v3193 = vunpack.c.l.b16 %v2577
        %v3194 = vunpack.c.h.b16 %v2577
        %v3195 = vunpack.c.l.b16 %v2578
        %v3196 = vunpack.c.h.b16 %v2578
        %v3197 = vunpack.c.l.b16 %v2579
        %v3198 = vunpack.c.h.b16 %v2579
        %v3199 = vunpack.c.l.b16 %v2580
        %v3200 = vunpack.c.h.b16 %v2580
        %v3201 = vunpack.c.l.b16 %v2581
        %v3202 = vunpack.c.h.b16 %v2581
        %v3203 = vunpack.c.l.b16 %v2582
        %v3204 = vunpack.c.h.b16 %v2582
        %v3205 = vunpack.c.l.b16 %v2583
        %v3206 = vunpack.c.h.b16 %v2583
        %v3207 = vunpack.c.l.b16 %v2584
        %v3208 = vunpack.c.h.b16 %v2584
        %v3209 = vunpack.c.l.b16 %v2585
        %v3210 = vunpack.c.h.b16 %v2585
        %v3211 = vunpack.c.l.b16 %v2586
        %v3212 = vunpack.c.h.b16 %v2586
        %v3213 = vunpack.c.l.b16 %v2587
        %v3214 = vunpack.c.h.b16 %v2587
        %v3215 = vunpack.c.l.b16 %v2588
        %v3216 = vunpack.c.h.b16 %v2588
        %v3217 = vunpack.c.l.b16 %v2589
        %v3218 = vunpack.c.h.b16 %v2589
        %v3219 = vunpack.c.l.b16 %v2590
        %v3220 = vunpack.c.h.b16 %v2590
        %v3221 = vunpack.c.l.b16 %v2591
        %v3222 = vunpack.c.h.b16 %v2591
        %v3223 = vunpack.c.l.b16 %v2592
        %v3224 = vunpack.c.h.b16 %v2592
        %v3225 = vunpack.c.l.b16 %v2593
        %v3226 = vunpack.c.h.b16 %v2593
        %v3227 = vunpack.c.l.b16 %v2594
        %v3228 = vunpack.c.h.b16 %v2594
        %v3229 = vunpack.c.l.b16 %v2595
        %v3230 = vunpack.c.h.b16 %v2595
        %v3231 = vunpack.c.l.b16 %v2596
        %v3232 = vunpack.c.h.b16 %v2596
        %v3233 = vunpack.c.l.b16 %v2597
        %v3234 = vunpack.c.h.b16 %v2597
        %v3235 = vunpack.c.l.b16 %v2598
        %v3236 = vunpack.c.h.b16 %v2598
        %v3237 = vunpack.c.l.b16 %v2599
        %v3238 = vunpack.c.h.b16 %v2599
        %v3239 = vunpack.c.l.b16 %v2600
        %v3240 = vunpack.c.h.b16 %v2600
        %v3241 = vunpack.c.l.b16 %v2601
        %v3242 = vunpack.c.h.b16 %v2601
        %v3243 = vunpack.c.l.b16 %v2602
        %v3244 = vunpack.c.h.b16 %v2602
        %v3245 = vunpack.c.l.b16 %v2603
        %v3246 = vunpack.c.h.b16 %v2603
        %v3247 = vunpack.c.l.b16 %v2604
        %v3248 = vunpack.c.h.b16 %v2604
        %v3249 = vunpack.c.l.b16 %v2605
        %v3250 = vunpack.c.h.b16 %v2605
        %v3251 = vunpack.c.l.b16 %v2606
        %v3252 = vunpack.c.h.b16 %v2606
        %v3253 = vunpack.c.l.b16 %v2607
        %v3254 = vunpack.c.h.b16 %v2607
        %v3255 = vunpack.c.l.b16 %v2608
        %v3256 = vunpack.c.h.b16 %v2608
        %v3257 = vunpack.c.l.b16 %v2609
        %v3258 = vunpack.c.h.b16 %v2609
        %v3259 = vunpack.c.l.b16 %v2610
        %v3260 = vunpack.c.h.b16 %v2610
        %v3261 = vunpack.c.l.b16 %v2611
        %v3262 = vunpack.c.h.b16 %v2611
        %v3263 = vunpack.c.l.b16 %v2612
        %v3264 = vunpack.c.h.b16 %v2612
        %v3265 = vunpack.c.l.b16 %v2613
        %v3266 = vunpack.c.h.b16 %v2613
        %v3267 = vunpack.c.l.b16 %v2614
        %v3268 = vunpack.c.h.b16 %v2614
        %v3269 = vunpack.c.l.b16 %v2615
        %v3270 = vunpack.c.h.b16 %v2615
        %v3271 = vunpack.c.l.b16 %v2616
        %v3272 = vunpack.c.h.b16 %v2616
        %v3273 = vunpack.c.l.b16 %v2617
        %v3274 = vunpack.c.h.b16 %v2617
        %v3275 = vunpack.c.l.b16 %v2618
        %v3276 = vunpack.c.h.b16 %v2618
        %v3277 = vunpack.c.l.b16 %v2619
        %v3278 = vunpack.c.h.b16 %v2619
        %v3279 = vunpack.c.l.b16 %v2620
        %v3280 = vunpack.c.h.b16 %v2620
        %v3281 = vunpack.c.l.b16 %v2621
        %v3282 = vunpack.c.h.b16 %v2621
        %v3283 = vunpack.c.l.b16 %v2622
        %v3284 = vunpack.c.h.b16 %v2622
        %v3285 = vunpack.c.l.b16 %v2623
        %v3286 = vunpack.c.h.b16 %v2623
        %v3287 = vunpack.c.l.b16 %v2624
        %v3288 = vunpack.c.h.b16 %v2624
        %v3289 = vunpack.c.l.b16 %v2625
        %v3290 = vunpack.c.h.b16 %v2625
        %v3291 = vunpack.c.l.b16 %v2626
        %v3292 = vunpack.c.h.b16 %v2626
        %v3293 = vunpack.c.l.b16 %v2627
        %v3294 = vunpack.c.h.b16 %v2627
        %v3295 = vunpack.c.l.b16 %v2628
        %v3296 = vunpack.c.h.b16 %v2628
        %v3297 = vunpack.c.l.b16 %v2629
        %v3298 = vunpack.c.h.b16 %v2629
        %v3299 = vunpack.c.l.b16 %v2630
        %v3300 = vunpack.c.h.b16 %v2630
        %v3301 = vunpack.c.l.b16 %v2631
        %v3302 = vunpack.c.h.b16 %v2631
        %v3303 = vunpack.c.l.b16 %v2632
        %v3304 = vunpack.c.h.b16 %v2632
        %v3305 = vunpack.c.l.b16 %v2633
        %v3306 = vunpack.c.h.b16 %v2633
        %v3307 = vunpack.c.l.b16 %v2634
        %v3308 = vunpack.c.h.b16 %v2634
        %v3309 = vunpack.c.l.b16 %v2635
        %v3310 = vunpack.c.h.b16 %v2635
        %v3311 = vunpack.c.l.b16 %v2636
        %v3312 = vunpack.c.h.b16 %v2636
        %v3313 = vunpack.c.l.b16 %v2637
        %v3314 = vunpack.c.h.b16 %v2637
        %v3315 = vunpack.c.l.b16 %v2638
        %v3316 = vunpack.c.h.b16 %v2638
        %v3317 = vunpack.c.l.b16 %v2639
        %v3318 = vunpack.c.h.b16 %v2639
        %v3319 = vunpack.c.l.b16 %v2640
        %v3320 = vunpack.c.h.b16 %v2640
        %v3321 = vunpack.c.l.b16 %v2641
        %v3322 = vunpack.c.h.b16 %v2641
        %v3323 = vunpack.c.l.b16 %v2642
        %v3324 = vunpack.c.h.b16 %v2642
        %v3325 = vunpack.c.l.b16 %v2643
        %v3326 = vunpack.c.h.b16 %v2643
        %v3327 = vunpack.c.l.b16 %v2644
        %v3328 = vunpack.c.h.b16 %v2644
        %v3329 = vunpack.c.l.b16 %v2645
        %v3330 = vunpack.c.h.b16 %v2645
        %v3331 = vunpack.c.l.b16 %v2646
        %v3332 = vunpack.c.h.b16 %v2646
        %v3333 = vunpack.c.l.b16 %v2647
        %v3334 = vunpack.c.h.b16 %v2647
        %v3335 = vunpack.c.l.b16 %v2648
        %v3336 = vunpack.c.h.b16 %v2648
        %v3337 = vunpack.c.l.b16 %v2649
        %v3338 = vunpack.c.h.b16 %v2649
        %v3339 = vunpack.c.l.b16 %v2650
        %v3340 = vunpack.c.h.b16 %v2650
        %v3341 = vunpack.c.l.b16 %v2651
        %v3342 = vunpack.c.h.b16 %v2651
        %v3343 = vunpack.c.l.b16 %v2652
        %v3344 = vunpack.c.h.b16 %v2652
        %v3345 = vunpack.c.l.b16 %v2653
        %v3346 = vunpack.c.h.b16 %v2653
        %v3347 = vunpack.c.l.b16 %v2654
        %v3348 = vunpack.c.h.b16 %v2654
        %v3349 = vunpack.c.l.b16 %v2655
        %v3350 = vunpack.c.h.b16 %v2655
        %v3351 = vunpack.c.l.b16 %v2656
        %v3352 = vunpack.c.h.b16 %v2656
        %v3353 = vunpack.c.l.b16 %v2657
        %v3354 = vunpack.c.h.b16 %v2657
        %v3355 = vunpack.c.l.b16 %v2658
        %v3356 = vunpack.c.h.b16 %v2658
        %v3357 = vunpack.c.l.b16 %v2659
        %v3358 = vunpack.c.h.b16 %v2659
        %v3359 = vunpack.c.l.b16 %v2660
        %v3360 = vunpack.c.h.b16 %v2660
        %v3361 = vunpack.c.l.b16 %v2661
        %v3362 = vunpack.c.h.b16 %v2661
        %v3363 = vunpack.c.l.b16 %v2662
        %v3364 = vunpack.c.h.b16 %v2662
        %v3365 = vunpack.c.l.b16 %v2663
        %v3366 = vunpack.c.h.b16 %v2663
        %v3367 = vunpack.c.l.b16 %v2664
        %v3368 = vunpack.c.h.b16 %v2664
        %v3369 = vunpack.c.l.b16 %v2665
        %v3370 = vunpack.c.h.b16 %v2665
        %v3371 = vunpack.c.l.b16 %v2666
        %v3372 = vunpack.c.h.b16 %v2666
        %v3373 = vunpack.c.l.b16 %v2667
        %v3374 = vunpack.c.h.b16 %v2667
        %v3375 = vunpack.c.l.b16 %v2668
        %v3376 = vunpack.c.h.b16 %v2668
        %v3377 = vunpack.c.l.b16 %v2669
        %v3378 = vunpack.c.h.b16 %v2669
        %v3379 = vunpack.c.l.b16 %v2670
        %v3380 = vunpack.c.h.b16 %v2670
        %v3381 = vunpack.c.l.b16 %v2671
        %v3382 = vunpack.c.h.b16 %v2671
        %v3383 = vunpack.c.l.b16 %v2672
        %v3384 = vunpack.c.h.b16 %v2672
        %v3385 = vunpack.c.l.b16 %v2673
        %v3386 = vunpack.c.h.b16 %v2673
        %v3387 = vunpack.c.l.b16 %v2674
        %v3388 = vunpack.c.h.b16 %v2674
        %v3389 = vunpack.c.l.b16 %v2675
        %v3390 = vunpack.c.h.b16 %v2675
        %v3391 = vunpack.c.l.b16 %v2676
        %v3392 = vunpack.c.h.b16 %v2676
        %v3393 = vunpack.c.l.b16 %v2677
        %v3394 = vunpack.c.h.b16 %v2677
        %v3395 = vunpack.c.l.b16 %v2678
        %v3396 = vunpack.c.h.b16 %v2678
        %v3397 = vunpack.c.l.b16 %v2679
        %v3398 = vunpack.c.h.b16 %v2679
        %v3399 = vunpack.c.l.b16 %v2680
        %v3400 = vunpack.c.h.b16 %v2680
        %v3401 = vunpack.c.l.b16 %v2681
        %v3402 = vunpack.c.h.b16 %v2681
        %v3403 = vunpack.c.l.b16 %v2682
        %v3404 = vunpack.c.h.b16 %v2682
        %v3405 = vunpack.c.l.b16 %v2683
        %v3406 = vunpack.c.h.b16 %v2683
        %v3407 = vunpack.c.l.b16 %v2684
        %v3408 = vunpack.c.h.b16 %v2684
        %v3409 = vunpack.c.l.b16 %v2685
        %v3410 = vunpack.c.h.b16 %v2685
        %v3411 = vunpack.c.l.b16 %v2686
        %v3412 = vunpack.c.h.b16 %v2686
        %v3413 = vunpack.c.l.b16 %v2687
        %v3414 = vunpack.c.h.b16 %v2687
        %v3415 = vunpack.c.l.b16 %v2688
        %v3416 = vunpack.c.h.b16 %v2688
        %v3417 = vunpack.c.l.b16 %v2689
        %v3418 = vunpack.c.h.b16 %v2689
        %v3419 = vunpack.c.l.b16 %v2690
        %v3420 = vunpack.c.h.b16 %v2690
        %v3421 = vunpack.c.l.b16 %v2691
        %v3422 = vunpack.c.h.b16 %v2691
        %v3423 = vunpack.c.l.b16 %v2692
        %v3424 = vunpack.c.h.b16 %v2692
        %v3425 = vunpack.c.l.b16 %v2693
        %v3426 = vunpack.c.h.b16 %v2693
        %v3427 = vunpack.c.l.b16 %v2694
        %v3428 = vunpack.c.h.b16 %v2694
        %v3429 = vunpack.c.l.b16 %v2695
        %v3430 = vunpack.c.h.b16 %v2695
        %v3431 = vunpack.c.l.b16 %v2696
        %v3432 = vunpack.c.h.b16 %v2696
        %v3433 = vunpack.c.l.b16 %v2697
        %v3434 = vunpack.c.h.b16 %v2697
        %v3435 = vunpack.c.l.b16 %v2698
        %v3436 = vunpack.c.h.b16 %v2698
        %v3437 = vunpack.c.l.b16 %v2699
        %v3438 = vunpack.c.h.b16 %v2699
        %v3439 = vunpack.c.l.b16 %v2700
        %v3440 = vunpack.c.h.b16 %v2700
        %v3441 = vunpack.c.l.b16 %v2701
        %v3442 = vunpack.c.h.b16 %v2701
        %v3443 = vunpack.c.l.b16 %v2702
        %v3444 = vunpack.c.h.b16 %v2702
        %v3445 = vunpack.c.l.b16 %v2703
        %v3446 = vunpack.c.h.b16 %v2703
        %v3447 = vunpack.c.l.b16 %v2704
        %v3448 = vunpack.c.h.b16 %v2704
        %v3449 = vunpack.c.l.b16 %v2705
        %v3450 = vunpack.c.h.b16 %v2705
        %v3451 = vunpack.c.l.b16 %v2706
        %v3452 = vunpack.c.h.b16 %v2706
        %v3453 = vunpack.c.l.b16 %v2707
        %v3454 = vunpack.c.h.b16 %v2707
        %v3455 = vunpack.c.l.b16 %v2708
        %v3456 = vunpack.c.h.b16 %v2708
        %v3457 = vunpack.c.l.b16 %v2709
        %v3458 = vunpack.c.h.b16 %v2709
        %v3459 = vunpack.c.l.b16 %v2710
        %v3460 = vunpack.c.h.b16 %v2710
        %v3461 = vunpack.c.l.b16 %v2711
        %v3462 = vunpack.c.h.b16 %v2711
        %v3463 = vunpack.c.l.b16 %v2712
        %v3464 = vunpack.c.h.b16 %v2712
        %v3465 = vunpack.c.l.b16 %v2713
        %v3466 = vunpack.c.h.b16 %v2713
        %v3467 = vunpack.c.l.b16 %v2714
        %v3468 = vunpack.c.h.b16 %v2714
        %v3469 = vunpack.c.l.b16 %v2715
        %v3470 = vunpack.c.h.b16 %v2715
        %v3471 = vunpack.c.l.b16 %v2716
        %v3472 = vunpack.c.h.b16 %v2716
        %v3473 = vunpack.c.l.b16 %v2717
        %v3474 = vunpack.c.h.b16 %v2717
        %v3475 = vunpack.c.l.b16 %v2718
        %v3476 = vunpack.c.h.b16 %v2718
        %v3477 = vunpack.c.l.b16 %v2719
        %v3478 = vunpack.c.h.b16 %v2719
        %v3479 = vunpack.c.l.b16 %v2720
        %v3480 = vunpack.c.h.b16 %v2720
        %v3481 = vunpack.c.l.b16 %v2721
        %v3482 = vunpack.c.h.b16 %v2721
        %v3483 = vunpack.c.l.b16 %v2722
        %v3484 = vunpack.c.h.b16 %v2722
        %v3485 = vunpack.c.l.b16 %v2723
        %v3486 = vunpack.c.h.b16 %v2723
        %v3487 = vunpack.c.l.b16 %v2724
        %v3488 = vunpack.c.h.b16 %v2724
        %v3489 = vunpack.c.l.b16 %v2725
        %v3490 = vunpack.c.h.b16 %v2725
        %v3491 = vunpack.c.l.b16 %v2726
        %v3492 = vunpack.c.h.b16 %v2726
        %v3493 = vunpack.c.l.b16 %v2727
        %v3494 = vunpack.c.h.b16 %v2727
        %v3495 = vunpack.c.l.b16 %v2728
        %v3496 = vunpack.c.h.b16 %v2728
        %v3497 = vunpack.c.l.b16 %v2729
        %v3498 = vunpack.c.h.b16 %v2729
        %v3499 = vunpack.c.l.b16 %v2730
        %v3500 = vunpack.c.h.b16 %v2730
        %v3501 = vunpack.c.l.b16 %v2731
        %v3502 = vunpack.c.h.b16 %v2731
        %v3503 = vunpack.c.l.b16 %v2732
        %v3504 = vunpack.c.h.b16 %v2732
        %v3505 = vunpack.c.l.b16 %v2733
        %v3506 = vunpack.c.h.b16 %v2733
        %v3507 = vunpack.c.l.b16 %v2734
        %v3508 = vunpack.c.h.b16 %v2734
        %v3509 = vunpack.c.l.b16 %v2735
        %v3510 = vunpack.c.h.b16 %v2735
        %v3511 = vunpack.c.l.b16 %v2736
        %v3512 = vunpack.c.h.b16 %v2736
        %v3513 = vunpack.c.l.b16 %v2737
        %v3514 = vunpack.c.h.b16 %v2737
        %v3515 = vunpack.c.l.b16 %v2738
        %v3516 = vunpack.c.h.b16 %v2738
        %v3517 = vunpack.c.l.b16 %v2739
        %v3518 = vunpack.c.h.b16 %v2739
        %v3519 = vunpack.c.l.b16 %v2740
        %v3520 = vunpack.c.h.b16 %v2740
        %v3521 = vunpack.c.l.b16 %v2741
        %v3522 = vunpack.c.h.b16 %v2741
        %v3523 = vunpack.c.l.b16 %v2742
        %v3524 = vunpack.c.h.b16 %v2742
        %v3525 = vunpack.c.l.b16 %v2743
        %v3526 = vunpack.c.h.b16 %v2743
        %v3527 = vunpack.c.l.b16 %v2744
        %v3528 = vunpack.c.h.b16 %v2744
        %v3529 = vunpack.c.l.b16 %v2745
        %v3530 = vunpack.c.h.b16 %v2745
        %v3531 = vunpack.c.l.b16 %v2746
        %v3532 = vunpack.c.h.b16 %v2746
        %v3533 = vunpack.c.l.b16 %v2747
        %v3534 = vunpack.c.h.b16 %v2747
        %v3535 = vunpack.c.l.b16 %v2748
        %v3536 = vunpack.c.h.b16 %v2748
        %v3537 = vunpack.c.l.b16 %v2749
        %v3538 = vunpack.c.h.b16 %v2749
        %v3539 = vunpack.c.l.b16 %v2750
        %v3540 = vunpack.c.h.b16 %v2750
        %v3541 = vpack.c.b16 %v3033, %v3029
        %v3542 = vpack.c.b16 %v3034, %v3030
        %v3543 = vpack.c.b16 %v3035, %v3031
        %v3544 = vpack.c.b16 %v3036, %v3032
        %v3545 = vpack.c.b16 %v3041, %v3037
        %v3546 = vpack.c.b16 %v3042, %v3038
        %v3547 = vpack.c.b16 %v3043, %v3039
        %v3548 = vpack.c.b16 %v3044, %v3040
        %v3549 = vpack.c.b16 %v3049, %v3045
        %v3550 = vpack.c.b16 %v3050, %v3046
        %v3551 = vpack.c.b16 %v3051, %v3047
        %v3552 = vpack.c.b16 %v3052, %v3048
        %v3553 = vpack.c.b16 %v3057, %v3053
        %v3554 = vpack.c.b16 %v3058, %v3054
        %v3555 = vpack.c.b16 %v3059, %v3055
        %v3556 = vpack.c.b16 %v3060, %v3056
        %v3557 = vpack.c.b16 %v3065, %v3061
        %v3558 = vpack.c.b16 %v3066, %v3062
        %v3559 = vpack.c.b16 %v3067, %v3063
        %v3560 = vpack.c.b16 %v3068, %v3064
        %v3561 = vpack.c.b16 %v3073, %v3069
        %v3562 = vpack.c.b16 %v3074, %v3070
        %v3563 = vpack.c.b16 %v3075, %v3071
        %v3564 = vpack.c.b16 %v3076, %v3072
        %v3565 = vpack.c.b16 %v3081, %v3077
        %v3566 = vpack.c.b16 %v3082, %v3078
        %v3567 = vpack.c.b16 %v3083, %v3079
        %v3568 = vpack.c.b16 %v3084, %v3080
        %v3569 = vpack.c.b16 %v3089, %v3085
        %v3570 = vpack.c.b16 %v3090, %v3086
        %v3571 = vpack.c.b16 %v3091, %v3087
        %v3572 = vpack.c.b16 %v3092, %v3088
        %v3573 = vpack.c.b16 %v3097, %v3093
        %v3574 = vpack.c.b16 %v3098, %v3094
        %v3575 = vpack.c.b16 %v3099, %v3095
        %v3576 = vpack.c.b16 %v3100, %v3096
        %v3577 = vpack.c.b16 %v3105, %v3101
        %v3578 = vpack.c.b16 %v3106, %v3102
        %v3579 = vpack.c.b16 %v3107, %v3103
        %v3580 = vpack.c.b16 %v3108, %v3104
        %v3581 = vpack.c.b16 %v3113, %v3109
        %v3582 = vpack.c.b16 %v3114, %v3110
        %v3583 = vpack.c.b16 %v3115, %v3111
        %v3584 = vpack.c.b16 %v3116, %v3112
        %v3585 = vpack.c.b16 %v3121, %v3117
        %v3586 = vpack.c.b16 %v3122, %v3118
        %v3587 = vpack.c.b16 %v3123, %v3119
        %v3588 = vpack.c.b16 %v3124, %v3120
        %v3589 = vpack.c.b16 %v3129, %v3125
        %v3590 = vpack.c.b16 %v3130, %v3126
        %v3591 = vpack.c.b16 %v3131, %v3127
        %v3592 = vpack.c.b16 %v3132, %v3128
        %v3593 = vpack.c.b16 %v3137, %v3133
        %v3594 = vpack.c.b16 %v3138, %v3134
        %v3595 = vpack.c.b16 %v3139, %v3135
        %v3596 = vpack.c.b16 %v3140, %v3136
        %v3597 = vpack.c.b16 %v3145, %v3141
        %v3598 = vpack.c.b16 %v3146, %v3142
        %v3599 = vpack.c.b16 %v3147, %v3143
        %v3600 = vpack.c.b16 %v3148, %v3144
        %v3601 = vpack.c.b16 %v3153, %v3149
        %v3602 = vpack.c.b16 %v3154, %v3150
        %v3603 = vpack.c.b16 %v3155, %v3151
        %v3604 = vpack.c.b16 %v3156, %v3152
        %v3605 = vpack.c.b16 %v3161, %v3157
        %v3606 = vpack.c.b16 %v3162, %v3158
        %v3607 = vpack.c.b16 %v3163, %v3159
        %v3608 = vpack.c.b16 %v3164, %v3160
        %v3609 = vpack.c.b16 %v3169, %v3165
        %v3610 = vpack.c.b16 %v3170, %v3166
        %v3611 = vpack.c.b16 %v3171, %v3167
        %v3612 = vpack.c.b16 %v3172, %v3168
        %v3613 = vpack.c.b16 %v3177, %v3173
        %v3614 = vpack.c.b16 %v3178, %v3174
        %v3615 = vpack.c.b16 %v3179, %v3175
        %v3616 = vpack.c.b16 %v3180, %v3176
        %v3617 = vpack.c.b16 %v3185, %v3181
        %v3618 = vpack.c.b16 %v3186, %v3182
        %v3619 = vpack.c.b16 %v3187, %v3183
        %v3620 = vpack.c.b16 %v3188, %v3184
        %v3621 = vpack.c.b16 %v3193, %v3189
        %v3622 = vpack.c.b16 %v3194, %v3190
        %v3623 = vpack.c.b16 %v3195, %v3191
        %v3624 = vpack.c.b16 %v3196, %v3192
        %v3625 = vpack.c.b16 %v3201, %v3197
        %v3626 = vpack.c.b16 %v3202, %v3198
        %v3627 = vpack.c.b16 %v3203, %v3199
        %v3628 = vpack.c.b16 %v3204, %v3200
        %v3629 = vpack.c.b16 %v3209, %v3205
        %v3630 = vpack.c.b16 %v3210, %v3206
        %v3631 = vpack.c.b16 %v3211, %v3207
        %v3632 = vpack.c.b16 %v3212, %v3208
        %v3633 = vpack.c.b16 %v3217, %v3213
        %v3634 = vpack.c.b16 %v3218, %v3214
        %v3635 = vpack.c.b16 %v3219, %v3215
        %v3636 = vpack.c.b16 %v3220, %v3216
        %v3637 = vpack.c.b16 %v3225, %v3221
        %v3638 = vpack.c.b16 %v3226, %v3222
        %v3639 = vpack.c.b16 %v3227, %v3223
        %v3640 = vpack.c.b16 %v3228, %v3224
        %v3641 = vpack.c.b16 %v3233, %v3229
        %v3642 = vpack.c.b16 %v3234, %v3230
        %v3643 = vpack.c.b16 %v3235, %v3231
        %v3644 = vpack.c.b16 %v3236, %v3232
        %v3645 = vpack.c.b16 %v3241, %v3237
        %v3646 = vpack.c.b16 %v3242, %v3238
        %v3647 = vpack.c.b16 %v3243, %v3239
        %v3648 = vpack.c.b16 %v3244, %v3240
        %v3649 = vpack.c.b16 %v3249, %v3245
        %v3650 = vpack.c.b16 %v3250, %v3246
        %v3651 = vpack.c.b16 %v3251, %v3247
        %v3652 = vpack.c.b16 %v3252, %v3248
        %v3653 = vpack.c.b16 %v3257, %v3253
        %v3654 = vpack.c.b16 %v3258, %v3254
        %v3655 = vpack.c.b16 %v3259, %v3255
        %v3656 = vpack.c.b16 %v3260, %v3256
        %v3657 = vpack.c.b16 %v3265, %v3261
        %v3658 = vpack.c.b16 %v3266, %v3262
        %v3659 = vpack.c.b16 %v3267, %v3263
        %v3660 = vpack.c.b16 %v3268, %v3264
        %v3661 = vpack.c.b16 %v3273, %v3269
        %v3662 = vpack.c.b16 %v3274, %v3270
        %v3663 = vpack.c.b16 %v3275, %v3271
        %v3664 = vpack.c.b16 %v3276, %v3272
        %v3665 = vpack.c.b16 %v3281, %v3277
        %v3666 = vpack.c.b16 %v3282, %v3278
        %v3667 = vpack.c.b16 %v3283, %v3279
        %v3668 = vpack.c.b16 %v3284, %v3280
        %v3669 = vpack.c.b16 %v3289, %v3285
        %v3670 = vpack.c.b16 %v3290, %v3286
        %v3671 = vpack.c.b16 %v3291, %v3287
        %v3672 = vpack.c.b16 %v3292, %v3288
        %v3673 = vpack.c.b16 %v3297, %v3293
        %v3674 = vpack.c.b16 %v3298, %v3294
        %v3675 = vpack.c.b16 %v3299, %v3295
        %v3676 = vpack.c.b16 %v3300, %v3296
        %v3677 = vpack.c.b16 %v3305, %v3301
        %v3678 = vpack.c.b16 %v3306, %v3302
        %v3679 = vpack.c.b16 %v3307, %v3303
        %v3680 = vpack.c.b16 %v3308, %v3304
        %v3681 = vpack.c.b16 %v3313, %v3309
        %v3682 = vpack.c.b16 %v3314, %v3310
        %v3683 = vpack.c.b16 %v3315, %v3311
        %v3684 = vpack.c.b16 %v3316, %v3312
        %v3685 = vpack.c.b16 %v3321, %v3317
        %v3686 = vpack.c.b16 %v3322, %v3318
        %v3687 = vpack.c.b16 %v3323, %v3319
        %v3688 = vpack.c.b16 %v3324, %v3320
        %v3689 = vpack.c.b16 %v3329, %v3325
        %v3690 = vpack.c.b16 %v3330, %v3326
        %v3691 = vpack.c.b16 %v3331, %v3327
        %v3692 = vpack.c.b16 %v3332, %v3328
        %v3693 = vpack.c.b16 %v3337, %v3333
        %v3694 = vpack.c.b16 %v3338, %v3334
        %v3695 = vpack.c.b16 %v3339, %v3335
        %v3696 = vpack.c.b16 %v3340, %v3336
        %v3697 = vpack.c.b16 %v3345, %v3341
        %v3698 = vpack.c.b16 %v3346, %v3342
        %v3699 = vpack.c.b16 %v3347, %v3343
        %v3700 = vpack.c.b16 %v3348, %v3344
        %v3701 = vpack.c.b16 %v3353, %v3349
        %v3702 = vpack.c.b16 %v3354, %v3350
        %v3703 = vpack.c.b16 %v3355, %v3351
        %v3704 = vpack.c.b16 %v3356, %v3352
        %v3705 = vpack.c.b16 %v3361, %v3357
        %v3706 = vpack.c.b16 %v3362, %v3358
        %v3707 = vpack.c.b16 %v3363, %v3359
        %v3708 = vpack.c.b16 %v3364, %v3360
        %v3709 = vpack.c.b16 %v3369, %v3365
        %v3710 = vpack.c.b16 %v3370, %v3366
        %v3711 = vpack.c.b16 %v3371, %v3367
        %v3712 = vpack.c.b16 %v3372, %v3368
        %v3713 = vpack.c.b16 %v3377, %v3373
        %v3714 = vpack.c.b16 %v3378, %v3374
        %v3715 = vpack.c.b16 %v3379, %v3375
        %v3716 = vpack.c.b16 %v3380, %v3376
        %v3717 = vpack.c.b16 %v3385, %v3381
        %v3718 = vpack.c.b16 %v3386, %v3382
        %v3719 = vpack.c.b16 %v3387, %v3383
        %v3720 = vpack.c.b16 %v3388, %v3384
        %v3721 = vpack.c.b16 %v3393, %v3389
        %v3722 = vpack.c.b16 %v3394, %v3390
        %v3723 = vpack.c.b16 %v3395, %v3391
        %v3724 = vpack.c.b16 %v3396, %v3392
        %v3725 = vpack.c.b16 %v3401, %v3397
        %v3726 = vpack.c.b16 %v3402, %v3398
        %v3727 = vpack.c.b16 %v3403, %v3399
        %v3728 = vpack.c.b16 %v3404, %v3400
        %v3729 = vpack.c.b16 %v3409, %v3405
        %v3730 = vpack.c.b16 %v3410, %v3406
        %v3731 = vpack.c.b16 %v3411, %v3407
        %v3732 = vpack.c.b16 %v3412, %v3408
        %v3733 = vpack.c.b16 %v3417, %v3413
        %v3734 = vpack.c.b16 %v3418, %v3414
        %v3735 = vpack.c.b16 %v3419, %v3415
        %v3736 = vpack.c.b16 %v3420, %v3416
        %v3737 = vpack.c.b16 %v3425, %v3421
        %v3738 = vpack.c.b16 %v3426, %v3422
        %v3739 = vpack.c.b16 %v3427, %v3423
        %v3740 = vpack.c.b16 %v3428, %v3424
        %v3741 = vpack.c.b16 %v3433, %v3429
        %v3742 = vpack.c.b16 %v3434, %v3430
        %v3743 = vpack.c.b16 %v3435, %v3431
        %v3744 = vpack.c.b16 %v3436, %v3432
        %v3745 = vpack.c.b16 %v3441, %v3437
        %v3746 = vpack.c.b16 %v3442, %v3438
        %v3747 = vpack.c.b16 %v3443, %v3439
        %v3748 = vpack.c.b16 %v3444, %v3440
        %v3749 = vpack.c.b16 %v3449, %v3445
        %v3750 = vpack.c.b16 %v3450, %v3446
        %v3751 = vpack.c.b16 %v3451, %v3447
        %v3752 = vpack.c.b16 %v3452, %v3448
        %v3753 = vpack.c.b16 %v3457, %v3453
        %v3754 = vpack.c.b16 %v3458, %v3454
        %v3755 = vpack.c.b16 %v3459, %v3455
        %v3756 = vpack.c.b16 %v3460, %v3456
        %v3757 = vpack.c.b16 %v3465, %v3461
        %v3758 = vpack.c.b16 %v3466, %v3462
        %v3759 = vpack.c.b16 %v3467, %v3463
        %v3760 = vpack.c.b16 %v3468, %v3464
        %v3761 = vpack.c.b16 %v3473, %v3469
        %v3762 = vpack.c.b16 %v3474, %v3470
        %v3763 = vpack.c.b16 %v3475, %v3471
        %v3764 = vpack.c.b16 %v3476, %v3472
        %v3765 = vpack.c.b16 %v3481, %v3477
        %v3766 = vpack.c.b16 %v3482, %v3478
        %v3767 = vpack.c.b16 %v3483, %v3479
        %v3768 = vpack.c.b16 %v3484, %v3480
        %v3769 = vpack.c.b16 %v3489, %v3485
        %v3770 = vpack.c.b16 %v3490, %v3486
        %v3771 = vpack.c.b16 %v3491, %v3487
        %v3772 = vpack.c.b16 %v3492, %v3488
        %v3773 = vpack.c.b16 %v3497, %v3493
        %v3774 = vpack.c.b16 %v3498, %v3494
        %v3775 = vpack.c.b16 %v3499, %v3495
        %v3776 = vpack.c.b16 %v3500, %v3496
        %v3777 = vpack.c.b16 %v3505, %v3501
        %v3778 = vpack.c.b16 %v3506, %v3502
        %v3779 = vpack.c.b16 %v3507, %v3503
        %v3780 = vpack.c.b16 %v3508, %v3504
        %v3781 = vpack.c.b16 %v3513, %v3509
        %v3782 = vpack.c.b16 %v3514, %v3510
        %v3783 = vpack.c.b16 %v3515, %v3511
        %v3784 = vpack.c.b16 %v3516, %v3512
        %v3785 = vpack.c.b16 %v3521, %v3517
        %v3786 = vpack.c.b16 %v3522, %v3518
        %v3787 = vpack.c.b16 %v3523, %v3519
        %v3788 = vpack.c.b16 %v3524, %v3520
        %v3789 = vpack.c.b16 %v3529, %v3525
        %v3790 = vpack.c.b16 %v3530, %v3526
        %v3791 = vpack.c.b16 %v3531, %v3527
        %v3792 = vpack.c.b16 %v3532, %v3528
        %v3793 = vpack.c.b16 %v3537, %v3533
        %v3794 = vpack.c.b16 %v3538, %v3534
        %v3795 = vpack.c.b16 %v3539, %v3535
        %v3796 = vpack.c.b16 %v3540, %v3536
        %4053 = vmatprep.subr.bf16.mxu0 %v3570
        %4054 = vmatpush1.bf16.msra.mxu0 %v3569
        %4055 = vmatprep.subr.bf16.mxu0 %v3566
        %4056 = vmatpush1.bf16.msra.mxu0 %v3565
        %4057 = vmatprep.subr.bf16.mxu0 %v3562
        %4058 = vmatpush1.bf16.msra.mxu0 %v3561
        %4059 = vmatprep.subr.bf16.mxu0 %v3558
        %4060 = vmatpush1.bf16.msra.mxu0 %v3557
        %4061 = vmatprep.subr.bf16.mxu0 %v3554
        %4062 = vmatpush1.bf16.msra.mxu0 %v3553
        %4063 = vmatprep.subr.bf16.mxu0 %v3550
        %4064 = vmatpush1.bf16.msra.mxu0 %v3549
        %4065 = vmatprep.subr.bf16.mxu0 %v3546
        %4066 = vmatpush1.bf16.msra.mxu0 %v3545
        %4067 = vmatprep.subr.bf16.mxu0 %v3542
        %4068 = vmatpush1.bf16.msra.mxu0 %v3541
        %4069 = vmatprep.subr.bf16.mxu0 %v3602
        %4070 = vmatpush2.bf16.msra.mxu0 %v3601
        %4071 = vmatprep.subr.bf16.mxu0 %v3598
        %4072 = vmatpush2.bf16.msra.mxu0 %v3597
        %4073 = vmatprep.subr.bf16.mxu0 %v3594
        %4074 = vmatpush2.bf16.msra.mxu0 %v3593
        %4075 = vmatprep.subr.bf16.mxu0 %v3590
        %4076 = vmatpush2.bf16.msra.mxu0 %v3589
        %4077 = vmatprep.subr.bf16.mxu0 %v3586
        %4078 = vmatpush2.bf16.msra.mxu0 %v3585
        %4079 = vmatprep.subr.bf16.mxu0 %v3582
        %4080 = vmatpush2.bf16.msra.mxu0 %v3581
        %4081 = vmatprep.subr.bf16.mxu0 %v3578
        %4082 = vmatpush2.bf16.msra.mxu0 %v3577
        %4083 = vmatprep.subr.bf16.mxu0 %v3574
        %4084 = vmatpush2.bf16.msra.mxu0 %v3573
        %4085 = vmatprep.mubr.bf16.mxu0 %v2488
        %4086 = vmatmul.mubr.bf16.gmra.mxu0 %v2487
        %v4087 = vpop.f32.mrf.mxu0
        %v4088 = vadd.f32 %v2756, %v4087
        %v4089 = vpop.f32.mrf.mxu0
        %v4090 = vadd.f32 %v2760, %v4089
        %v4091 = vpop.f32.mrf.mxu0
        %v4092 = vadd.f32 %v2756, %v4091
        %v4093 = vpop.f32.mrf.mxu0
        %v4094 = vadd.f32 %v2760, %v4093
        %4095 = vdwg.mxu0
        %4096 = vmatprep.subr.bf16.mxu0 %v3634
        %4097 = vmatpush1.bf16.msra.mxu0 %v3633
        %4098 = vmatprep.subr.bf16.mxu0 %v3630
        %4099 = vmatpush1.bf16.msra.mxu0 %v3629
        %4100 = vmatprep.subr.bf16.mxu0 %v3626
        %4101 = vmatpush1.bf16.msra.mxu0 %v3625
        %4102 = vmatprep.subr.bf16.mxu0 %v3622
        %4103 = vmatpush1.bf16.msra.mxu0 %v3621
        %4104 = vmatprep.subr.bf16.mxu0 %v3618
        %4105 = vmatpush1.bf16.msra.mxu0 %v3617
        %4106 = vmatprep.subr.bf16.mxu0 %v3614
        %4107 = vmatpush1.bf16.msra.mxu0 %v3613
        %4108 = vmatprep.subr.bf16.mxu0 %v3610
        %4109 = vmatpush1.bf16.msra.mxu0 %v3609
        %4110 = vmatprep.subr.bf16.mxu0 %v3606
        %4111 = vmatpush1.bf16.msra.mxu0 %v3605
        %4112 = vmatprep.subr.bf16.mxu0 %v3666
        %4113 = vmatpush2.bf16.msra.mxu0 %v3665
        %4114 = vmatprep.subr.bf16.mxu0 %v3662
        %4115 = vmatpush2.bf16.msra.mxu0 %v3661
        %4116 = vmatprep.subr.bf16.mxu0 %v3658
        %4117 = vmatpush2.bf16.msra.mxu0 %v3657
        %4118 = vmatprep.subr.bf16.mxu0 %v3654
        %4119 = vmatpush2.bf16.msra.mxu0 %v3653
        %4120 = vmatprep.subr.bf16.mxu0 %v3650
        %4121 = vmatpush2.bf16.msra.mxu0 %v3649
        %4122 = vmatprep.subr.bf16.mxu0 %v3646
        %4123 = vmatpush2.bf16.msra.mxu0 %v3645
        %4124 = vmatprep.subr.bf16.mxu0 %v3642
        %4125 = vmatpush2.bf16.msra.mxu0 %v3641
        %4126 = vmatprep.subr.bf16.mxu0 %v3638
        %4127 = vmatpush2.bf16.msra.mxu0 %v3637
        %4128 = vmatprep.mubr.bf16.mxu0 %v2490
        %4129 = vmatmul.mubr.bf16.gmra.mxu0 %v2489
        %v4130 = vpop.f32.mrf.mxu0
        %v4131 = vadd.f32 %v4088, %v4130
        %v4132 = vpop.f32.mrf.mxu0
        %v4133 = vadd.f32 %v4090, %v4132
        %v4134 = vpop.f32.mrf.mxu0
        %v4135 = vadd.f32 %v4092, %v4134
        %v4136 = vpop.f32.mrf.mxu0
        %v4137 = vadd.f32 %v4094, %v4136
        %4138 = vdwg.mxu0
        %4139 = vmatprep.subr.bf16.mxu0 %v3698
        %4140 = vmatpush1.bf16.msra.mxu0 %v3697
        %4141 = vmatprep.subr.bf16.mxu0 %v3694
        %4142 = vmatpush1.bf16.msra.mxu0 %v3693
        %4143 = vmatprep.subr.bf16.mxu0 %v3690
        %4144 = vmatpush1.bf16.msra.mxu0 %v3689
        %4145 = vmatprep.subr.bf16.mxu0 %v3686
        %4146 = vmatpush1.bf16.msra.mxu0 %v3685
        %4147 = vmatprep.subr.bf16.mxu0 %v3682
        %4148 = vmatpush1.bf16.msra.mxu0 %v3681
        %4149 = vmatprep.subr.bf16.mxu0 %v3678
        %4150 = vmatpush1.bf16.msra.mxu0 %v3677
        %4151 = vmatprep.subr.bf16.mxu0 %v3674
        %4152 = vmatpush1.bf16.msra.mxu0 %v3673
        %4153 = vmatprep.subr.bf16.mxu0 %v3670
        %4154 = vmatpush1.bf16.msra.mxu0 %v3669
        %4155 = vmatprep.subr.bf16.mxu0 %v3730
        %4156 = vmatpush2.bf16.msra.mxu0 %v3729
        %4157 = vmatprep.subr.bf16.mxu0 %v3726
        %4158 = vmatpush2.bf16.msra.mxu0 %v3725
        %4159 = vmatprep.subr.bf16.mxu0 %v3722
        %4160 = vmatpush2.bf16.msra.mxu0 %v3721
        %4161 = vmatprep.subr.bf16.mxu0 %v3718
        %4162 = vmatpush2.bf16.msra.mxu0 %v3717
        %4163 = vmatprep.subr.bf16.mxu0 %v3714
        %4164 = vmatpush2.bf16.msra.mxu0 %v3713
        %4165 = vmatprep.subr.bf16.mxu0 %v3710
        %4166 = vmatpush2.bf16.msra.mxu0 %v3709
        %4167 = vmatprep.subr.bf16.mxu0 %v3706
        %4168 = vmatpush2.bf16.msra.mxu0 %v3705
        %4169 = vmatprep.subr.bf16.mxu0 %v3702
        %4170 = vmatpush2.bf16.msra.mxu0 %v3701
        %4171 = vmatprep.mubr.bf16.mxu0 %v2492
        %4172 = vmatmul.mubr.bf16.gmra.mxu0 %v2491
        %v4173 = vpop.f32.mrf.mxu0
        %v4174 = vadd.f32 %v4131, %v4173
        %v4175 = vpop.f32.mrf.mxu0
        %v4176 = vadd.f32 %v4133, %v4175
        %v4177 = vpop.f32.mrf.mxu0
        %v4178 = vadd.f32 %v4135, %v4177
        %v4179 = vpop.f32.mrf.mxu0
        %v4180 = vadd.f32 %v4137, %v4179
        %4181 = vdwg.mxu0
        %4182 = vmatprep.subr.bf16.mxu0 %v3762
        %4183 = vmatpush1.bf16.msra.mxu0 %v3761
        %4184 = vmatprep.subr.bf16.mxu0 %v3758
        %4185 = vmatpush1.bf16.msra.mxu0 %v3757
        %4186 = vmatprep.subr.bf16.mxu0 %v3754
        %4187 = vmatpush1.bf16.msra.mxu0 %v3753
        %4188 = vmatprep.subr.bf16.mxu0 %v3750
        %4189 = vmatpush1.bf16.msra.mxu0 %v3749
        %4190 = vmatprep.subr.bf16.mxu0 %v3746
        %4191 = vmatpush1.bf16.msra.mxu0 %v3745
        %4192 = vmatprep.subr.bf16.mxu0 %v3742
        %4193 = vmatpush1.bf16.msra.mxu0 %v3741
        %4194 = vmatprep.subr.bf16.mxu0 %v3738
        %4195 = vmatpush1.bf16.msra.mxu0 %v3737
        %4196 = vmatprep.subr.bf16.mxu0 %v3734
        %4197 = vmatpush1.bf16.msra.mxu0 %v3733
        %4198 = vmatprep.subr.bf16.mxu0 %v3794
        %4199 = vmatpush2.bf16.msra.mxu0 %v3793
        %4200 = vmatprep.subr.bf16.mxu0 %v3790
        %4201 = vmatpush2.bf16.msra.mxu0 %v3789
        %4202 = vmatprep.subr.bf16.mxu0 %v3786
        %4203 = vmatpush2.bf16.msra.mxu0 %v3785
        %4204 = vmatprep.subr.bf16.mxu0 %v3782
        %4205 = vmatpush2.bf16.msra.mxu0 %v3781
        %4206 = vmatprep.subr.bf16.mxu0 %v3778
        %4207 = vmatpush2.bf16.msra.mxu0 %v3777
        %4208 = vmatprep.subr.bf16.mxu0 %v3774
        %4209 = vmatpush2.bf16.msra.mxu0 %v3773
        %4210 = vmatprep.subr.bf16.mxu0 %v3770
        %4211 = vmatpush2.bf16.msra.mxu0 %v3769
        %4212 = vmatprep.subr.bf16.mxu0 %v3766
        %4213 = vmatpush2.bf16.msra.mxu0 %v3765
        %4214 = vmatprep.mubr.bf16.mxu0 %v2494
        %4215 = vmatmul.mubr.bf16.gmra.mxu0 %v2493
        %v4216 = vpop.f32.mrf.mxu0
        %v4217 = vadd.f32 %v4174, %v4216
        %v4218 = vpop.f32.mrf.mxu0
        %v4219 = vadd.f32 %v4176, %v4218
        %v4220 = vpop.f32.mrf.mxu0
        %v4221 = vadd.f32 %v4178, %v4220
        %v4222 = vpop.f32.mrf.mxu0
        %v4223 = vadd.f32 %v4180, %v4222
        %4224 = vdwg.mxu0
        %4225 = vmatprep.subr.bf16.mxu0 %v3572
        %4226 = vmatpush1.bf16.msra.mxu0 %v3571
        %4227 = vmatprep.subr.bf16.mxu0 %v3568
        %4228 = vmatpush1.bf16.msra.mxu0 %v3567
        %4229 = vmatprep.subr.bf16.mxu0 %v3564
        %4230 = vmatpush1.bf16.msra.mxu0 %v3563
        %4231 = vmatprep.subr.bf16.mxu0 %v3560
        %4232 = vmatpush1.bf16.msra.mxu0 %v3559
        %4233 = vmatprep.subr.bf16.mxu0 %v3556
        %4234 = vmatpush1.bf16.msra.mxu0 %v3555
        %4235 = vmatprep.subr.bf16.mxu0 %v3552
        %4236 = vmatpush1.bf16.msra.mxu0 %v3551
        %4237 = vmatprep.subr.bf16.mxu0 %v3548
        %4238 = vmatpush1.bf16.msra.mxu0 %v3547
        %4239 = vmatprep.subr.bf16.mxu0 %v3544
        %4240 = vmatpush1.bf16.msra.mxu0 %v3543
        %4241 = vmatprep.subr.bf16.mxu0 %v3604
        %4242 = vmatpush2.bf16.msra.mxu0 %v3603
        %4243 = vmatprep.subr.bf16.mxu0 %v3600
        %4244 = vmatpush2.bf16.msra.mxu0 %v3599
        %4245 = vmatprep.subr.bf16.mxu0 %v3596
        %4246 = vmatpush2.bf16.msra.mxu0 %v3595
        %4247 = vmatprep.subr.bf16.mxu0 %v3592
        %4248 = vmatpush2.bf16.msra.mxu0 %v3591
        %4249 = vmatprep.subr.bf16.mxu0 %v3588
        %4250 = vmatpush2.bf16.msra.mxu0 %v3587
        %4251 = vmatprep.subr.bf16.mxu0 %v3584
        %4252 = vmatpush2.bf16.msra.mxu0 %v3583
        %4253 = vmatprep.subr.bf16.mxu0 %v3580
        %4254 = vmatpush2.bf16.msra.mxu0 %v3579
        %4255 = vmatprep.subr.bf16.mxu0 %v3576
        %4256 = vmatpush2.bf16.msra.mxu0 %v3575
        %4257 = vmatprep.mubr.bf16.mxu0 %v2488
        %4258 = vmatmul.mubr.bf16.gmra.mxu0 %v2487
        %v4259 = vpop.f32.mrf.mxu0
        %v4260 = vadd.f32 %v2764, %v4259
        %v4261 = vpop.f32.mrf.mxu0
        %v4262 = vadd.f32 %v2768, %v4261
        %v4263 = vpop.f32.mrf.mxu0
        %v4264 = vadd.f32 %v2764, %v4263
        %v4265 = vpop.f32.mrf.mxu0
        %v4266 = vadd.f32 %v2768, %v4265
        %4267 = vdwg.mxu0
        %4268 = vmatprep.subr.bf16.mxu0 %v3636
        %4269 = vmatpush1.bf16.msra.mxu0 %v3635
        %4270 = vmatprep.subr.bf16.mxu0 %v3632
        %4271 = vmatpush1.bf16.msra.mxu0 %v3631
        %4272 = vmatprep.subr.bf16.mxu0 %v3628
        %4273 = vmatpush1.bf16.msra.mxu0 %v3627
        %4274 = vmatprep.subr.bf16.mxu0 %v3624
        %4275 = vmatpush1.bf16.msra.mxu0 %v3623
        %4276 = vmatprep.subr.bf16.mxu0 %v3620
        %4277 = vmatpush1.bf16.msra.mxu0 %v3619
        %4278 = vmatprep.subr.bf16.mxu0 %v3616
        %4279 = vmatpush1.bf16.msra.mxu0 %v3615
        %4280 = vmatprep.subr.bf16.mxu0 %v3612
        %4281 = vmatpush1.bf16.msra.mxu0 %v3611
        %4282 = vmatprep.subr.bf16.mxu0 %v3608
        %4283 = vmatpush1.bf16.msra.mxu0 %v3607
        %4284 = vmatprep.subr.bf16.mxu0 %v3668
        %4285 = vmatpush2.bf16.msra.mxu0 %v3667
        %4286 = vmatprep.subr.bf16.mxu0 %v3664
        %4287 = vmatpush2.bf16.msra.mxu0 %v3663
        %4288 = vmatprep.subr.bf16.mxu0 %v3660
        %4289 = vmatpush2.bf16.msra.mxu0 %v3659
        %4290 = vmatprep.subr.bf16.mxu0 %v3656
        %4291 = vmatpush2.bf16.msra.mxu0 %v3655
        %4292 = vmatprep.subr.bf16.mxu0 %v3652
        %4293 = vmatpush2.bf16.msra.mxu0 %v3651
        %4294 = vmatprep.subr.bf16.mxu0 %v3648
        %4295 = vmatpush2.bf16.msra.mxu0 %v3647
        %4296 = vmatprep.subr.bf16.mxu0 %v3644
        %4297 = vmatpush2.bf16.msra.mxu0 %v3643
        %4298 = vmatprep.subr.bf16.mxu0 %v3640
        %4299 = vmatpush2.bf16.msra.mxu0 %v3639
        %4300 = vmatprep.mubr.bf16.mxu0 %v2490
        %4301 = vmatmul.mubr.bf16.gmra.mxu0 %v2489
        %v4302 = vpop.f32.mrf.mxu0
        %v4303 = vadd.f32 %v4260, %v4302
        %v4304 = vpop.f32.mrf.mxu0
        %v4305 = vadd.f32 %v4262, %v4304
        %v4306 = vpop.f32.mrf.mxu0
        %v4307 = vadd.f32 %v4264, %v4306
        %v4308 = vpop.f32.mrf.mxu0
        %v4309 = vadd.f32 %v4266, %v4308
        %4310 = vdwg.mxu0
        %4311 = vmatprep.subr.bf16.mxu0 %v3700
        %4312 = vmatpush1.bf16.msra.mxu0 %v3699
        %4313 = vmatprep.subr.bf16.mxu0 %v3696
        %4314 = vmatpush1.bf16.msra.mxu0 %v3695
        %4315 = vmatprep.subr.bf16.mxu0 %v3692
        %4316 = vmatpush1.bf16.msra.mxu0 %v3691
        %4317 = vmatprep.subr.bf16.mxu0 %v3688
        %4318 = vmatpush1.bf16.msra.mxu0 %v3687
        %4319 = vmatprep.subr.bf16.mxu0 %v3684
        %4320 = vmatpush1.bf16.msra.mxu0 %v3683
        %4321 = vmatprep.subr.bf16.mxu0 %v3680
        %4322 = vmatpush1.bf16.msra.mxu0 %v3679
        %4323 = vmatprep.subr.bf16.mxu0 %v3676
        %4324 = vmatpush1.bf16.msra.mxu0 %v3675
        %4325 = vmatprep.subr.bf16.mxu0 %v3672
        %4326 = vmatpush1.bf16.msra.mxu0 %v3671
        %4327 = vmatprep.subr.bf16.mxu0 %v3732
        %4328 = vmatpush2.bf16.msra.mxu0 %v3731
        %4329 = vmatprep.subr.bf16.mxu0 %v3728
        %4330 = vmatpush2.bf16.msra.mxu0 %v3727
        %4331 = vmatprep.subr.bf16.mxu0 %v3724
        %4332 = vmatpush2.bf16.msra.mxu0 %v3723
        %4333 = vmatprep.subr.bf16.mxu0 %v3720
        %4334 = vmatpush2.bf16.msra.mxu0 %v3719
        %4335 = vmatprep.subr.bf16.mxu0 %v3716
        %4336 = vmatpush2.bf16.msra.mxu0 %v3715
        %4337 = vmatprep.subr.bf16.mxu0 %v3712
        %4338 = vmatpush2.bf16.msra.mxu0 %v3711
        %4339 = vmatprep.subr.bf16.mxu0 %v3708
        %4340 = vmatpush2.bf16.msra.mxu0 %v3707
        %4341 = vmatprep.subr.bf16.mxu0 %v3704
        %4342 = vmatpush2.bf16.msra.mxu0 %v3703
        %4343 = vmatprep.mubr.bf16.mxu0 %v2492
        %4344 = vmatmul.mubr.bf16.gmra.mxu0 %v2491
        %v4345 = vpop.f32.mrf.mxu0
        %v4346 = vadd.f32 %v4303, %v4345
        %v4347 = vpop.f32.mrf.mxu0
        %v4348 = vadd.f32 %v4305, %v4347
        %v4349 = vpop.f32.mrf.mxu0
        %v4350 = vadd.f32 %v4307, %v4349
        %v4351 = vpop.f32.mrf.mxu0
        %v4352 = vadd.f32 %v4309, %v4351
        %4353 = vdwg.mxu0
        %4354 = vmatprep.subr.bf16.mxu0 %v3764
        %4355 = vmatpush1.bf16.msra.mxu0 %v3763
        %4356 = vmatprep.subr.bf16.mxu0 %v3760
        %4357 = vmatpush1.bf16.msra.mxu0 %v3759
        %4358 = vmatprep.subr.bf16.mxu0 %v3756
        %4359 = vmatpush1.bf16.msra.mxu0 %v3755
        %4360 = vmatprep.subr.bf16.mxu0 %v3752
        %4361 = vmatpush1.bf16.msra.mxu0 %v3751
        %4362 = vmatprep.subr.bf16.mxu0 %v3748
        %4363 = vmatpush1.bf16.msra.mxu0 %v3747
        %4364 = vmatprep.subr.bf16.mxu0 %v3744
        %4365 = vmatpush1.bf16.msra.mxu0 %v3743
        %4366 = vmatprep.subr.bf16.mxu0 %v3740
        %4367 = vmatpush1.bf16.msra.mxu0 %v3739
        %4368 = vmatprep.subr.bf16.mxu0 %v3736
        %4369 = vmatpush1.bf16.msra.mxu0 %v3735
        %4370 = vmatprep.subr.bf16.mxu0 %v3796
        %4371 = vmatpush2.bf16.msra.mxu0 %v3795
        %4372 = vmatprep.subr.bf16.mxu0 %v3792
        %4373 = vmatpush2.bf16.msra.mxu0 %v3791
        %4374 = vmatprep.subr.bf16.mxu0 %v3788
        %4375 = vmatpush2.bf16.msra.mxu0 %v3787
        %4376 = vmatprep.subr.bf16.mxu0 %v3784
        %4377 = vmatpush2.bf16.msra.mxu0 %v3783
        %4378 = vmatprep.subr.bf16.mxu0 %v3780
        %4379 = vmatpush2.bf16.msra.mxu0 %v3779
        %4380 = vmatprep.subr.bf16.mxu0 %v3776
        %4381 = vmatpush2.bf16.msra.mxu0 %v3775
        %4382 = vmatprep.subr.bf16.mxu0 %v3772
        %4383 = vmatpush2.bf16.msra.mxu0 %v3771
        %4384 = vmatprep.subr.bf16.mxu0 %v3768
        %4385 = vmatpush2.bf16.msra.mxu0 %v3767
        %4386 = vmatprep.mubr.bf16.mxu0 %v2494
        %4387 = vmatmul.mubr.bf16.gmra.mxu0 %v2493
        %v4388 = vpop.f32.mrf.mxu0
        %v4389 = vadd.f32 %v4346, %v4388
        %v4390 = vpop.f32.mrf.mxu0
        %v4391 = vadd.f32 %v4348, %v4390
        %v4392 = vpop.f32.mrf.mxu0
        %v4393 = vadd.f32 %v4350, %v4392
        %v4394 = vpop.f32.mrf.mxu0
        %v4395 = vadd.f32 %v4352, %v4394
        %4396 = vdwg.mxu0
        %v4397 = vmax.f32 %v4217, 0.0
        %v4398 = vmax.f32 %v4219, 0.0
        %v4399 = vmax.f32 %v4389, 0.0
        %v4400 = vmax.f32 %v4391, 0.0
        %v4401 = vmax.f32 %v4221, 0.0
        %v4402 = vmax.f32 %v4223, 0.0
        %v4403 = vmax.f32 %v4393, 0.0
        %v4404 = vmax.f32 %v4395, 0.0
        %v4409 = vrot.slane %v4397, 1
        %v4410 = vrot.slane %v4398, 1
        %v4411 = vrot.slane %v4399, 1
        %v4412 = vrot.slane %v4400, 1
        %v4417 = vmax.f32 %v4397, %v4409
        %v4418 = vmax.f32 %v4398, %v4410
        %v4419 = vmax.f32 %v4399, %v4411
        %v4420 = vmax.f32 %v4400, %v4412
        %v4425 = vrot.slane %v4401, 1
        %v4426 = vrot.slane %v4402, 1
        %v4427 = vrot.slane %v4403, 1
        %v4428 = vrot.slane %v4404, 1
        %v4433 = vmax.f32 %v4401, %v4425
        %v4434 = vmax.f32 %v4402, %v4426
        %v4435 = vmax.f32 %v4403, %v4427
        %v4436 = vmax.f32 %v4404, %v4428
        %v4441 = vrot.slane %v4417, 1
        %v4442 = vrot.slane %v4418, 1
        %v4443 = vrot.slane %v4419, 1
        %v4444 = vrot.slane %v4420, 1
        %v4449 = vrot.slane %v4417, 2
        %v4450 = vrot.slane %v4418, 2
        %v4451 = vrot.slane %v4419, 2
        %v4452 = vrot.slane %v4420, 2
        %v4457 = vrot.slane %v4417, 3
        %v4458 = vrot.slane %v4418, 3
        %v4459 = vrot.slane %v4419, 3
        %v4460 = vrot.slane %v4420, 3
        %v4469 = vrot.slane %v4433, 4
        %v4470 = vrot.slane %v4434, 4
        %v4471 = vrot.slane %v4435, 4
        %v4472 = vrot.slane %v4436, 4
        %v4477 = vrot.slane %v4433, 5
        %v4478 = vrot.slane %v4434, 5
        %v4479 = vrot.slane %v4435, 5
        %v4480 = vrot.slane %v4436, 5
        %v4485 = vrot.slane %v4433, 6
        %v4486 = vrot.slane %v4434, 6
        %v4487 = vrot.slane %v4435, 6
        %v4488 = vrot.slane %v4436, 6
        %v4493 = vrot.slane %v4433, 7
        %v4494 = vrot.slane %v4434, 7
        %v4495 = vrot.slane %v4435, 7
        %v4496 = vrot.slane %v4436, 7
        %v4501 = vsel %vm2369, %v4417, %v4441
        %v4502 = vsel %vm2369, %v4418, %v4442
        %v4503 = vsel %vm2369, %v4419, %v4443
        %v4504 = vsel %vm2369, %v4420, %v4444
        %v4505 = vsel %vm2378, %v4501, %v4449
        %v4506 = vsel %vm2378, %v4502, %v4450
        %v4507 = vsel %vm2378, %v4503, %v4451
        %v4508 = vsel %vm2378, %v4504, %v4452
        %v4509 = vsel %vm2387, %v4505, %v4457
        %v4510 = vsel %vm2387, %v4506, %v4458
        %v4511 = vsel %vm2387, %v4507, %v4459
        %v4512 = vsel %vm2387, %v4508, %v4460
        %v4513 = vsel %vm456, %v4509, %v4469
        %v4514 = vsel %vm456, %v4510, %v4470
        %v4515 = vsel %vm456, %v4511, %v4471
        %v4516 = vsel %vm456, %v4512, %v4472
        %v4517 = vsel %vm2404, %v4513, %v4477
        %v4518 = vsel %vm2404, %v4514, %v4478
        %v4519 = vsel %vm2404, %v4515, %v4479
        %v4520 = vsel %vm2404, %v4516, %v4480
        %v4521 = vsel %vm2413, %v4517, %v4485
        %v4522 = vsel %vm2413, %v4518, %v4486
        %v4523 = vsel %vm2413, %v4519, %v4487
        %v4524 = vsel %vm2413, %v4520, %v4488
        %v4525 = vsel %vm2422, %v4521, %v4493
        %v4526 = vsel %vm2422, %v4522, %v4494
        %v4527 = vsel %vm2422, %v4523, %v4495
        %v4528 = vsel %vm2422, %v4524, %v4496
        %v4529 = vpack.c.bf16 %v4525, %v4525
        %v4530 = vpack.c.bf16 %v4526, %v4526
        %v4531 = vpack.c.bf16 %v4527, %v4527
        %v4532 = vpack.c.bf16 %v4528, %v4528
        %v4533 = vld [vmem:[#allocation6] sm:$0xff]
        %v4534 = vld [vmem:[#allocation6 + $0x8] sm:$0xff]
        %v4535 = vld [vmem:[#allocation6 + $0x10] sm:$0xff]
        %v4536 = vld [vmem:[#allocation6 + $0x18] sm:$0xff]
        %v4537 = vld [vmem:[#allocation6 + $0x20] sm:$0xff]
        %v4538 = vld [vmem:[#allocation6 + $0x28] sm:$0xff]
        %v4539 = vld [vmem:[#allocation6 + $0x30] sm:$0xff]
        %v4540 = vld [vmem:[#allocation6 + $0x38] sm:$0xff]
        %v4541 = vld [vmem:[#allocation6 + $0x40] sm:$0xff]
        %v4542 = vld [vmem:[#allocation6 + $0x48] sm:$0xff]
        %v4543 = vld [vmem:[#allocation6 + $0x50] sm:$0xff]
        %v4544 = vld [vmem:[#allocation6 + $0x58] sm:$0xff]
        %v4545 = vld [vmem:[#allocation6 + $0x60] sm:$0xff]
        %v4546 = vld [vmem:[#allocation6 + $0x68] sm:$0xff]
        %v4547 = vld [vmem:[#allocation6 + $0x70] sm:$0xff]
        %v4548 = vld [vmem:[#allocation6 + $0x78] sm:$0xff]
        %v4549 = vld [vmem:[#allocation6 + $0x80] sm:$0xff]
        %v4550 = vld [vmem:[#allocation6 + $0x88] sm:$0xff]
        %v4551 = vld [vmem:[#allocation6 + $0x90] sm:$0xff]
        %v4552 = vld [vmem:[#allocation6 + $0x98] sm:$0xff]
        %v4553 = vld [vmem:[#allocation6 + $0xa0] sm:$0xff]
        %v4554 = vld [vmem:[#allocation6 + $0xa8] sm:$0xff]
        %v4555 = vld [vmem:[#allocation6 + $0xb0] sm:$0xff]
        %v4556 = vld [vmem:[#allocation6 + $0xb8] sm:$0xff]
        %v4557 = vld [vmem:[#allocation6 + $0xc0] sm:$0xff]
        %v4558 = vld [vmem:[#allocation6 + $0xc8] sm:$0xff]
        %v4559 = vld [vmem:[#allocation6 + $0xd0] sm:$0xff]
        %v4560 = vld [vmem:[#allocation6 + $0xd8] sm:$0xff]
        %v4561 = vld [vmem:[#allocation6 + $0xe0] sm:$0xff]
        %v4562 = vld [vmem:[#allocation6 + $0xe8] sm:$0xff]
        %v4563 = vld [vmem:[#allocation6 + $0xf0] sm:$0xff]
        %v4564 = vld [vmem:[#allocation6 + $0xf8] sm:$0xff]
        %v4565 = vld [vmem:[#allocation6 + $0x100] sm:$0xff]
        %v4566 = vld [vmem:[#allocation6 + $0x108] sm:$0xff]
        %v4567 = vld [vmem:[#allocation6 + $0x110] sm:$0xff]
        %v4568 = vld [vmem:[#allocation6 + $0x118] sm:$0xff]
        %v4569 = vld [vmem:[#allocation6 + $0x120] sm:$0xff]
        %v4570 = vld [vmem:[#allocation6 + $0x128] sm:$0xff]
        %v4571 = vld [vmem:[#allocation6 + $0x130] sm:$0xff]
        %v4572 = vld [vmem:[#allocation6 + $0x138] sm:$0xff]
        %v4573 = vld [vmem:[#allocation6 + $0x140] sm:$0xff]
        %v4574 = vld [vmem:[#allocation6 + $0x148] sm:$0xff]
        %v4575 = vld [vmem:[#allocation6 + $0x150] sm:$0xff]
        %v4576 = vld [vmem:[#allocation6 + $0x158] sm:$0xff]
        %v4577 = vld [vmem:[#allocation6 + $0x160] sm:$0xff]
        %v4578 = vld [vmem:[#allocation6 + $0x168] sm:$0xff]
        %v4579 = vld [vmem:[#allocation6 + $0x170] sm:$0xff]
        %v4580 = vld [vmem:[#allocation6 + $0x178] sm:$0xff]
        %v4581 = vld [vmem:[#allocation6 + $0x180] sm:$0xff]
        %v4582 = vld [vmem:[#allocation6 + $0x188] sm:$0xff]
        %v4583 = vld [vmem:[#allocation6 + $0x190] sm:$0xff]
        %v4584 = vld [vmem:[#allocation6 + $0x198] sm:$0xff]
        %v4585 = vld [vmem:[#allocation6 + $0x1a0] sm:$0xff]
        %v4586 = vld [vmem:[#allocation6 + $0x1a8] sm:$0xff]
        %v4587 = vld [vmem:[#allocation6 + $0x1b0] sm:$0xff]
        %v4588 = vld [vmem:[#allocation6 + $0x1b8] sm:$0xff]
        %v4589 = vld [vmem:[#allocation6 + $0x1c0] sm:$0xff]
        %v4590 = vld [vmem:[#allocation6 + $0x1c8] sm:$0xff]
        %v4591 = vld [vmem:[#allocation6 + $0x1d0] sm:$0xff]
        %v4592 = vld [vmem:[#allocation6 + $0x1d8] sm:$0xff]
        %v4593 = vld [vmem:[#allocation6 + $0x1e0] sm:$0xff]
        %v4594 = vld [vmem:[#allocation6 + $0x1e8] sm:$0xff]
        %v4595 = vld [vmem:[#allocation6 + $0x1f0] sm:$0xff]
        %v4596 = vld [vmem:[#allocation6 + $0x1f8] sm:$0xff]
        %v4597 = vld [vmem:[%s6] sm:$0x3]
        %v4599 = vlaneseq
        %v4600 = vshrl.u32 %v4599, 7
        %v4601 = vsub.s32 0, %v4600
        %v4602 = vrot.slane %v4597, %v4601
        %v4603 = vlaneseq
        %v4604 = vshrl.u32 %v4603, 7
        %v4605 = vsub.s32 1, %v4604
        %v4606 = vrot.slane %v4597, %v4605
        %v4673 = vunpack.c.l.b16 %v4533
        %v4674 = vunpack.c.h.b16 %v4533
        %v4675 = vunpack.c.l.b16 %v4534
        %v4676 = vunpack.c.h.b16 %v4534
        %v4677 = vunpack.c.l.b16 %v4535
        %v4678 = vunpack.c.h.b16 %v4535
        %v4679 = vunpack.c.l.b16 %v4536
        %v4680 = vunpack.c.h.b16 %v4536
        %v4681 = vunpack.c.l.b16 %v4537
        %v4682 = vunpack.c.h.b16 %v4537
        %v4683 = vunpack.c.l.b16 %v4538
        %v4684 = vunpack.c.h.b16 %v4538
        %v4685 = vunpack.c.l.b16 %v4539
        %v4686 = vunpack.c.h.b16 %v4539
        %v4687 = vunpack.c.l.b16 %v4540
        %v4688 = vunpack.c.h.b16 %v4540
        %v4689 = vunpack.c.l.b16 %v4541
        %v4690 = vunpack.c.h.b16 %v4541
        %v4691 = vunpack.c.l.b16 %v4542
        %v4692 = vunpack.c.h.b16 %v4542
        %v4693 = vunpack.c.l.b16 %v4543
        %v4694 = vunpack.c.h.b16 %v4543
        %v4695 = vunpack.c.l.b16 %v4544
        %v4696 = vunpack.c.h.b16 %v4544
        %v4697 = vunpack.c.l.b16 %v4545
        %v4698 = vunpack.c.h.b16 %v4545
        %v4699 = vunpack.c.l.b16 %v4546
        %v4700 = vunpack.c.h.b16 %v4546
        %v4701 = vunpack.c.l.b16 %v4547
        %v4702 = vunpack.c.h.b16 %v4547
        %v4703 = vunpack.c.l.b16 %v4548
        %v4704 = vunpack.c.h.b16 %v4548
        %v4705 = vunpack.c.l.b16 %v4549
        %v4706 = vunpack.c.h.b16 %v4549
        %v4707 = vunpack.c.l.b16 %v4550
        %v4708 = vunpack.c.h.b16 %v4550
        %v4709 = vunpack.c.l.b16 %v4551
        %v4710 = vunpack.c.h.b16 %v4551
        %v4711 = vunpack.c.l.b16 %v4552
        %v4712 = vunpack.c.h.b16 %v4552
        %v4713 = vunpack.c.l.b16 %v4553
        %v4714 = vunpack.c.h.b16 %v4553
        %v4715 = vunpack.c.l.b16 %v4554
        %v4716 = vunpack.c.h.b16 %v4554
        %v4717 = vunpack.c.l.b16 %v4555
        %v4718 = vunpack.c.h.b16 %v4555
        %v4719 = vunpack.c.l.b16 %v4556
        %v4720 = vunpack.c.h.b16 %v4556
        %v4721 = vunpack.c.l.b16 %v4557
        %v4722 = vunpack.c.h.b16 %v4557
        %v4723 = vunpack.c.l.b16 %v4558
        %v4724 = vunpack.c.h.b16 %v4558
        %v4725 = vunpack.c.l.b16 %v4559
        %v4726 = vunpack.c.h.b16 %v4559
        %v4727 = vunpack.c.l.b16 %v4560
        %v4728 = vunpack.c.h.b16 %v4560
        %v4729 = vunpack.c.l.b16 %v4561
        %v4730 = vunpack.c.h.b16 %v4561
        %v4731 = vunpack.c.l.b16 %v4562
        %v4732 = vunpack.c.h.b16 %v4562
        %v4733 = vunpack.c.l.b16 %v4563
        %v4734 = vunpack.c.h.b16 %v4563
        %v4735 = vunpack.c.l.b16 %v4564
        %v4736 = vunpack.c.h.b16 %v4564
        %v4737 = vunpack.c.l.b16 %v4565
        %v4738 = vunpack.c.h.b16 %v4565
        %v4739 = vunpack.c.l.b16 %v4566
        %v4740 = vunpack.c.h.b16 %v4566
        %v4741 = vunpack.c.l.b16 %v4567
        %v4742 = vunpack.c.h.b16 %v4567
        %v4743 = vunpack.c.l.b16 %v4568
        %v4744 = vunpack.c.h.b16 %v4568
        %v4745 = vunpack.c.l.b16 %v4569
        %v4746 = vunpack.c.h.b16 %v4569
        %v4747 = vunpack.c.l.b16 %v4570
        %v4748 = vunpack.c.h.b16 %v4570
        %v4749 = vunpack.c.l.b16 %v4571
        %v4750 = vunpack.c.h.b16 %v4571
        %v4751 = vunpack.c.l.b16 %v4572
        %v4752 = vunpack.c.h.b16 %v4572
        %v4753 = vunpack.c.l.b16 %v4573
        %v4754 = vunpack.c.h.b16 %v4573
        %v4755 = vunpack.c.l.b16 %v4574
        %v4756 = vunpack.c.h.b16 %v4574
        %v4757 = vunpack.c.l.b16 %v4575
        %v4758 = vunpack.c.h.b16 %v4575
        %v4759 = vunpack.c.l.b16 %v4576
        %v4760 = vunpack.c.h.b16 %v4576
        %v4761 = vunpack.c.l.b16 %v4577
        %v4762 = vunpack.c.h.b16 %v4577
        %v4763 = vunpack.c.l.b16 %v4578
        %v4764 = vunpack.c.h.b16 %v4578
        %v4765 = vunpack.c.l.b16 %v4579
        %v4766 = vunpack.c.h.b16 %v4579
        %v4767 = vunpack.c.l.b16 %v4580
        %v4768 = vunpack.c.h.b16 %v4580
        %v4769 = vunpack.c.l.b16 %v4581
        %v4770 = vunpack.c.h.b16 %v4581
        %v4771 = vunpack.c.l.b16 %v4582
        %v4772 = vunpack.c.h.b16 %v4582
        %v4773 = vunpack.c.l.b16 %v4583
        %v4774 = vunpack.c.h.b16 %v4583
        %v4775 = vunpack.c.l.b16 %v4584
        %v4776 = vunpack.c.h.b16 %v4584
        %v4777 = vunpack.c.l.b16 %v4585
        %v4778 = vunpack.c.h.b16 %v4585
        %v4779 = vunpack.c.l.b16 %v4586
        %v4780 = vunpack.c.h.b16 %v4586
        %v4781 = vunpack.c.l.b16 %v4587
        %v4782 = vunpack.c.h.b16 %v4587
        %v4783 = vunpack.c.l.b16 %v4588
        %v4784 = vunpack.c.h.b16 %v4588
        %v4785 = vunpack.c.l.b16 %v4589
        %v4786 = vunpack.c.h.b16 %v4589
        %v4787 = vunpack.c.l.b16 %v4590
        %v4788 = vunpack.c.h.b16 %v4590
        %v4789 = vunpack.c.l.b16 %v4591
        %v4790 = vunpack.c.h.b16 %v4591
        %v4791 = vunpack.c.l.b16 %v4592
        %v4792 = vunpack.c.h.b16 %v4592
        %v4793 = vunpack.c.l.b16 %v4593
        %v4794 = vunpack.c.h.b16 %v4593
        %v4795 = vunpack.c.l.b16 %v4594
        %v4796 = vunpack.c.h.b16 %v4594
        %v4797 = vunpack.c.l.b16 %v4595
        %v4798 = vunpack.c.h.b16 %v4595
        %v4799 = vunpack.c.l.b16 %v4596
        %v4800 = vunpack.c.h.b16 %v4596
        %v4801 = vpack.c.b16 %v4675, %v4673
        %v4802 = vpack.c.b16 %v4676, %v4674
        %v4803 = vpack.c.b16 %v4679, %v4677
        %v4804 = vpack.c.b16 %v4680, %v4678
        %v4805 = vpack.c.b16 %v4683, %v4681
        %v4806 = vpack.c.b16 %v4684, %v4682
        %v4807 = vpack.c.b16 %v4687, %v4685
        %v4808 = vpack.c.b16 %v4688, %v4686
        %v4809 = vpack.c.b16 %v4691, %v4689
        %v4810 = vpack.c.b16 %v4692, %v4690
        %v4811 = vpack.c.b16 %v4695, %v4693
        %v4812 = vpack.c.b16 %v4696, %v4694
        %v4813 = vpack.c.b16 %v4699, %v4697
        %v4814 = vpack.c.b16 %v4700, %v4698
        %v4815 = vpack.c.b16 %v4703, %v4701
        %v4816 = vpack.c.b16 %v4704, %v4702
        %v4817 = vpack.c.b16 %v4707, %v4705
        %v4818 = vpack.c.b16 %v4708, %v4706
        %v4819 = vpack.c.b16 %v4711, %v4709
        %v4820 = vpack.c.b16 %v4712, %v4710
        %v4821 = vpack.c.b16 %v4715, %v4713
        %v4822 = vpack.c.b16 %v4716, %v4714
        %v4823 = vpack.c.b16 %v4719, %v4717
        %v4824 = vpack.c.b16 %v4720, %v4718
        %v4825 = vpack.c.b16 %v4723, %v4721
        %v4826 = vpack.c.b16 %v4724, %v4722
        %v4827 = vpack.c.b16 %v4727, %v4725
        %v4828 = vpack.c.b16 %v4728, %v4726
        %v4829 = vpack.c.b16 %v4731, %v4729
        %v4830 = vpack.c.b16 %v4732, %v4730
        %v4831 = vpack.c.b16 %v4735, %v4733
        %v4832 = vpack.c.b16 %v4736, %v4734
        %v4833 = vpack.c.b16 %v4739, %v4737
        %v4834 = vpack.c.b16 %v4740, %v4738
        %v4835 = vpack.c.b16 %v4743, %v4741
        %v4836 = vpack.c.b16 %v4744, %v4742
        %v4837 = vpack.c.b16 %v4747, %v4745
        %v4838 = vpack.c.b16 %v4748, %v4746
        %v4839 = vpack.c.b16 %v4751, %v4749
        %v4840 = vpack.c.b16 %v4752, %v4750
        %v4841 = vpack.c.b16 %v4755, %v4753
        %v4842 = vpack.c.b16 %v4756, %v4754
        %v4843 = vpack.c.b16 %v4759, %v4757
        %v4844 = vpack.c.b16 %v4760, %v4758
        %v4845 = vpack.c.b16 %v4763, %v4761
        %v4846 = vpack.c.b16 %v4764, %v4762
        %v4847 = vpack.c.b16 %v4767, %v4765
        %v4848 = vpack.c.b16 %v4768, %v4766
        %v4849 = vpack.c.b16 %v4771, %v4769
        %v4850 = vpack.c.b16 %v4772, %v4770
        %v4851 = vpack.c.b16 %v4775, %v4773
        %v4852 = vpack.c.b16 %v4776, %v4774
        %v4853 = vpack.c.b16 %v4779, %v4777
        %v4854 = vpack.c.b16 %v4780, %v4778
        %v4855 = vpack.c.b16 %v4783, %v4781
        %v4856 = vpack.c.b16 %v4784, %v4782
        %v4857 = vpack.c.b16 %v4787, %v4785
        %v4858 = vpack.c.b16 %v4788, %v4786
        %v4859 = vpack.c.b16 %v4791, %v4789
        %v4860 = vpack.c.b16 %v4792, %v4790
        %v4861 = vpack.c.b16 %v4795, %v4793
        %v4862 = vpack.c.b16 %v4796, %v4794
        %v4863 = vpack.c.b16 %v4799, %v4797
        %v4864 = vpack.c.b16 %v4800, %v4798
        %4929 = vmatprep.subr.bf16.mxu0 %v4816
        %4930 = vmatpush1.bf16.msra.mxu0 %v4815
        %4931 = vmatprep.subr.bf16.mxu0 %v4814
        %4932 = vmatpush1.bf16.msra.mxu0 %v4813
        %4933 = vmatprep.subr.bf16.mxu0 %v4812
        %4934 = vmatpush1.bf16.msra.mxu0 %v4811
        %4935 = vmatprep.subr.bf16.mxu0 %v4810
        %4936 = vmatpush1.bf16.msra.mxu0 %v4809
        %4937 = vmatprep.subr.bf16.mxu0 %v4808
        %4938 = vmatpush1.bf16.msra.mxu0 %v4807
        %4939 = vmatprep.subr.bf16.mxu0 %v4806
        %4940 = vmatpush1.bf16.msra.mxu0 %v4805
        %4941 = vmatprep.subr.bf16.mxu0 %v4804
        %4942 = vmatpush1.bf16.msra.mxu0 %v4803
        %4943 = vmatprep.subr.bf16.mxu0 %v4802
        %4944 = vmatpush1.bf16.msra.mxu0 %v4801
        %4945 = vmatprep.subr.bf16.mxu0 %v4832
        %4946 = vmatpush2.bf16.msra.mxu0 %v4831
        %4947 = vmatprep.subr.bf16.mxu0 %v4830
        %4948 = vmatpush2.bf16.msra.mxu0 %v4829
        %4949 = vmatprep.subr.bf16.mxu0 %v4828
        %4950 = vmatpush2.bf16.msra.mxu0 %v4827
        %4951 = vmatprep.subr.bf16.mxu0 %v4826
        %4952 = vmatpush2.bf16.msra.mxu0 %v4825
        %4953 = vmatprep.subr.bf16.mxu0 %v4824
        %4954 = vmatpush2.bf16.msra.mxu0 %v4823
        %4955 = vmatprep.subr.bf16.mxu0 %v4822
        %4956 = vmatpush2.bf16.msra.mxu0 %v4821
        %4957 = vmatprep.subr.bf16.mxu0 %v4820
        %4958 = vmatpush2.bf16.msra.mxu0 %v4819
        %4959 = vmatprep.subr.bf16.mxu0 %v4818
        %4960 = vmatpush2.bf16.msra.mxu0 %v4817
        %4961 = vmatprep.mubr.bf16.mxu0 %v4530
        %4962 = vmatmul.mubr.bf16.gmra.mxu0 %v4529
        %v4963 = vpop.f32.mrf.mxu0
        %v4964 = vadd.f32 %v4602, %v4963
        %v4965 = vpop.f32.mrf.mxu0
        %v4966 = vadd.f32 %v4606, %v4965
        %v4967 = vpop.f32.mrf.mxu0
        %v4968 = vpop.f32.mrf.mxu0
        %4969 = vdwg.mxu0
        %4970 = vmatprep.subr.bf16.mxu0 %v4848
        %4971 = vmatpush1.bf16.msra.mxu0 %v4847
        %4972 = vmatprep.subr.bf16.mxu0 %v4846
        %4973 = vmatpush1.bf16.msra.mxu0 %v4845
        %4974 = vmatprep.subr.bf16.mxu0 %v4844
        %4975 = vmatpush1.bf16.msra.mxu0 %v4843
        %4976 = vmatprep.subr.bf16.mxu0 %v4842
        %4977 = vmatpush1.bf16.msra.mxu0 %v4841
        %4978 = vmatprep.subr.bf16.mxu0 %v4840
        %4979 = vmatpush1.bf16.msra.mxu0 %v4839
        %4980 = vmatprep.subr.bf16.mxu0 %v4838
        %4981 = vmatpush1.bf16.msra.mxu0 %v4837
        %4982 = vmatprep.subr.bf16.mxu0 %v4836
        %4983 = vmatpush1.bf16.msra.mxu0 %v4835
        %4984 = vmatprep.subr.bf16.mxu0 %v4834
        %4985 = vmatpush1.bf16.msra.mxu0 %v4833
        %4986 = vmatprep.subr.bf16.mxu0 %v4864
        %4987 = vmatpush2.bf16.msra.mxu0 %v4863
        %4988 = vmatprep.subr.bf16.mxu0 %v4862
        %4989 = vmatpush2.bf16.msra.mxu0 %v4861
        %4990 = vmatprep.subr.bf16.mxu0 %v4860
        %4991 = vmatpush2.bf16.msra.mxu0 %v4859
        %4992 = vmatprep.subr.bf16.mxu0 %v4858
        %4993 = vmatpush2.bf16.msra.mxu0 %v4857
        %4994 = vmatprep.subr.bf16.mxu0 %v4856
        %4995 = vmatpush2.bf16.msra.mxu0 %v4855
        %4996 = vmatprep.subr.bf16.mxu0 %v4854
        %4997 = vmatpush2.bf16.msra.mxu0 %v4853
        %4998 = vmatprep.subr.bf16.mxu0 %v4852
        %4999 = vmatpush2.bf16.msra.mxu0 %v4851
        %5000 = vmatprep.subr.bf16.mxu0 %v4850
        %5001 = vmatpush2.bf16.msra.mxu0 %v4849
        %5002 = vmatprep.mubr.bf16.mxu0 %v4532
        %5003 = vmatmul.mubr.bf16.gmra.mxu0 %v4531
        %v5004 = vpop.f32.mrf.mxu0
        %v5005 = vadd.f32 %v4964, %v5004
        %v5006 = vpop.f32.mrf.mxu0
        %v5007 = vadd.f32 %v4966, %v5006
        %v5008 = vpop.f32.mrf.mxu0
        %v5009 = vpop.f32.mrf.mxu0
        %5010 = vdwg.mxu0
        %v5011 = vmax.f32 %v5005, 0.0
        %v5012 = vmax.f32 %v5007, 0.0
        %v5015 = vrot.slane %v5011, 1
        %v5016 = vrot.slane %v5012, 1
        %v5019 = vmax.f32 %v5011, %v5015
        %v5020 = vmax.f32 %v5012, %v5016
        %v5023 = vrot.slane %v5019, 1
        %v5024 = vrot.slane %v5020, 1
        %v5027 = vrot.slane %v5019, 2
        %v5028 = vrot.slane %v5020, 2
        %v5031 = vrot.slane %v5019, 3
        %v5032 = vrot.slane %v5020, 3
        %v5035 = vsel %vm2369, %v5019, %v5023
        %v5036 = vsel %vm2369, %v5020, %v5024
        %v5037 = vsel %vm2378, %v5035, %v5027
        %v5038 = vsel %vm2378, %v5036, %v5028
        %v5039 = vsel %vm2387, %v5037, %v5031
        %v5040 = vsel %vm2387, %v5038, %v5032
        %v5041 = vpack.c.bf16 %v5039, %v5039
        %v5042 = vpack.c.bf16 %v5040, %v5040
        %v5043 = vld [vmem:[#allocation7] sm:$0xf]
        %v5044 = vld [vmem:[#allocation7 + $0x4] sm:$0xf]
        %v5045 = vld [vmem:[#allocation7 + $0x8] sm:$0xf]
        %v5046 = vld [vmem:[#allocation7 + $0xc] sm:$0xf]
        %v5047 = vld [vmem:[#allocation7 + $0x10] sm:$0xf]
        %v5048 = vld [vmem:[#allocation7 + $0x14] sm:$0xf]
        %v5049 = vld [vmem:[#allocation7 + $0x18] sm:$0xf]
        %v5050 = vld [vmem:[#allocation7 + $0x1c] sm:$0xf]
        %v5051 = vld [vmem:[#allocation7 + $0x20] sm:$0xf]
        %v5052 = vld [vmem:[#allocation7 + $0x24] sm:$0xf]
        %v5053 = vld [vmem:[#allocation7 + $0x28] sm:$0xf]
        %v5054 = vld [vmem:[#allocation7 + $0x2c] sm:$0xf]
        %v5055 = vld [vmem:[#allocation7 + $0x30] sm:$0xf]
        %v5056 = vld [vmem:[#allocation7 + $0x34] sm:$0xf]
        %v5057 = vld [vmem:[#allocation7 + $0x38] sm:$0xf]
        %v5058 = vld [vmem:[#allocation7 + $0x3c] sm:$0xf]
        %v5059 = vld [vmem:[#allocation7 + $0x40] sm:$0xf]
        %v5060 = vld [vmem:[#allocation7 + $0x44] sm:$0xf]
        %v5061 = vld [vmem:[#allocation7 + $0x48] sm:$0xf]
        %v5062 = vld [vmem:[#allocation7 + $0x4c] sm:$0xf]
        %v5063 = vld [vmem:[#allocation7 + $0x50] sm:$0xf]
        %v5064 = vld [vmem:[#allocation7 + $0x54] sm:$0xf]
        %v5065 = vld [vmem:[#allocation7 + $0x58] sm:$0xf]
        %v5066 = vld [vmem:[#allocation7 + $0x5c] sm:$0xf]
        %v5067 = vld [vmem:[#allocation7 + $0x60] sm:$0xf]
        %v5068 = vld [vmem:[#allocation7 + $0x64] sm:$0xf]
        %v5069 = vld [vmem:[#allocation7 + $0x68] sm:$0xf]
        %v5070 = vld [vmem:[#allocation7 + $0x6c] sm:$0xf]
        %v5071 = vld [vmem:[#allocation7 + $0x70] sm:$0xf]
        %v5072 = vld [vmem:[#allocation7 + $0x74] sm:$0xf]
        %v5073 = vld [vmem:[#allocation7 + $0x78] sm:$0xf]
        %v5074 = vld [vmem:[#allocation7 + $0x7c] sm:$0xf]
        %v5075 = vld [vmem:[%s8] sm:$0x1]
        %v5077 = vlaneseq
        %v5078 = vshrl.u32 %v5077, 7
        %v5079 = vsub.s32 0, %v5078
        %v5080 = vrot.slane %v5075, %v5079
        %v5114 = vunpack.c.l.b16 %v5043
        %v5115 = vunpack.c.l.b16 %v5044
        %v5116 = vunpack.c.l.b16 %v5045
        %v5117 = vunpack.c.l.b16 %v5046
        %v5118 = vunpack.c.l.b16 %v5047
        %v5119 = vunpack.c.l.b16 %v5048
        %v5120 = vunpack.c.l.b16 %v5049
        %v5121 = vunpack.c.l.b16 %v5050
        %v5122 = vunpack.c.l.b16 %v5051
        %v5123 = vunpack.c.l.b16 %v5052
        %v5124 = vunpack.c.l.b16 %v5053
        %v5125 = vunpack.c.l.b16 %v5054
        %v5126 = vunpack.c.l.b16 %v5055
        %v5127 = vunpack.c.l.b16 %v5056
        %v5128 = vunpack.c.l.b16 %v5057
        %v5129 = vunpack.c.l.b16 %v5058
        %v5130 = vunpack.c.l.b16 %v5059
        %v5131 = vunpack.c.l.b16 %v5060
        %v5132 = vunpack.c.l.b16 %v5061
        %v5133 = vunpack.c.l.b16 %v5062
        %v5134 = vunpack.c.l.b16 %v5063
        %v5135 = vunpack.c.l.b16 %v5064
        %v5136 = vunpack.c.l.b16 %v5065
        %v5137 = vunpack.c.l.b16 %v5066
        %v5138 = vunpack.c.l.b16 %v5067
        %v5139 = vunpack.c.l.b16 %v5068
        %v5140 = vunpack.c.l.b16 %v5069
        %v5141 = vunpack.c.l.b16 %v5070
        %v5142 = vunpack.c.l.b16 %v5071
        %v5143 = vunpack.c.l.b16 %v5072
        %v5144 = vunpack.c.l.b16 %v5073
        %v5145 = vunpack.c.l.b16 %v5074
        %v5146 = vpack.c.b16 %v5115, %v5114
        %v5147 = vpack.c.b16 %v5117, %v5116
        %v5148 = vpack.c.b16 %v5119, %v5118
        %v5149 = vpack.c.b16 %v5121, %v5120
        %v5150 = vpack.c.b16 %v5123, %v5122
        %v5151 = vpack.c.b16 %v5125, %v5124
        %v5152 = vpack.c.b16 %v5127, %v5126
        %v5153 = vpack.c.b16 %v5129, %v5128
        %v5154 = vpack.c.b16 %v5131, %v5130
        %v5155 = vpack.c.b16 %v5133, %v5132
        %v5156 = vpack.c.b16 %v5135, %v5134
        %v5157 = vpack.c.b16 %v5137, %v5136
        %v5158 = vpack.c.b16 %v5139, %v5138
        %v5159 = vpack.c.b16 %v5141, %v5140
        %v5160 = vpack.c.b16 %v5143, %v5142
        %v5161 = vpack.c.b16 %v5145, %v5144
        %5178 = vmatprep.subr.bf16.mxu0 0
        %5179 = vmatpush1.bf16.msra.mxu0 %v5153
        %5180 = vmatprep.subr.bf16.mxu0 0
        %5181 = vmatpush1.bf16.msra.mxu0 %v5152
        %5182 = vmatprep.subr.bf16.mxu0 0
        %5183 = vmatpush1.bf16.msra.mxu0 %v5151
        %5184 = vmatprep.subr.bf16.mxu0 0
        %5185 = vmatpush1.bf16.msra.mxu0 %v5150
        %5186 = vmatprep.subr.bf16.mxu0 0
        %5187 = vmatpush1.bf16.msra.mxu0 %v5149
        %5188 = vmatprep.subr.bf16.mxu0 0
        %5189 = vmatpush1.bf16.msra.mxu0 %v5148
        %5190 = vmatprep.subr.bf16.mxu0 0
        %5191 = vmatpush1.bf16.msra.mxu0 %v5147
        %5192 = vmatprep.subr.bf16.mxu0 0
        %5193 = vmatpush1.bf16.msra.mxu0 %v5146
        %5194 = vmatprep.subr.bf16.mxu0 0
        %5195 = vmatpush2.bf16.msra.mxu0 %v5161
        %5196 = vmatprep.subr.bf16.mxu0 0
        %5197 = vmatpush2.bf16.msra.mxu0 %v5160
        %5198 = vmatprep.subr.bf16.mxu0 0
        %5199 = vmatpush2.bf16.msra.mxu0 %v5159
        %5200 = vmatprep.subr.bf16.mxu0 0
        %5201 = vmatpush2.bf16.msra.mxu0 %v5158
        %5202 = vmatprep.subr.bf16.mxu0 0
        %5203 = vmatpush2.bf16.msra.mxu0 %v5157
        %5204 = vmatprep.subr.bf16.mxu0 0
        %5205 = vmatpush2.bf16.msra.mxu0 %v5156
        %5206 = vmatprep.subr.bf16.mxu0 0
        %5207 = vmatpush2.bf16.msra.mxu0 %v5155
        %5208 = vmatprep.subr.bf16.mxu0 0
        %5209 = vmatpush2.bf16.msra.mxu0 %v5154
        %5210 = vmatprep.mubr.bf16.mxu0 %v5042
        %5211 = vmatmul.mubr.bf16.gmra.mxu0 %v5041
        %v5212 = vpop.f32.mrf.mxu0
        %v5213 = vadd.f32 %v5080, %v5212
        %v5214 = vpop.f32.mrf.mxu0
        %v5215 = vpop.f32.mrf.mxu0
        %v5216 = vpop.f32.mrf.mxu0
        %5217 = vdwg.mxu0
        %v5218 = vmax.f32 %v5213, 0.0
        %v5220 = vrot.slane %v5218, 1
        %v5222 = vmax.f32 %v5218, %v5220
        %v5224 = vrot.slane %v5222, 1
        %v5226 = vsel %vm2369, %v5222, %v5224
        %5227 = vst [vmem:[%s389] sm:$0x3] %v5226
        %p5228 = scmp.lt.s32.totalorder %s23, 1
        %s5229 = scalar_select %p5228, %s23, 1
        %s5230 = smul.addr %s5229, 2
        %s5231 = scalar_lea.vmem %s9, %s5230
        // Predicated region
        $region73: #{my_encoder_forward.1} parent=55 // pred_check
          %p5232 = pneg %p235
        $region74: #{my_encoder_forward.1} parent=55 // pred_check_branch
          %5234 = sbr.rel (%p5232) target = $region76
        $region75: #{my_encoder_forward.1} parent=55 // pred_region
          _
        $region76: #{my_encoder_forward.1} parent=55 // pred_fallthru
          _
      $region56: #{my_encoder_forward.1} parent=5 // pred_fallthru
        _
      %p5235 = scmp.le.s32.totalorder 2, %s18
      // Predicated region
      $region77: #{my_encoder_forward.1} parent=5 // pred_check
        %p5236 = pneg %p5235
      $region78: #{my_encoder_forward.1} parent=5 // pred_check_branch
        %5238 = sbr.rel (%p5236) target = $region80
      $region79: #{my_encoder_forward.1} parent=5 // pred_region
        %s5239 = ssub.s32 %s18, 2
        // Predicated region
        $region81: #{my_encoder_forward.1} parent=79 // pred_check
          %p5240 = pneg %p241
        $region82: #{my_encoder_forward.1} parent=79 // pred_check_branch
          %5242 = sbr.rel (%p5240) target = $region84
        $region83: #{my_encoder_forward.1} parent=79 // pred_region
          %p5243 = scmp.lt.s32.totalorder %s24, 1
          %s5244 = scalar_select %p5243, %s24, 1
          %s5245 = smul.addr %s5244, 2
          %s5246 = scalar_lea.vmem %s9, %s5245
        $region84: #{my_encoder_forward.1} parent=79 // pred_fallthru
          _
      $region80: #{my_encoder_forward.1} parent=5 // pred_fallthru
        _
    $region6: #{my_encoder_forward.1} parent=1 // loop_footer
      %s22 = sadd.s32 1, %s18
    $region7: #{my_encoder_forward.1} parent=1 // loop_footer_branch
      %17 = sbr.rel target = $region3
    $region8: #{my_encoder_forward.1} parent=1 // loop_exit
      _
    %5247 = vsyncpa [#allocation3], 1
    %s5248 = scalar_lea.sflag [#allocation3], 1
    %5249 = vsyncpa %s5248, 1
    %5250 = vsyncpa [#allocation5], 1
    %5251 = vsyncpa [#allocation8], 1

</llo_original>
